<compile_context>
chip_gen: v5e
topology: v5e:2x2
jax: 0.10.0
libtpu: 0.0.40
codegen_flags: <defaults>
</compile_context>

<pallas_src>
import functools
import jax
import jax.numpy as jnp
from jax.experimental import pallas as pl
from jax.experimental.pallas import tpu as pltpu

NEG_SLOPE = 0.01   # nn.LeakyReLU default
LN_EPS = 1e-5      # nn.LayerNorm default
BF16 = jnp.bfloat16


def _leaky_relu(x):
    return jnp.where(x > 0, x, NEG_SLOPE * x)


def _layer_norm_slab(x, gamma, beta):
    # nn.LayerNorm([L, H]): normalize over the whole [L, H] slab per batch element.
    # Single pass: mean and mean-of-squares together, var = E[x^2] - mu^2.
    inv_n = 1.0 / (x.shape[1] * x.shape[2])
    s = jnp.sum(jnp.sum(x, axis=2, keepdims=True), axis=1, keepdims=True)       # [G,1,1]
    ss = jnp.sum(jnp.sum(x * x, axis=2, keepdims=True), axis=1, keepdims=True)  # [G,1,1]
    mu = s * inv_n
    var = ss * inv_n - mu * mu
    return (x - mu) * jax.lax.rsqrt(var + LN_EPS) * gamma + beta


def _ra_core(p, sq, sk, v, wg_out, wg_p, bg):
    """RelationAttention core with host-folded score vectors.

    score[g,c,l] = <q_c, ws_q> + <k_l, ws_k> (+ consts dropped: softmax-invariant),
    where the q/k projections were folded into u = W @ ws host-side, so sq/sk are
    plain VPU row reductions.  p, v: [G,L,H] f32; sq, sk: [G,L,1] f32; bg scalar.
    """
    score = sq + jnp.transpose(sk, (0, 2, 1))                       # [G, L, L]
    score = score - jnp.max(score, axis=2, keepdims=True)
    e = jnp.exp(score)
    attn = e * pl.reciprocal(jnp.sum(e, axis=2, keepdims=True), approx=True)
    out = jnp.einsum('gcl,glh->gch', attn.astype(BF16), v.astype(BF16),
                     preferred_element_type=jnp.float32) + p        # [G, L, H]
    # gate(cat(out, p)) = <out, wg_out> + <p, wg_p> + bg
    glog = (jnp.sum(out * wg_out, axis=2, keepdims=True)
            + jnp.sum(p * wg_p, axis=2, keepdims=True) + bg)        # [G, L, 1]
    gate = jax.nn.sigmoid(glog)
    return gate * out + (1.0 - gate) * p


def bert_gcn_kernel(G, L, H,
                    x_ref,      # [G, L, H] bf16   BERT hidden states
                    adj_ref,    # [G, L, L] bf16   adjacency
                    w_ref,      # [6H, H]   bf16   rows: w_gcn | w_fuse_a | w_fuse_b | w_line | w_v1 | w_v2
                    ln_ref,     # [4, L, H] bf16   gamma1, beta1, gamma2, beta2
                    b_ref,      # [5, H]    f32    b_gcn, b_fuse, b_line, b_v1, b_v2
                    sv_ref,     # [8, H]    f32    u1_q, u1_k, wg1_out, wg1_p, u2_q, u2_k, wg2_out, wg2_p
                    gb_ref,     # (2,)      f32    SMEM: gate biases bg1, bg2
                    zout_ref):  # [G, L, H] f32
    xb3 = x_ref[...]                                  # [G, L, H] bf16
    xb2 = xb3.reshape(G * L, H)                       # sublane-stacked view for shared-weight matmuls
    adjb = adj_ref[...]                               # [G, L, L] bf16
    x3 = xb3.astype(jnp.float32)

    # --- GraphConvolution(H, H): (text @ W), (adj @ hidden) / (rowsum + 1) + bias, ReLU ---
    hidden2 = jnp.dot(xb2, w_ref[0:H, :], preferred_element_type=jnp.float32)   # [G*L, H]
    hidden3 = hidden2.reshape(G, L, H).astype(BF16)
    inv_denom = pl.reciprocal(
        jnp.sum(adjb.astype(jnp.float32), axis=2, keepdims=True) + 1.0, approx=True)
    g3 = (jnp.einsum('gij,gjh->gih', adjb, hidden3, preferred_element_type=jnp.float32)
          * inv_denom + b_ref[0:1, :])
    g3 = jnp.maximum(g3, 0.0)     # F.relu; the following self.Leakru(g1) is identity on >= 0

    # --- DataFusionModel: LayerNorm([L, H]) slabs, concat, Linear(2H -> H) ---
    x1n = _layer_norm_slab(x3, ln_ref[0].astype(jnp.float32), ln_ref[1].astype(jnp.float32))
    x2n = _layer_norm_slab(g3, ln_ref[2].astype(jnp.float32), ln_ref[3].astype(jnp.float32))
    # cat([x1n, x2n], -1) @ W_fuse == x1n @ W_fuse[:H] + x2n @ W_fuse[H:]
    fout2 = (jnp.dot(x1n.reshape(G * L, H).astype(BF16), w_ref[H:2 * H, :],
                     preferred_element_type=jnp.float32)
             + jnp.dot(x2n.reshape(G * L, H).astype(BF16), w_ref[2 * H:3 * H, :],
                       preferred_element_type=jnp.float32)
             + b_ref[1:2, :])

    # --- self.line -> dropout -> LeakyReLU ---
    # TODO(synk): nn.Dropout(p=0.5) implemented as identity (eval-mode semantics).
    l1 = jnp.dot(fout2.astype(BF16), w_ref[3 * H:4 * H, :],
                 preferred_element_type=jnp.float32) + b_ref[2:3, :]
    l2 = _leaky_relu(l1)                              # [G*L, H] f32
    l2b = l2.astype(BF16)
    l2_3 = l2.reshape(G, L, H)

    # --- GAT_relation(L2, L2): RA1 with p = x = l2 (q/k folded; only v1 on the MXU) ---
    v1 = (jnp.dot(l2b, w_ref[4 * H:5 * H, :], preferred_element_type=jnp.float32)
          + b_ref[3:4, :]).reshape(G, L, H)
    sq1 = jnp.sum(l2_3 * sv_ref[0:1, :], axis=2, keepdims=True)   # [G, L, 1]
    sk1 = jnp.sum(l2_3 * sv_ref[1:2, :], axis=2, keepdims=True)
    x_new = _ra_core(l2_3, sq1, sk1, v1,
                     sv_ref[2:3, :], sv_ref[3:4, :], gb_ref[0]) + l2_3

    # --- RA2: p = l2, x = x_new (k folded; only v2 on the MXU) ---
    v2 = (jnp.dot(x_new.reshape(G * L, H).astype(BF16), w_ref[5 * H:6 * H, :],
                  preferred_element_type=jnp.float32)
          + b_ref[4:5, :]).reshape(G, L, H)
    sq2 = jnp.sum(l2_3 * sv_ref[4:5, :], axis=2, keepdims=True)
    sk2 = jnp.sum(x_new * sv_ref[5:6, :], axis=2, keepdims=True)
    p_new = _ra_core(l2_3, sq2, sk2, v2,
                     sv_ref[6:7, :], sv_ref[7:8, :], gb_ref[1]) + l2_3

    zout_ref[...] = (x_new + p_new).astype(zout_ref.dtype)


def _pack_params(params, L, H):
    """Consolidate module parameters into 5 packed operands (host-side, once)."""
    # All square weights, stacked along sublanes (bf16 for MXU / half DMA bytes).
    w_stack = jnp.concatenate(
        [params["w_gcn"],
         params["w_fuse"][:H, :], params["w_fuse"][H:, :],
         params["w_line"],
         params["ra1_wv"], params["ra2_wv"]], axis=0).astype(BF16)               # [6H, H]
    ln_pack = jnp.stack([params["gamma1"], params["beta1"],
                         params["gamma2"], params["beta2"]], axis=0).astype(BF16)  # [4, L, H]
    bias_pack = jnp.concatenate(
        [params["b_gcn"], params["b_fuse"], params["b_line"],
         params["ra1_bv"], params["ra2_bv"]], axis=0).astype(jnp.float32)          # [5, H]

    def fold(ra):
        # Fold the q/k Linear layers into the score vectors: <W x + b, ws> ->
        # x . (W @ ws) (+ const, dropped: constant over the softmax axis).
        u_q = (params[f"{ra}_wq"] @ params[f"{ra}_ws"][:H, 0]).reshape(1, H)
        u_k = (params[f"{ra}_wk"] @ params[f"{ra}_ws"][H:, 0]).reshape(1, H)
        wg_out = params[f"{ra}_wg"][:H, :].T
        wg_p = params[f"{ra}_wg"][H:, :].T
        return [u_q, u_k, wg_out, wg_p]

    sv_pack = jnp.concatenate(fold("ra1") + fold("ra2"), axis=0).astype(jnp.float32)  # [8, H]
    gate_bias = jnp.array([params["ra1_bg"][0, 0], params["ra2_bg"][0, 0]],
                          dtype=jnp.float32)                                            # (2,) SMEM
    return w_stack, ln_pack, bias_pack, sv_pack, gate_bias


def bert_gcn_pallas(outputs, adj, params, group=4):
    """outputs: [B, L, H] float32 (BERT last hidden states), adj: [B, L, L] float32."""
    B, L, H = outputs.shape
    assert L == H, "LayerNorm([num_features, 768]) slab semantics require L == H"
    G = min(group, B)
    assert B % G == 0, "batch must be divisible by the per-step group size"

    w_stack, ln_pack, bias_pack, sv_pack, gate_bias = _pack_params(params, L, H)
    x_b = outputs.astype(BF16)       # halve activation HBM traffic
    adj_b = adj.astype(BF16)         # adjacency is 0/1 -> exact in bf16

    in_specs = [
        pl.BlockSpec((G, L, H), lambda b: (b, 0, 0)),         # activations, G elems / step
        pl.BlockSpec((G, L, L), lambda b: (b, 0, 0)),         # adjacency
        pl.BlockSpec((6 * H, H), lambda b: (0, 0)),           # packed square weights (bf16)
        pl.BlockSpec((4, L, H), lambda b: (0, 0, 0)),         # layernorm gamma/beta (bf16)
        pl.BlockSpec((5, H), lambda b: (0, 0)),               # bias pack (f32)
        pl.BlockSpec((8, H), lambda b: (0, 0)),               # folded score / gate vectors (f32)
        pl.BlockSpec(memory_space=pltpu.MemorySpace.SMEM),    # gate biases as SMEM scalars
    ]
    out_spec = pl.BlockSpec((G, L, H), lambda b: (b, 0, 0))

    kernel = functools.partial(bert_gcn_kernel, G, L, H)
    return pl.pallas_call(
        kernel,
        out_shape=jax.ShapeDtypeStruct((B, L, H), jnp.float32),
        grid_spec=pltpu.PrefetchScalarGridSpec(
            num_scalar_prefetch=0,
            grid=(B // G,),
            in_specs=in_specs,
            out_specs=out_spec,
        ),
        compiler_params=pltpu.CompilerParams(
            dimension_semantics=("parallel",),
            vmem_limit_bytes=32 * 1024 * 1024,
        ),
    )(x_b, adj_b, w_stack, ln_pack, bias_pack, sv_pack, gate_bias)


def global_pointer(zout, attention_mask, w_gp, b_gp, heads=1, head_size=16):
    # TODO(synk): GlobalPointer class is not defined in the provided source; this follows
    # the canonical bert4keras GlobalPointer (dense -> q/k split -> RoPE -> q.k^T -> masks
    # -> scale) in plain JAX glue.
    B, L, H = zout.shape
    qk = jnp.einsum("blh,hd->bld", zout, w_gp) + b_gp            # [B, L, heads*2*head_size]
    qk = qk.reshape(B, L, heads, 2 * head_size)
    qw, kw = qk[..., :head_size], qk[..., head_size:]
    pos = jnp.arange(L, dtype=jnp.float32)[:, None]
    dim = jnp.arange(head_size // 2, dtype=jnp.float32)[None, :]
    theta = pos / (10000.0 ** (2.0 * dim / head_size))           # [L, hs/2]
    sin = jnp.repeat(jnp.sin(theta), 2, axis=-1)[None, :, None, :]
    cos = jnp.repeat(jnp.cos(theta), 2, axis=-1)[None, :, None, :]

    def rope(t):
        t2 = jnp.stack([-t[..., 1::2], t[..., ::2]], axis=-1).reshape(t.shape)
        return t * cos + t2 * sin

    qw, kw = rope(qw), rope(kw)
    logits = jnp.einsum("bmhd,bnhd->bhmn", qw, kw)
    m = attention_mask.astype(jnp.float32)
    logits = logits - (1.0 - m[:, None, None, :]) * 1e12
    logits = logits - (1.0 - m[:, None, :, None]) * 1e12
    tril = jnp.tril(jnp.ones((L, L), jnp.float32), k=-1)
    logits = logits - tril[None, None, :, :] * 1e12
    return logits / (head_size ** 0.5)


if __name__ == "__main__":
    B, L, H = 8, 32, 32          # L must equal H (LayerNorm([num_features, 768]) semantics)
    GROUP = 4                    # batch elements per grid step (sublane-stacked)
    VOCAB = 100
    HEADS, HEAD_SIZE = 1, 16     # toy GlobalPointer(1, 64) -> (1, 16)

    key = jax.random.PRNGKey(0)
    ks = iter(jax.random.split(key, 48))

    def w(shape, scale=0.05):
        return jax.random.normal(next(ks), shape, dtype=jnp.float32) * scale

    # --- deterministic parameters ---
    params = {
        "w_gcn": w((H, H)), "b_gcn": w((1, H)),
        "gamma1": jnp.ones((L, H), jnp.float32), "beta1": jnp.zeros((L, H), jnp.float32),
        "gamma2": jnp.ones((L, H), jnp.float32), "beta2": jnp.zeros((L, H), jnp.float32),
        "w_fuse": w((2 * H, H)), "b_fuse": w((1, H)),     # Linear weights stored pre-transposed
        "w_line": w((H, H)), "b_line": w((1, H)),
    }
    for ra in ("ra1", "ra2"):
        params[f"{ra}_wq"] = w((H, H)); params[f"{ra}_bq"] = w((1, H))
        params[f"{ra}_wk"] = w((H, H)); params[f"{ra}_bk"] = w((1, H))
        params[f"{ra}_wv"] = w((H, H)); params[f"{ra}_bv"] = w((1, H))
        params[f"{ra}_ws"] = w((2 * H, 1)); params[f"{ra}_bs"] = w((1, 1))
        params[f"{ra}_wg"] = w((2 * H, 1)); params[f"{ra}_bg"] = w((1, 1))
    w_gp = w((H, HEADS * 2 * HEAD_SIZE))
    b_gp = w((HEADS * 2 * HEAD_SIZE,))
    emb_table = w((VOCAB, H), scale=0.5)

    # --- deterministic example inputs ---
    text = jax.random.randint(next(ks), (B, L), 0, VOCAB, dtype=jnp.int32)
    lengths = (L - (jnp.arange(B) % 5)).astype(jnp.int32)
    attention_mask = (jnp.arange(L)[None, :] < lengths[:, None]).astype(jnp.int32)
    adj = jax.random.bernoulli(next(ks), 0.3, (B, L, L)).astype(jnp.float32)

    # TODO(synk): BertModel.from_pretrained(...) replaced by a deterministic embedding
    # lookup producing the [B, L, H] hidden states consumed by the rest of the graph.
    outputs = jnp.take(emb_table, text, axis=0)              # [B, L, H]

    zout = bert_gcn_pallas(outputs, adj, params, group=GROUP)   # Pallas hot path
    FG = global_pointer(zout, attention_mask, w_gp, b_gp,
                        heads=HEADS, head_size=HEAD_SIZE)       # [B, 1, L, L]

    jax.block_until_ready(zout)
    jax.block_until_ready(FG)
    print("KERNEL_OK")
</pallas_src>

<mosaic_0001>
module attributes {stable_mosaic.version = 11 : i64} {
  func.func @bert_gcn_kernel(%arg0: i32, %arg1: memref<4x32x32xbf16, #tpu.memory_space<vmem>>, %arg2: memref<4x32x32xbf16, #tpu.memory_space<vmem>>, %arg3: memref<192x32xbf16, #tpu.memory_space<vmem>>, %arg4: memref<4x32x32xbf16, #tpu.memory_space<vmem>>, %arg5: memref<5x32xf32, #tpu.memory_space<vmem>>, %arg6: memref<8x32xf32, #tpu.memory_space<vmem>>, %arg7: memref<2xf32, #tpu.memory_space<smem>>, %arg8: memref<4x32x32xf32, #tpu.memory_space<vmem>>) attributes {dimension_semantics = [#tpu.dimension_semantics<parallel>], iteration_bounds = array<i64: 2>, scalar_prefetch = 0 : i64, scratch_operands = 0 : i64, tpu.core_type = #tpu.core_type<tc>, window_params = [{transform_indices = @transform_0, window_bounds = array<i64: 4, 32, 32>}, {transform_indices = @transform_1, window_bounds = array<i64: 4, 32, 32>}, {pipeline_mode = #tpu.pipeline_mode<synchronous>, transform_indices = @transform_2, window_bounds = array<i64: 192, 32>}, {pipeline_mode = #tpu.pipeline_mode<synchronous>, transform_indices = @transform_3, window_bounds = array<i64: 4, 32, 32>}, {pipeline_mode = #tpu.pipeline_mode<synchronous>, transform_indices = @transform_4, window_bounds = array<i64: 5, 32>}, {pipeline_mode = #tpu.pipeline_mode<synchronous>, transform_indices = @transform_5, window_bounds = array<i64: 8, 32>}, {transform_indices = @transform_6, window_bounds = array<i64: 2>}, {transform_indices = @transform_7, window_bounds = array<i64: 4, 32, 32>}]} {
    %c0 = arith.constant 0 : index
    %c0_0 = arith.constant 0 : index
    %c0_1 = arith.constant 0 : index
    %0 = vector.load %arg1[%c0, %c0_0, %c0_1] : memref<4x32x32xbf16, #tpu.memory_space<vmem>>, vector<4x32x32xbf16>
    %1 = vector.shape_cast %0 : vector<4x32x32xbf16> to vector<128x32xbf16>
    %c0_2 = arith.constant 0 : index
    %c0_3 = arith.constant 0 : index
    %c0_4 = arith.constant 0 : index
    %2 = vector.load %arg2[%c0_2, %c0_3, %c0_4] : memref<4x32x32xbf16, #tpu.memory_space<vmem>>, vector<4x32x32xbf16>
    %3 = arith.extf %0 : vector<4x32x32xbf16> to vector<4x32x32xf32>
    %c0_5 = arith.constant 0 : index
    %c0_6 = arith.constant 0 : index
    %4 = vector.load %arg3[%c0_5, %c0_6] : memref<192x32xbf16, #tpu.memory_space<vmem>>, vector<32x32xbf16>
    %cst = arith.constant dense<0.000000e+00> : vector<128x32xf32>
    %5 = tpu.matmul %1, %4, %cst {dimension_numbers = #tpu.dot_dimension_numbers<[1], [0], [0], [1], [0, 0, 1, 1], [], []>} : vector<128x32xbf16>, vector<32x32xbf16>, vector<128x32xf32> -> vector<128x32xf32>
    %6 = vector.shape_cast %5 : vector<128x32xf32> to vector<4x32x32xf32>
    %7 = arith.truncf %6 : vector<4x32x32xf32> to vector<4x32x32xbf16>
    %8 = arith.extf %2 : vector<4x32x32xbf16> to vector<4x32x32xf32>
    %cst_7 = arith.constant dense<0.000000e+00> : vector<4x32xf32>
    %9 = vector.multi_reduction <add>, %8, %cst_7 [2] : vector<4x32x32xf32> to vector<4x32xf32>
    %10 = vector.shape_cast %9 : vector<4x32xf32> to vector<4x32x1xf32>
    %cst_8 = arith.constant 1.000000e+00 : f32
    %11 = vector.broadcast %cst_8 : f32 to vector<4x32x1xf32>
    %12 = arith.addf %10, %11 : vector<4x32x1xf32>
    %13 = tpu.reciprocal %12 {approx = true} : vector<4x32x1xf32> -> vector<4x32x1xf32>
    "tpu.trace_start"() <{level = 10 : i32, message = "gij,gjh->gih"}> : () -> ()
    %cst_9 = arith.constant dense<0.000000e+00> : vector<4x32x32xf32>
    %14 = tpu.matmul %2, %7, %cst_9 {dimension_numbers = #tpu.dot_dimension_numbers<[2], [1], [1], [2], [0, 0, 0, 1, 1, 2], [0], [0]>} : vector<4x32x32xbf16>, vector<4x32x32xbf16>, vector<4x32x32xf32> -> vector<4x32x32xf32>
    "tpu.trace_stop"() : () -> ()
    %15 = vector.broadcast %13 : vector<4x32x1xf32> to vector<4x32x32xf32>
    %16 = arith.mulf %14, %15 : vector<4x32x32xf32>
    %c0_10 = arith.constant 0 : index
    %c0_11 = arith.constant 0 : index
    %17 = vector.load %arg5[%c0_10, %c0_11] : memref<5x32xf32, #tpu.memory_space<vmem>>, vector<1x32xf32>
    %18 = vector.shape_cast %17 : vector<1x32xf32> to vector<1x1x32xf32>
    %19 = vector.broadcast %18 : vector<1x1x32xf32> to vector<4x32x32xf32>
    %20 = arith.addf %16, %19 : vector<4x32x32xf32>
    %cst_12 = arith.constant 0.000000e+00 : f32
    %21 = vector.broadcast %cst_12 : f32 to vector<4x32x32xf32>
    %22 = arith.maximumf %20, %21 : vector<4x32x32xf32>
    %c0_13 = arith.constant 0 : index
    %c0_14 = arith.constant 0 : index
    %c0_15 = arith.constant 0 : index
    %23 = vector.load %arg4[%c0_13, %c0_14, %c0_15] : memref<4x32x32xbf16, #tpu.memory_space<vmem>>, vector<1x32x32xbf16>
    %24 = vector.shape_cast %23 : vector<1x32x32xbf16> to vector<32x32xbf16>
    %25 = arith.extf %24 : vector<32x32xbf16> to vector<32x32xf32>
    %c1 = arith.constant 1 : index
    %c0_16 = arith.constant 0 : index
    %c0_17 = arith.constant 0 : index
    %26 = vector.load %arg4[%c1, %c0_16, %c0_17] : memref<4x32x32xbf16, #tpu.memory_space<vmem>>, vector<1x32x32xbf16>
    %27 = vector.shape_cast %26 : vector<1x32x32xbf16> to vector<32x32xbf16>
    %28 = arith.extf %27 : vector<32x32xbf16> to vector<32x32xf32>
    %cst_18 = arith.constant dense<0.000000e+00> : vector<4x32xf32>
    %29 = vector.multi_reduction <add>, %3, %cst_18 [2] : vector<4x32x32xf32> to vector<4x32xf32>
    %30 = vector.shape_cast %29 : vector<4x32xf32> to vector<4x32x1xf32>
    %cst_19 = arith.constant dense<0.000000e+00> : vector<4x1xf32>
    %31 = vector.multi_reduction <add>, %30, %cst_19 [1] : vector<4x32x1xf32> to vector<4x1xf32>
    %32 = vector.shape_cast %31 : vector<4x1xf32> to vector<4x1x1xf32>
    %33 = arith.mulf %3, %3 : vector<4x32x32xf32>
    %cst_20 = arith.constant dense<0.000000e+00> : vector<4x32xf32>
    %34 = vector.multi_reduction <add>, %33, %cst_20 [2] : vector<4x32x32xf32> to vector<4x32xf32>
    %35 = vector.shape_cast %34 : vector<4x32xf32> to vector<4x32x1xf32>
    %cst_21 = arith.constant dense<0.000000e+00> : vector<4x1xf32>
    %36 = vector.multi_reduction <add>, %35, %cst_21 [1] : vector<4x32x1xf32> to vector<4x1xf32>
    %37 = vector.shape_cast %36 : vector<4x1xf32> to vector<4x1x1xf32>
    %cst_22 = arith.constant 9.765625E-4 : f32
    %38 = vector.broadcast %cst_22 : f32 to vector<4x1x1xf32>
    %39 = arith.mulf %32, %38 : vector<4x1x1xf32>
    %cst_23 = arith.constant 9.765625E-4 : f32
    %40 = vector.broadcast %cst_23 : f32 to vector<4x1x1xf32>
    %41 = arith.mulf %37, %40 : vector<4x1x1xf32>
    %42 = arith.mulf %39, %39 : vector<4x1x1xf32>
    %43 = arith.subf %41, %42 : vector<4x1x1xf32>
    %44 = vector.broadcast %39 : vector<4x1x1xf32> to vector<4x32x32xf32>
    %45 = arith.subf %3, %44 : vector<4x32x32xf32>
    %cst_24 = arith.constant 9.99999974E-6 : f32
    %46 = vector.broadcast %cst_24 : f32 to vector<4x1x1xf32>
    %47 = arith.addf %43, %46 : vector<4x1x1xf32>
    %48 = math.rsqrt %47 : vector<4x1x1xf32>
    %49 = vector.broadcast %48 : vector<4x1x1xf32> to vector<4x32x32xf32>
    %50 = arith.mulf %45, %49 : vector<4x32x32xf32>
    %51 = vector.shape_cast %25 : vector<32x32xf32> to vector<1x32x32xf32>
    %52 = vector.broadcast %51 : vector<1x32x32xf32> to vector<4x32x32xf32>
    %53 = arith.mulf %50, %52 : vector<4x32x32xf32>
    %54 = vector.shape_cast %28 : vector<32x32xf32> to vector<1x32x32xf32>
    %55 = vector.broadcast %54 : vector<1x32x32xf32> to vector<4x32x32xf32>
    %56 = arith.addf %53, %55 : vector<4x32x32xf32>
    %c2 = arith.constant 2 : index
    %c0_25 = arith.constant 0 : index
    %c0_26 = arith.constant 0 : index
    %57 = vector.load %arg4[%c2, %c0_25, %c0_26] : memref<4x32x32xbf16, #tpu.memory_space<vmem>>, vector<1x32x32xbf16>
    %58 = vector.shape_cast %57 : vector<1x32x32xbf16> to vector<32x32xbf16>
    %59 = arith.extf %58 : vector<32x32xbf16> to vector<32x32xf32>
    %c3 = arith.constant 3 : index
    %c0_27 = arith.constant 0 : index
    %c0_28 = arith.constant 0 : index
    %60 = vector.load %arg4[%c3, %c0_27, %c0_28] : memref<4x32x32xbf16, #tpu.memory_space<vmem>>, vector<1x32x32xbf16>
    %61 = vector.shape_cast %60 : vector<1x32x32xbf16> to vector<32x32xbf16>
    %62 = arith.extf %61 : vector<32x32xbf16> to vector<32x32xf32>
    %cst_29 = arith.constant dense<0.000000e+00> : vector<4x32xf32>
    %63 = vector.multi_reduction <add>, %22, %cst_29 [2] : vector<4x32x32xf32> to vector<4x32xf32>
    %64 = vector.shape_cast %63 : vector<4x32xf32> to vector<4x32x1xf32>
    %cst_30 = arith.constant dense<0.000000e+00> : vector<4x1xf32>
    %65 = vector.multi_reduction <add>, %64, %cst_30 [1] : vector<4x32x1xf32> to vector<4x1xf32>
    %66 = vector.shape_cast %65 : vector<4x1xf32> to vector<4x1x1xf32>
    %67 = arith.mulf %22, %22 : vector<4x32x32xf32>
    %cst_31 = arith.constant dense<0.000000e+00> : vector<4x32xf32>
    %68 = vector.multi_reduction <add>, %67, %cst_31 [2] : vector<4x32x32xf32> to vector<4x32xf32>
    %69 = vector.shape_cast %68 : vector<4x32xf32> to vector<4x32x1xf32>
    %cst_32 = arith.constant dense<0.000000e+00> : vector<4x1xf32>
    %70 = vector.multi_reduction <add>, %69, %cst_32 [1] : vector<4x32x1xf32> to vector<4x1xf32>
    %71 = vector.shape_cast %70 : vector<4x1xf32> to vector<4x1x1xf32>
    %cst_33 = arith.constant 9.765625E-4 : f32
    %72 = vector.broadcast %cst_33 : f32 to vector<4x1x1xf32>
    %73 = arith.mulf %66, %72 : vector<4x1x1xf32>
    %cst_34 = arith.constant 9.765625E-4 : f32
    %74 = vector.broadcast %cst_34 : f32 to vector<4x1x1xf32>
    %75 = arith.mulf %71, %74 : vector<4x1x1xf32>
    %76 = arith.mulf %73, %73 : vector<4x1x1xf32>
    %77 = arith.subf %75, %76 : vector<4x1x1xf32>
    %78 = vector.broadcast %73 : vector<4x1x1xf32> to vector<4x32x32xf32>
    %79 = arith.subf %22, %78 : vector<4x32x32xf32>
    %cst_35 = arith.constant 9.99999974E-6 : f32
    %80 = vector.broadcast %cst_35 : f32 to vector<4x1x1xf32>
    %81 = arith.addf %77, %80 : vector<4x1x1xf32>
    %82 = math.rsqrt %81 : vector<4x1x1xf32>
    %83 = vector.broadcast %82 : vector<4x1x1xf32> to vector<4x32x32xf32>
    %84 = arith.mulf %79, %83 : vector<4x32x32xf32>
    %85 = vector.shape_cast %59 : vector<32x32xf32> to vector<1x32x32xf32>
    %86 = vector.broadcast %85 : vector<1x32x32xf32> to vector<4x32x32xf32>
    %87 = arith.mulf %84, %86 : vector<4x32x32xf32>
    %88 = vector.shape_cast %62 : vector<32x32xf32> to vector<1x32x32xf32>
    %89 = vector.broadcast %88 : vector<1x32x32xf32> to vector<4x32x32xf32>
    %90 = arith.addf %87, %89 : vector<4x32x32xf32>
    %91 = vector.shape_cast %56 : vector<4x32x32xf32> to vector<128x32xf32>
    %92 = arith.truncf %91 : vector<128x32xf32> to vector<128x32xbf16>
    %c32 = arith.constant 32 : index
    %c0_36 = arith.constant 0 : index
    %93 = vector.load %arg3[%c32, %c0_36] : memref<192x32xbf16, #tpu.memory_space<vmem>>, vector<32x32xbf16>
    %cst_37 = arith.constant dense<0.000000e+00> : vector<128x32xf32>
    %94 = tpu.matmul %92, %93, %cst_37 {dimension_numbers = #tpu.dot_dimension_numbers<[1], [0], [0], [1], [0, 0, 1, 1], [], []>} : vector<128x32xbf16>, vector<32x32xbf16>, vector<128x32xf32> -> vector<128x32xf32>
    %95 = vector.shape_cast %90 : vector<4x32x32xf32> to vector<128x32xf32>
    %96 = arith.truncf %95 : vector<128x32xf32> to vector<128x32xbf16>
    %c64 = arith.constant 64 : index
    %c0_38 = arith.constant 0 : index
    %97 = vector.load %arg3[%c64, %c0_38] : memref<192x32xbf16, #tpu.memory_space<vmem>>, vector<32x32xbf16>
    %cst_39 = arith.constant dense<0.000000e+00> : vector<128x32xf32>
    %98 = tpu.matmul %96, %97, %cst_39 {dimension_numbers = #tpu.dot_dimension_numbers<[1], [0], [0], [1], [0, 0, 1, 1], [], []>} : vector<128x32xbf16>, vector<32x32xbf16>, vector<128x32xf32> -> vector<128x32xf32>
    %99 = arith.addf %94, %98 : vector<128x32xf32>
    %c1_40 = arith.constant 1 : index
    %c0_41 = arith.constant 0 : index
    %100 = vector.load %arg5[%c1_40, %c0_41] : memref<5x32xf32, #tpu.memory_space<vmem>>, vector<1x32xf32>
    %101 = vector.broadcast %100 : vector<1x32xf32> to vector<128x32xf32>
    %102 = arith.addf %99, %101 : vector<128x32xf32>
    %103 = arith.truncf %102 : vector<128x32xf32> to vector<128x32xbf16>
    %c96 = arith.constant 96 : index
    %c0_42 = arith.constant 0 : index
    %104 = vector.load %arg3[%c96, %c0_42] : memref<192x32xbf16, #tpu.memory_space<vmem>>, vector<32x32xbf16>
    %cst_43 = arith.constant dense<0.000000e+00> : vector<128x32xf32>
    %105 = tpu.matmul %103, %104, %cst_43 {dimension_numbers = #tpu.dot_dimension_numbers<[1], [0], [0], [1], [0, 0, 1, 1], [], []>} : vector<128x32xbf16>, vector<32x32xbf16>, vector<128x32xf32> -> vector<128x32xf32>
    %c2_44 = arith.constant 2 : index
    %c0_45 = arith.constant 0 : index
    %106 = vector.load %arg5[%c2_44, %c0_45] : memref<5x32xf32, #tpu.memory_space<vmem>>, vector<1x32xf32>
    %107 = vector.broadcast %106 : vector<1x32xf32> to vector<128x32xf32>
    %108 = arith.addf %105, %107 : vector<128x32xf32>
    %cst_46 = arith.constant 0.000000e+00 : f32
    %109 = vector.broadcast %cst_46 : f32 to vector<128x32xf32>
    %110 = arith.cmpf ogt, %108, %109 : vector<128x32xf32>
    %cst_47 = arith.constant 0.00999999977 : f32
    %111 = vector.broadcast %cst_47 : f32 to vector<128x32xf32>
    %112 = arith.mulf %111, %108 : vector<128x32xf32>
    %113 = arith.select %110, %108, %112 : vector<128x32xi1>, vector<128x32xf32>
    %114 = arith.truncf %113 : vector<128x32xf32> to vector<128x32xbf16>
    %115 = vector.shape_cast %113 : vector<128x32xf32> to vector<4x32x32xf32>
    %c128 = arith.constant 128 : index
    %c0_48 = arith.constant 0 : index
    %116 = vector.load %arg3[%c128, %c0_48] : memref<192x32xbf16, #tpu.memory_space<vmem>>, vector<32x32xbf16>
    %cst_49 = arith.constant dense<0.000000e+00> : vector<128x32xf32>
    %117 = tpu.matmul %114, %116, %cst_49 {dimension_numbers = #tpu.dot_dimension_numbers<[1], [0], [0], [1], [0, 0, 1, 1], [], []>} : vector<128x32xbf16>, vector<32x32xbf16>, vector<128x32xf32> -> vector<128x32xf32>
    %c3_50 = arith.constant 3 : index
    %c0_51 = arith.constant 0 : index
    %118 = vector.load %arg5[%c3_50, %c0_51] : memref<5x32xf32, #tpu.memory_space<vmem>>, vector<1x32xf32>
    %119 = vector.broadcast %118 : vector<1x32xf32> to vector<128x32xf32>
    %120 = arith.addf %117, %119 : vector<128x32xf32>
    %121 = vector.shape_cast %120 : vector<128x32xf32> to vector<4x32x32xf32>
    %c0_52 = arith.constant 0 : index
    %c0_53 = arith.constant 0 : index
    %122 = vector.load %arg6[%c0_52, %c0_53] : memref<8x32xf32, #tpu.memory_space<vmem>>, vector<1x32xf32>
    %123 = vector.shape_cast %122 : vector<1x32xf32> to vector<1x1x32xf32>
    %124 = vector.broadcast %123 : vector<1x1x32xf32> to vector<4x32x32xf32>
    %125 = arith.mulf %115, %124 : vector<4x32x32xf32>
    %cst_54 = arith.constant dense<0.000000e+00> : vector<4x32xf32>
    %126 = vector.multi_reduction <add>, %125, %cst_54 [2] : vector<4x32x32xf32> to vector<4x32xf32>
    %127 = vector.shape_cast %126 : vector<4x32xf32> to vector<4x32x1xf32>
    %c1_55 = arith.constant 1 : index
    %c0_56 = arith.constant 0 : index
    %128 = vector.load %arg6[%c1_55, %c0_56] : memref<8x32xf32, #tpu.memory_space<vmem>>, vector<1x32xf32>
    %129 = vector.shape_cast %128 : vector<1x32xf32> to vector<1x1x32xf32>
    %130 = vector.broadcast %129 : vector<1x1x32xf32> to vector<4x32x32xf32>
    %131 = arith.mulf %115, %130 : vector<4x32x32xf32>
    %cst_57 = arith.constant dense<0.000000e+00> : vector<4x32xf32>
    %132 = vector.multi_reduction <add>, %131, %cst_57 [2] : vector<4x32x32xf32> to vector<4x32xf32>
    %133 = vector.shape_cast %132 : vector<4x32xf32> to vector<4x32x1xf32>
    %c2_58 = arith.constant 2 : index
    %c0_59 = arith.constant 0 : index
    %134 = vector.load %arg6[%c2_58, %c0_59] : memref<8x32xf32, #tpu.memory_space<vmem>>, vector<1x32xf32>
    %c3_60 = arith.constant 3 : index
    %c0_61 = arith.constant 0 : index
    %135 = vector.load %arg6[%c3_60, %c0_61] : memref<8x32xf32, #tpu.memory_space<vmem>>, vector<1x32xf32>
    %c0_62 = arith.constant 0 : index
    %136 = memref.load %arg7[%c0_62] : memref<2xf32, #tpu.memory_space<smem>>
    %137 = tpu.transpose %133, [0, 2, 1] : vector<4x32x1xf32> -> vector<4x1x32xf32>
    %138 = vector.broadcast %127 : vector<4x32x1xf32> to vector<4x32x32xf32>
    %139 = vector.broadcast %137 : vector<4x1x32xf32> to vector<4x32x32xf32>
    %140 = arith.addf %138, %139 : vector<4x32x32xf32>
    %cst_63 = arith.constant dense<0xFF800000> : vector<4x32xf32>
    %141 = vector.multi_reduction <maximumf>, %140, %cst_63 [2] : vector<4x32x32xf32> to vector<4x32xf32>
    %142 = vector.shape_cast %141 : vector<4x32xf32> to vector<4x32x1xf32>
    %143 = vector.broadcast %142 : vector<4x32x1xf32> to vector<4x32x32xf32>
    %144 = arith.subf %140, %143 : vector<4x32x32xf32>
    %145 = math.exp %144 : vector<4x32x32xf32>
    %cst_64 = arith.constant dense<0.000000e+00> : vector<4x32xf32>
    %146 = vector.multi_reduction <add>, %145, %cst_64 [2] : vector<4x32x32xf32> to vector<4x32xf32>
    %147 = vector.shape_cast %146 : vector<4x32xf32> to vector<4x32x1xf32>
    %148 = tpu.reciprocal %147 {approx = true} : vector<4x32x1xf32> -> vector<4x32x1xf32>
    %149 = vector.broadcast %148 : vector<4x32x1xf32> to vector<4x32x32xf32>
    %150 = arith.mulf %145, %149 : vector<4x32x32xf32>
    %151 = arith.truncf %150 : vector<4x32x32xf32> to vector<4x32x32xbf16>
    %152 = arith.truncf %121 : vector<4x32x32xf32> to vector<4x32x32xbf16>
    "tpu.trace_start"() <{level = 10 : i32, message = "gcl,glh->gch"}> : () -> ()
    %cst_65 = arith.constant dense<0.000000e+00> : vector<4x32x32xf32>
    %153 = tpu.matmul %151, %152, %cst_65 {dimension_numbers = #tpu.dot_dimension_numbers<[2], [1], [1], [2], [0, 0, 0, 1, 1, 2], [0], [0]>} : vector<4x32x32xbf16>, vector<4x32x32xbf16>, vector<4x32x32xf32> -> vector<4x32x32xf32>
    "tpu.trace_stop"() : () -> ()
    %154 = arith.addf %153, %115 : vector<4x32x32xf32>
    %155 = vector.shape_cast %134 : vector<1x32xf32> to vector<1x1x32xf32>
    %156 = vector.broadcast %155 : vector<1x1x32xf32> to vector<4x32x32xf32>
    %157 = arith.mulf %154, %156 : vector<4x32x32xf32>
    %cst_66 = arith.constant dense<0.000000e+00> : vector<4x32xf32>
    %158 = vector.multi_reduction <add>, %157, %cst_66 [2] : vector<4x32x32xf32> to vector<4x32xf32>
    %159 = vector.shape_cast %158 : vector<4x32xf32> to vector<4x32x1xf32>
    %160 = vector.shape_cast %135 : vector<1x32xf32> to vector<1x1x32xf32>
    %161 = vector.broadcast %160 : vector<1x1x32xf32> to vector<4x32x32xf32>
    %162 = arith.mulf %115, %161 : vector<4x32x32xf32>
    %cst_67 = arith.constant dense<0.000000e+00> : vector<4x32xf32>
    %163 = vector.multi_reduction <add>, %162, %cst_67 [2] : vector<4x32x32xf32> to vector<4x32xf32>
    %164 = vector.shape_cast %163 : vector<4x32xf32> to vector<4x32x1xf32>
    %165 = arith.addf %159, %164 : vector<4x32x1xf32>
    %166 = vector.broadcast %136 : f32 to vector<4x32x1xf32>
    %167 = arith.addf %165, %166 : vector<4x32x1xf32>
    %168 = arith.negf %167 : vector<4x32x1xf32>
    %169 = math.exp %168 : vector<4x32x1xf32>
    %cst_68 = arith.constant 1.000000e+00 : f32
    %170 = vector.broadcast %cst_68 : f32 to vector<4x32x1xf32>
    %171 = arith.addf %170, %169 : vector<4x32x1xf32>
    %172 = arith.divf %170, %171 : vector<4x32x1xf32>
    %173 = vector.broadcast %172 : vector<4x32x1xf32> to vector<4x32x32xf32>
    %174 = arith.mulf %173, %154 : vector<4x32x32xf32>
    %cst_69 = arith.constant 1.000000e+00 : f32
    %175 = vector.broadcast %cst_69 : f32 to vector<4x32x1xf32>
    %176 = arith.subf %175, %172 : vector<4x32x1xf32>
    %177 = vector.broadcast %176 : vector<4x32x1xf32> to vector<4x32x32xf32>
    %178 = arith.mulf %177, %115 : vector<4x32x32xf32>
    %179 = arith.addf %174, %178 : vector<4x32x32xf32>
    %180 = arith.addf %179, %115 : vector<4x32x32xf32>
    %181 = vector.shape_cast %180 : vector<4x32x32xf32> to vector<128x32xf32>
    %182 = arith.truncf %181 : vector<128x32xf32> to vector<128x32xbf16>
    %c160 = arith.constant 160 : index
    %c0_70 = arith.constant 0 : index
    %183 = vector.load %arg3[%c160, %c0_70] : memref<192x32xbf16, #tpu.memory_space<vmem>>, vector<32x32xbf16>
    %cst_71 = arith.constant dense<0.000000e+00> : vector<128x32xf32>
    %184 = tpu.matmul %182, %183, %cst_71 {dimension_numbers = #tpu.dot_dimension_numbers<[1], [0], [0], [1], [0, 0, 1, 1], [], []>} : vector<128x32xbf16>, vector<32x32xbf16>, vector<128x32xf32> -> vector<128x32xf32>
    %c4 = arith.constant 4 : index
    %c0_72 = arith.constant 0 : index
    %185 = vector.load %arg5[%c4, %c0_72] : memref<5x32xf32, #tpu.memory_space<vmem>>, vector<1x32xf32>
    %186 = vector.broadcast %185 : vector<1x32xf32> to vector<128x32xf32>
    %187 = arith.addf %184, %186 : vector<128x32xf32>
    %188 = vector.shape_cast %187 : vector<128x32xf32> to vector<4x32x32xf32>
    %c4_73 = arith.constant 4 : index
    %c0_74 = arith.constant 0 : index
    %189 = vector.load %arg6[%c4_73, %c0_74] : memref<8x32xf32, #tpu.memory_space<vmem>>, vector<1x32xf32>
    %190 = vector.shape_cast %189 : vector<1x32xf32> to vector<1x1x32xf32>
    %191 = vector.broadcast %190 : vector<1x1x32xf32> to vector<4x32x32xf32>
    %192 = arith.mulf %115, %191 : vector<4x32x32xf32>
    %cst_75 = arith.constant dense<0.000000e+00> : vector<4x32xf32>
    %193 = vector.multi_reduction <add>, %192, %cst_75 [2] : vector<4x32x32xf32> to vector<4x32xf32>
    %194 = vector.shape_cast %193 : vector<4x32xf32> to vector<4x32x1xf32>
    %c5 = arith.constant 5 : index
    %c0_76 = arith.constant 0 : index
    %195 = vector.load %arg6[%c5, %c0_76] : memref<8x32xf32, #tpu.memory_space<vmem>>, vector<1x32xf32>
    %196 = vector.shape_cast %195 : vector<1x32xf32> to vector<1x1x32xf32>
    %197 = vector.broadcast %196 : vector<1x1x32xf32> to vector<4x32x32xf32>
    %198 = arith.mulf %180, %197 : vector<4x32x32xf32>
    %cst_77 = arith.constant dense<0.000000e+00> : vector<4x32xf32>
    %199 = vector.multi_reduction <add>, %198, %cst_77 [2] : vector<4x32x32xf32> to vector<4x32xf32>
    %200 = vector.shape_cast %199 : vector<4x32xf32> to vector<4x32x1xf32>
    %c6 = arith.constant 6 : index
    %c0_78 = arith.constant 0 : index
    %201 = vector.load %arg6[%c6, %c0_78] : memref<8x32xf32, #tpu.memory_space<vmem>>, vector<1x32xf32>
    %c7 = arith.constant 7 : index
    %c0_79 = arith.constant 0 : index
    %202 = vector.load %arg6[%c7, %c0_79] : memref<8x32xf32, #tpu.memory_space<vmem>>, vector<1x32xf32>
    %c1_80 = arith.constant 1 : index
    %203 = memref.load %arg7[%c1_80] : memref<2xf32, #tpu.memory_space<smem>>
    %204 = tpu.transpose %200, [0, 2, 1] : vector<4x32x1xf32> -> vector<4x1x32xf32>
    %205 = vector.broadcast %194 : vector<4x32x1xf32> to vector<4x32x32xf32>
    %206 = vector.broadcast %204 : vector<4x1x32xf32> to vector<4x32x32xf32>
    %207 = arith.addf %205, %206 : vector<4x32x32xf32>
    %cst_81 = arith.constant dense<0xFF800000> : vector<4x32xf32>
    %208 = vector.multi_reduction <maximumf>, %207, %cst_81 [2] : vector<4x32x32xf32> to vector<4x32xf32>
    %209 = vector.shape_cast %208 : vector<4x32xf32> to vector<4x32x1xf32>
    %210 = vector.broadcast %209 : vector<4x32x1xf32> to vector<4x32x32xf32>
    %211 = arith.subf %207, %210 : vector<4x32x32xf32>
    %212 = math.exp %211 : vector<4x32x32xf32>
    %cst_82 = arith.constant dense<0.000000e+00> : vector<4x32xf32>
    %213 = vector.multi_reduction <add>, %212, %cst_82 [2] : vector<4x32x32xf32> to vector<4x32xf32>
    %214 = vector.shape_cast %213 : vector<4x32xf32> to vector<4x32x1xf32>
    %215 = tpu.reciprocal %214 {approx = true} : vector<4x32x1xf32> -> vector<4x32x1xf32>
    %216 = vector.broadcast %215 : vector<4x32x1xf32> to vector<4x32x32xf32>
    %217 = arith.mulf %212, %216 : vector<4x32x32xf32>
    %218 = arith.truncf %217 : vector<4x32x32xf32> to vector<4x32x32xbf16>
    %219 = arith.truncf %188 : vector<4x32x32xf32> to vector<4x32x32xbf16>
    "tpu.trace_start"() <{level = 10 : i32, message = "gcl,glh->gch"}> : () -> ()
    %cst_83 = arith.constant dense<0.000000e+00> : vector<4x32x32xf32>
    %220 = tpu.matmul %218, %219, %cst_83 {dimension_numbers = #tpu.dot_dimension_numbers<[2], [1], [1], [2], [0, 0, 0, 1, 1, 2], [0], [0]>} : vector<4x32x32xbf16>, vector<4x32x32xbf16>, vector<4x32x32xf32> -> vector<4x32x32xf32>
    "tpu.trace_stop"() : () -> ()
    %221 = arith.addf %220, %115 : vector<4x32x32xf32>
    %222 = vector.shape_cast %201 : vector<1x32xf32> to vector<1x1x32xf32>
    %223 = vector.broadcast %222 : vector<1x1x32xf32> to vector<4x32x32xf32>
    %224 = arith.mulf %221, %223 : vector<4x32x32xf32>
    %cst_84 = arith.constant dense<0.000000e+00> : vector<4x32xf32>
    %225 = vector.multi_reduction <add>, %224, %cst_84 [2] : vector<4x32x32xf32> to vector<4x32xf32>
    %226 = vector.shape_cast %225 : vector<4x32xf32> to vector<4x32x1xf32>
    %227 = vector.shape_cast %202 : vector<1x32xf32> to vector<1x1x32xf32>
    %228 = vector.broadcast %227 : vector<1x1x32xf32> to vector<4x32x32xf32>
    %229 = arith.mulf %115, %228 : vector<4x32x32xf32>
    %cst_85 = arith.constant dense<0.000000e+00> : vector<4x32xf32>
    %230 = vector.multi_reduction <add>, %229, %cst_85 [2] : vector<4x32x32xf32> to vector<4x32xf32>
    %231 = vector.shape_cast %230 : vector<4x32xf32> to vector<4x32x1xf32>
    %232 = arith.addf %226, %231 : vector<4x32x1xf32>
    %233 = vector.broadcast %203 : f32 to vector<4x32x1xf32>
    %234 = arith.addf %232, %233 : vector<4x32x1xf32>
    %235 = arith.negf %234 : vector<4x32x1xf32>
    %236 = math.exp %235 : vector<4x32x1xf32>
    %cst_86 = arith.constant 1.000000e+00 : f32
    %237 = vector.broadcast %cst_86 : f32 to vector<4x32x1xf32>
    %238 = arith.addf %237, %236 : vector<4x32x1xf32>
    %239 = arith.divf %237, %238 : vector<4x32x1xf32>
    %240 = vector.broadcast %239 : vector<4x32x1xf32> to vector<4x32x32xf32>
    %241 = arith.mulf %240, %221 : vector<4x32x32xf32>
    %cst_87 = arith.constant 1.000000e+00 : f32
    %242 = vector.broadcast %cst_87 : f32 to vector<4x32x1xf32>
    %243 = arith.subf %242, %239 : vector<4x32x1xf32>
    %244 = vector.broadcast %243 : vector<4x32x1xf32> to vector<4x32x32xf32>
    %245 = arith.mulf %244, %115 : vector<4x32x32xf32>
    %246 = arith.addf %241, %245 : vector<4x32x32xf32>
    %247 = arith.addf %246, %115 : vector<4x32x32xf32>
    %248 = arith.addf %180, %247 : vector<4x32x32xf32>
    %c0_88 = arith.constant 0 : index
    %c0_89 = arith.constant 0 : index
    %c0_90 = arith.constant 0 : index
    %249 = vector.load %arg8[%c0_88, %c0_89, %c0_90] : memref<4x32x32xf32, #tpu.memory_space<vmem>>, vector<4x32x32xf32>
    tpu.vector_store %arg8[%c0_88, %c0_89, %c0_90], %248 {strides = array<i32>} : memref<4x32x32xf32, #tpu.memory_space<vmem>>, vector<4x32x32xf32>,
    return
  }
  func.func @transform_0(%arg0: i32) -> (i32, i32, i32) {
    %c0_i32 = arith.constant 0 : i32
    %c0_i32_0 = arith.constant 0 : i32
    %c0_i32_1 = arith.constant 0 : i32
    return %arg0, %c0_i32, %c0_i32_0 : i32, i32, i32
  }
  func.func @transform_1(%arg0: i32) -> (i32, i32, i32) {
    %c0_i32 = arith.constant 0 : i32
    %c0_i32_0 = arith.constant 0 : i32
    %c0_i32_1 = arith.constant 0 : i32
    return %arg0, %c0_i32, %c0_i32_0 : i32, i32, i32
  }
  func.func @transform_2(%arg0: i32) -> (i32, i32) {
    %c0_i32 = arith.constant 0 : i32
    %c0_i32_0 = arith.constant 0 : i32
    %c0_i32_1 = arith.constant 0 : i32
    return %c0_i32, %c0_i32_0 : i32, i32
  }
  func.func @transform_3(%arg0: i32) -> (i32, i32, i32) {
    %c0_i32 = arith.constant 0 : i32
    %c0_i32_0 = arith.constant 0 : i32
    %c0_i32_1 = arith.constant 0 : i32
    %c0_i32_2 = arith.constant 0 : i32
    return %c0_i32, %c0_i32_0, %c0_i32_1 : i32, i32, i32
  }
  func.func @transform_4(%arg0: i32) -> (i32, i32) {
    %c0_i32 = arith.constant 0 : i32
    %c0_i32_0 = arith.constant 0 : i32
    %c0_i32_1 = arith.constant 0 : i32
    return %c0_i32, %c0_i32_0 : i32, i32
  }
  func.func @transform_5(%arg0: i32) -> (i32, i32) {
    %c0_i32 = arith.constant 0 : i32
    %c0_i32_0 = arith.constant 0 : i32
    %c0_i32_1 = arith.constant 0 : i32
    return %c0_i32, %c0_i32_0 : i32, i32
  }
  func.func @transform_6(%arg0: i32) -> i32 {
    %c0_i32 = arith.constant 0 : i32
    %c0_i32_0 = arith.constant 0 : i32
    return %c0_i32 : i32
  }
  func.func @transform_7(%arg0: i32) -> (i32, i32, i32) {
    %c0_i32 = arith.constant 0 : i32
    %c0_i32_0 = arith.constant 0 : i32
    %c0_i32_1 = arith.constant 0 : i32
    return %arg0, %c0_i32, %c0_i32_0 : i32, i32, i32
  }
}

</mosaic_0001>

<llo_original>
// kernel: tpu_custom_call.1
$region0: #{tpu_custom_call.1}
  #allocation0 [shape = 'u32[]', space=smem, size = 0x4, offset = 0x4, fixed_abs, tag = 'smem constant byte address 0x4 - core index']
  #allocation1 [shape = 'u32[72,128]{1,0:T(1,128)}', space=vmem, size = 0x9000, scoped, tag = 'internal scratch']
  %s0 = inlined_call_operand.vmem [shape: bf16[8,32,32], index: 0, kind: input, shape index: {}]
  %s1 = inlined_call_operand.hbm [shape: bf16[8,32,32], index: 1, kind: input, shape index: {}]
  %s2 = inlined_call_operand.vmem [shape: bf16[192,32], index: 2, kind: input, shape index: {}]
  %s3 = inlined_call_operand.hbm [shape: bf16[4,32,32], index: 3, kind: input, shape index: {}]
  %s4 = inlined_call_operand.hbm [shape: f32[5,32], index: 4, kind: input, shape index: {}]
  %s5 = inlined_call_operand.hbm [shape: f32[8,32], index: 5, kind: input, shape index: {}]
  %s6 = inlined_call_operand.vmem [shape: f32[2], index: 6, kind: input, shape index: {}]
  %s7 = inlined_call_operand.hbm [shape: f32[8,32,32], index: 7, kind: output, shape index: {}]
  %s8 = sld [smem:[#allocation0]]
  $region81: #{tpu_custom_call.1} parent=0
    _
  %s10 = ssub.s32 1, %s8
  %s11 = scalar_select 0, %s10, %s8
  $region1: #{tpu_custom_call.1} parent=0
    #allocation2 [shape = 'u8[65536]{0}', space=vmem, size = 0x10000, scoped, tag = 'input window, operand 1']
    #allocation3 [shape = 's32[2]{0}', space=sflag, size = 0x8, scoped, tag = 'scoped memory for tpu_custom_call.1']
    #allocation4 [shape = 's32[2]{0}', space=sflag, size = 0x8, scoped, tag = 'scoped memory for tpu_custom_call.1']
    #allocation5 [shape = 's32[2]{0}', space=sflag, size = 0x8, scoped, tag = 'scoped memory for tpu_custom_call.1']
    #allocation6 [shape = 'u8[32768]{0}', space=vmem, size = 0x8000, scoped, tag = 'input window, operand 3, single buffered']
    #allocation7 [shape = 's32[1]{0}', space=sflag, size = 0x4, scoped, tag = 'scoped memory for tpu_custom_call.1']
    #allocation8 [shape = 'u8[4096]{0}', space=vmem, size = 0x1000, scoped, tag = 'input window, operand 4, single buffered']
    #allocation9 [shape = 'u8[4096]{0}', space=vmem, size = 0x1000, scoped, tag = 'input window, operand 5, single buffered']
    #allocation10 [shape = 's32[1]{0}', space=sflag, size = 0x4, scoped, tag = 'scoped memory for tpu_custom_call.1']
    #allocation11 [shape = 'u8[512]{0}', space=smem, size = 0x200, scoped, tag = 'input window, operand 6, single buffered']
    #allocation12 [shape = 'u8[131072]{0}', space=vmem, size = 0x20000, scoped, tag = 'output window, operand 0']
    %12 = vsyncpa [#allocation3], 0
    %s13 = scalar_lea.sflag [#allocation3], 1
    %14 = vsyncpa %s13, 0
    %15 = vsyncpa [#allocation7], 0
    %16 = vsyncpa [#allocation10], 0
    %17 = vsyncpa [#allocation5], 0
    %18 = vsyncpa [#allocation4], 0
    %s19 = scalar_lea.sflag [#allocation4], 1
    %20 = vsyncpa %s19, 0
    loop: start=0, step=1, limit=4
    $region2: #{tpu_custom_call.1} parent=1 // loop_pre_header
      _
    $region3: #{tpu_custom_call.1} parent=1 // loop_header
      %s22 = sphi 0, %s26
      %p23 = scmp.ge.s32.totalorder %s22, 4
      %s32 = sphi 0, %s34
      %s35 = sphi 0, %s32
      %s36 = sphi 0, %s35
      %s52 = sphi 0, %s36
      %s58 = sphi 0, %s60
      %s61 = sphi 0, %s58
      %s62 = sphi 0, %s61
      %s78 = sphi 0, %s62
      %s82 = sphi 0, %s82
      %s84 = sphi 0, %s82
      %s85 = sphi 0, %s84
      %s99 = sphi 0, %s85
      %s103 = sphi 0, %s103
      %s105 = sphi 0, %s103
      %s106 = sphi 0, %s105
      %s120 = sphi 0, %s106
      %s124 = sphi 0, %s124
      %s126 = sphi 0, %s124
      %s127 = sphi 0, %s126
      %s141 = sphi 0, %s127
      %s145 = sphi 0, %s145
      %s147 = sphi 0, %s145
      %s148 = sphi 0, %s147
      %s162 = sphi 0, %s148
      %s166 = sphi 0, %s166
      %s168 = sphi 0, %s166
      %s169 = sphi 0, %s168
      %s183 = sphi 0, %s169
      %s189 = sphi 0, %s191
      %s192 = sphi 0, %s189
      %s193 = sphi 0, %s192
      %s209 = sphi 0, %s193
    $region4: #{tpu_custom_call.1} parent=1 // loop_header_branch
      %25 = sbr.rel (%p23) target = $region8
    $region5: #{tpu_custom_call.1} parent=1 // loop_body
      %s27 = ssub.s32 %s22, 1
      %s28 = ssub.s32 %s22, 2
      %s29 = sadd.s32 %s22, 1
      %s30 = ssub.s32 %s22, %s29
      %p31 = scmp.eq.s32.totalorder %s30, 0
      %s33 = sadd.s32 %s32, 1
      %s34 = scalar_select %p31, %s32, %s33
      %p37 = pneg %p31
      %p38 = scmp.eq.s32.totalorder %s22, 1
      %p39 = por %p37, %p38
      %p40 = scmp.ne.s32.totalorder %s32, %s35
      %p41 = scmp.eq.s32.totalorder %s22, 0
      %p42 = por %p40, %p41
      %p43 = scmp.ne.s32.totalorder %s32, %s35
      %p44 = scmp.eq.s32.totalorder %s27, 1
      %p45 = por %p43, %p44
      %p46 = scmp.ne.s32.totalorder %s35, %s36
      %p47 = scmp.eq.s32.totalorder %s27, 0
      %p48 = por %p46, %p47
      %p49 = scmp.ne.s32.totalorder %s35, %s36
      %p50 = scmp.eq.s32.totalorder %s28, 1
      %p51 = por %p49, %p50
      %p53 = scmp.ne.s32.totalorder %s36, %s52
      %p54 = scmp.eq.s32.totalorder %s28, 0
      %p55 = por %p53, %p54
      %s56 = ssub.s32 %s22, %s29
      %p57 = scmp.eq.s32.totalorder %s56, 0
      %s59 = sadd.s32 %s58, 1
      %s60 = scalar_select %p57, %s58, %s59
      %p63 = pneg %p57
      %p64 = scmp.eq.s32.totalorder %s22, 1
      %p65 = por %p63, %p64
      %p66 = scmp.ne.s32.totalorder %s58, %s61
      %p67 = scmp.eq.s32.totalorder %s22, 0
      %p68 = por %p66, %p67
      %p69 = scmp.ne.s32.totalorder %s58, %s61
      %p70 = scmp.eq.s32.totalorder %s27, 1
      %p71 = por %p69, %p70
      %p72 = scmp.ne.s32.totalorder %s61, %s62
      %p73 = scmp.eq.s32.totalorder %s27, 0
      %p74 = por %p72, %p73
      %p75 = scmp.ne.s32.totalorder %s61, %s62
      %p76 = scmp.eq.s32.totalorder %s28, 1
      %p77 = por %p75, %p76
      %p79 = scmp.ne.s32.totalorder %s62, %s78
      %p80 = scmp.eq.s32.totalorder %s28, 0
      %p81 = por %p79, %p80
      %s83 = sadd.s32 %s82, 1
      %p86 = scmp.eq.s32.totalorder %s22, 1
      %p87 = scmp.ne.s32.totalorder %s82, %s84
      %p88 = scmp.eq.s32.totalorder %s22, 0
      %p89 = por %p87, %p88
      %p90 = scmp.ne.s32.totalorder %s82, %s84
      %p91 = scmp.eq.s32.totalorder %s27, 1
      %p92 = por %p90, %p91
      %p93 = scmp.ne.s32.totalorder %s84, %s85
      %p94 = scmp.eq.s32.totalorder %s27, 0
      %p95 = por %p93, %p94
      %p96 = scmp.ne.s32.totalorder %s84, %s85
      %p97 = scmp.eq.s32.totalorder %s28, 1
      %p98 = por %p96, %p97
      %p100 = scmp.ne.s32.totalorder %s85, %s99
      %p101 = scmp.eq.s32.totalorder %s28, 0
      %p102 = por %p100, %p101
      %s104 = sadd.s32 %s103, 1
      %p107 = scmp.eq.s32.totalorder %s22, 1
      %p108 = scmp.ne.s32.totalorder %s103, %s105
      %p109 = scmp.eq.s32.totalorder %s22, 0
      %p110 = por %p108, %p109
      %p111 = scmp.ne.s32.totalorder %s103, %s105
      %p112 = scmp.eq.s32.totalorder %s27, 1
      %p113 = por %p111, %p112
      %p114 = scmp.ne.s32.totalorder %s105, %s106
      %p115 = scmp.eq.s32.totalorder %s27, 0
      %p116 = por %p114, %p115
      %p117 = scmp.ne.s32.totalorder %s105, %s106
      %p118 = scmp.eq.s32.totalorder %s28, 1
      %p119 = por %p117, %p118
      %p121 = scmp.ne.s32.totalorder %s106, %s120
      %p122 = scmp.eq.s32.totalorder %s28, 0
      %p123 = por %p121, %p122
      %s125 = sadd.s32 %s124, 1
      %p128 = scmp.eq.s32.totalorder %s22, 1
      %p129 = scmp.ne.s32.totalorder %s124, %s126
      %p130 = scmp.eq.s32.totalorder %s22, 0
      %p131 = por %p129, %p130
      %p132 = scmp.ne.s32.totalorder %s124, %s126
      %p133 = scmp.eq.s32.totalorder %s27, 1
      %p134 = por %p132, %p133
      %p135 = scmp.ne.s32.totalorder %s126, %s127
      %p136 = scmp.eq.s32.totalorder %s27, 0
      %p137 = por %p135, %p136
      %p138 = scmp.ne.s32.totalorder %s126, %s127
      %p139 = scmp.eq.s32.totalorder %s28, 1
      %p140 = por %p138, %p139
      %p142 = scmp.ne.s32.totalorder %s127, %s141
      %p143 = scmp.eq.s32.totalorder %s28, 0
      %p144 = por %p142, %p143
      %s146 = sadd.s32 %s145, 1
      %p149 = scmp.eq.s32.totalorder %s22, 1
      %p150 = scmp.ne.s32.totalorder %s145, %s147
      %p151 = scmp.eq.s32.totalorder %s22, 0
      %p152 = por %p150, %p151
      %p153 = scmp.ne.s32.totalorder %s145, %s147
      %p154 = scmp.eq.s32.totalorder %s27, 1
      %p155 = por %p153, %p154
      %p156 = scmp.ne.s32.totalorder %s147, %s148
      %p157 = scmp.eq.s32.totalorder %s27, 0
      %p158 = por %p156, %p157
      %p159 = scmp.ne.s32.totalorder %s147, %s148
      %p160 = scmp.eq.s32.totalorder %s28, 1
      %p161 = por %p159, %p160
      %p163 = scmp.ne.s32.totalorder %s148, %s162
      %p164 = scmp.eq.s32.totalorder %s28, 0
      %p165 = por %p163, %p164
      %s167 = sadd.s32 %s166, 1
      %p170 = scmp.eq.s32.totalorder %s22, 1
      %p171 = scmp.ne.s32.totalorder %s166, %s168
      %p172 = scmp.eq.s32.totalorder %s22, 0
      %p173 = por %p171, %p172
      %p174 = scmp.ne.s32.totalorder %s166, %s168
      %p175 = scmp.eq.s32.totalorder %s27, 1
      %p176 = por %p174, %p175
      %p177 = scmp.ne.s32.totalorder %s168, %s169
      %p178 = scmp.eq.s32.totalorder %s27, 0
      %p179 = por %p177, %p178
      %p180 = scmp.ne.s32.totalorder %s168, %s169
      %p181 = scmp.eq.s32.totalorder %s28, 1
      %p182 = por %p180, %p181
      %p184 = scmp.ne.s32.totalorder %s169, %s183
      %p185 = scmp.eq.s32.totalorder %s28, 0
      %p186 = por %p184, %p185
      %s187 = ssub.s32 %s22, %s29
      %p188 = scmp.eq.s32.totalorder %s187, 0
      %s190 = sadd.s32 %s189, 1
      %s191 = scalar_select %p188, %s189, %s190
      %p194 = pneg %p188
      %p195 = scmp.eq.s32.totalorder %s22, 1
      %p196 = por %p194, %p195
      %p197 = scmp.ne.s32.totalorder %s189, %s192
      %p198 = scmp.eq.s32.totalorder %s22, 0
      %p199 = por %p197, %p198
      %p200 = scmp.ne.s32.totalorder %s189, %s192
      %p201 = scmp.eq.s32.totalorder %s27, 1
      %p202 = por %p200, %p201
      %p203 = scmp.ne.s32.totalorder %s192, %s193
      %p204 = scmp.eq.s32.totalorder %s27, 0
      %p205 = por %p203, %p204
      %p206 = scmp.ne.s32.totalorder %s192, %s193
      %p207 = scmp.eq.s32.totalorder %s28, 1
      %p208 = por %p206, %p207
      %p210 = scmp.ne.s32.totalorder %s193, %s209
      %p211 = scmp.eq.s32.totalorder %s28, 0
      %p212 = por %p210, %p211
      %p213 = scmp.le.s32.totalorder 1, %s22
      %p214 = scmp.lt.s32.totalorder %s22, 3
      %p215 = pnand %p213, %p214
      %p216 = pneg %p215
      // Predicated region
      $region9: #{tpu_custom_call.1} parent=5 // pred_check
        _
      $region10: #{tpu_custom_call.1} parent=5 // pred_check_branch
        %218 = sbr.rel (%p215) target = $region12
      $region11: #{tpu_custom_call.1} parent=5 // pred_region
        %s219 = ssub.s32 %s22, 1
        // Predicated region
        $region13: #{tpu_custom_call.1} parent=11 // pred_check
          %p220 = pneg %p95
        $region14: #{tpu_custom_call.1} parent=11 // pred_check_branch
          %222 = sbr.rel (%p220) target = $region16
        $region15: #{tpu_custom_call.1} parent=11 // pred_region
          _
        $region16: #{tpu_custom_call.1} parent=11 // pred_fallthru
          _
        // Predicated region
        $region17: #{tpu_custom_call.1} parent=11 // pred_check
          %p223 = pneg %p116
        $region18: #{tpu_custom_call.1} parent=11 // pred_check_branch
          %225 = sbr.rel (%p223) target = $region20
        $region19: #{tpu_custom_call.1} parent=11 // pred_region
          %227 = vsyncadd [#allocation7], 0
          %s228 = sshll.u32 %s3, 4
          %s229 = int_to_ptr.hbm [resolvable:$true] %s228
          %s230 = sshll.u32 [#allocation6], 4
          %s231 = int_to_ptr.vmem [resolvable:$true] %s230
          %236 = dma.hbm_to_vmem [thread:$0]  %s229, 1024, %s231, [#allocation7], 64, 64, 4
        $region20: #{tpu_custom_call.1} parent=11 // pred_fallthru
          _
        // Predicated region
        $region21: #{tpu_custom_call.1} parent=11 // pred_check
          %p237 = pneg %p137
        $region22: #{tpu_custom_call.1} parent=11 // pred_check_branch
          %239 = sbr.rel (%p237) target = $region24
        $region23: #{tpu_custom_call.1} parent=11 // pred_region
          %241 = vsyncadd [#allocation7], 0
          %s243 = sshll.u32 %s4, 4
          %s244 = int_to_ptr.hbm [resolvable:$true] %s243
          %s245 = sshll.u32 [#allocation8], 4
          %s246 = int_to_ptr.vmem [resolvable:$true] %s245
          %248 = dma.hbm_to_vmem [thread:$0]  %s244, 128, %s246, [#allocation7]
        $region24: #{tpu_custom_call.1} parent=11 // pred_fallthru
          _
        // Predicated region
        $region25: #{tpu_custom_call.1} parent=11 // pred_check
          %p249 = pneg %p158
        $region26: #{tpu_custom_call.1} parent=11 // pred_check_branch
          %251 = sbr.rel (%p249) target = $region28
        $region27: #{tpu_custom_call.1} parent=11 // pred_region
          %253 = vsyncadd [#allocation10], 0
          %s255 = sshll.u32 %s5, 4
          %s256 = int_to_ptr.hbm [resolvable:$true] %s255
          %s257 = sshll.u32 [#allocation9], 4
          %s258 = int_to_ptr.vmem [resolvable:$true] %s257
          %260 = dma.hbm_to_vmem [thread:$0]  %s256, 128, %s258, [#allocation10]
        $region28: #{tpu_custom_call.1} parent=11 // pred_fallthru
          _
        // Predicated region
        $region29: #{tpu_custom_call.1} parent=11 // pred_check
          %p261 = pneg %p179
        $region30: #{tpu_custom_call.1} parent=11 // pred_check_branch
          %263 = sbr.rel (%p261) target = $region32
        $region31: #{tpu_custom_call.1} parent=11 // pred_region
          %265 = vsyncadd [#allocation5], 0
          %s267 = sshll.u32 %s6, 4
          %s268 = int_to_ptr.vmem [resolvable:$true] %s267
          %270 = dma.vmem_to_smem %s268, 16, [#allocation11], [#allocation5]
        $region32: #{tpu_custom_call.1} parent=11 // pred_fallthru
          _
      $region12: #{tpu_custom_call.1} parent=5 // pred_fallthru
        _
      %p271 = scmp.lt.s32.totalorder %s22, 2
      // Predicated region
      $region33: #{tpu_custom_call.1} parent=5 // pred_check
        %p272 = pneg %p271
      $region34: #{tpu_custom_call.1} parent=5 // pred_check_branch
        %274 = sbr.rel (%p272) target = $region36
      $region35: #{tpu_custom_call.1} parent=5 // pred_region
        // Predicated region
        $region37: #{tpu_custom_call.1} parent=35 // pred_check
          %p275 = pneg %p42
        $region38: #{tpu_custom_call.1} parent=35 // pred_check_branch
          %277 = sbr.rel (%p275) target = $region40
        $region39: #{tpu_custom_call.1} parent=35 // pred_region
          %s278 = smul.u32 4, %s22
          %p279 = scmp.lt.s32.totalorder %s278, 7
          %s280 = scalar_select %p279, %s278, 7
          %s281 = smul.addr %s280, 4
          %s282 = smul.addr %s281, 4
          %s283 = scalar_lea.vmem %s0, %s282
          %s284 = smul.u32 4, %s22
        $region40: #{tpu_custom_call.1} parent=35 // pred_fallthru
          _
        // Predicated region
        $region41: #{tpu_custom_call.1} parent=35 // pred_check
          %p285 = pneg %p68
        $region42: #{tpu_custom_call.1} parent=35 // pred_check_branch
          %287 = sbr.rel (%p285) target = $region44
        $region43: #{tpu_custom_call.1} parent=35 // pred_region
          %s288 = sand.u32 %s58, 1
          %s289 = scalar_lea.sflag [#allocation3], %s288
          %s290 = sand.u32 %s58, 1
          %s291 = smul.addr %s290, 64
          %s292 = scalar_lea.vmem [#allocation2], %s291
          %s293 = smul.u32 4, %s22
          %295 = vsyncadd %s289, 0
          %s296 = smul.addr %s293, 4
          %s297 = smul.addr %s296, 4
          %s298 = scalar_lea.hbm %s1, %s297
          %s299 = sshll.u32 %s298, 4
          %s300 = int_to_ptr.hbm [resolvable:$true] %s299
          %s301 = sshll.u32 %s292, 4
          %s302 = int_to_ptr.vmem [resolvable:$true] %s301
          %307 = dma.hbm_to_vmem [thread:$0]  %s300, 1024, %s302, %s289, 64, 64, 4
        $region44: #{tpu_custom_call.1} parent=35 // pred_fallthru
          _
      $region36: #{tpu_custom_call.1} parent=5 // pred_fallthru
        _
      %p308 = scmp.le.s32.totalorder 1, %s22
      %p309 = scmp.lt.s32.totalorder %s22, 3
      %p310 = pnand %p308, %p309
      %p311 = pneg %p310
      // Predicated region
      $region45: #{tpu_custom_call.1} parent=5 // pred_check
        _
      $region46: #{tpu_custom_call.1} parent=5 // pred_check_branch
        %313 = sbr.rel (%p310) target = $region48
      $region47: #{tpu_custom_call.1} parent=5 // pred_region
        %s314 = ssub.s32 %s22, 1
        %s315 = sand.u32 %s61, 1
        %s316 = scalar_lea.sflag [#allocation3], %s315
        %s317 = sand.u32 %s61, 1
        %s318 = smul.addr %s317, 64
        %s319 = scalar_lea.vmem [#allocation2], %s318
        // Predicated region
        $region49: #{tpu_custom_call.1} parent=47 // pred_check
          %p320 = pneg %p74
        $region50: #{tpu_custom_call.1} parent=47 // pred_check_branch
          %322 = sbr.rel (%p320) target = $region52
        $region51: #{tpu_custom_call.1} parent=47 // pred_region
          %324 = dma.done %s316, 1024
        $region52: #{tpu_custom_call.1} parent=47 // pred_fallthru
          _
        // Predicated region
        $region53: #{tpu_custom_call.1} parent=47 // pred_check
          %p325 = pneg %p116
        $region54: #{tpu_custom_call.1} parent=47 // pred_check_branch
          %327 = sbr.rel (%p325) target = $region56
        $region55: #{tpu_custom_call.1} parent=47 // pred_region
          %329 = dma.done [#allocation7], 1024
        $region56: #{tpu_custom_call.1} parent=47 // pred_fallthru
          _
        // Predicated region
        $region57: #{tpu_custom_call.1} parent=47 // pred_check
          %p330 = pneg %p137
        $region58: #{tpu_custom_call.1} parent=47 // pred_check_branch
          %332 = sbr.rel (%p330) target = $region60
        $region59: #{tpu_custom_call.1} parent=47 // pred_region
          %334 = dma.done [#allocation7], 128
        $region60: #{tpu_custom_call.1} parent=47 // pred_fallthru
          _
        // Predicated region
        $region61: #{tpu_custom_call.1} parent=47 // pred_check
          %p335 = pneg %p158
        $region62: #{tpu_custom_call.1} parent=47 // pred_check_branch
          %337 = sbr.rel (%p335) target = $region64
        $region63: #{tpu_custom_call.1} parent=47 // pred_region
          %339 = dma.done [#allocation10], 128
        $region64: #{tpu_custom_call.1} parent=47 // pred_fallthru
          _
        // Predicated region
        $region65: #{tpu_custom_call.1} parent=47 // pred_check
          %p340 = pneg %p179
        $region66: #{tpu_custom_call.1} parent=47 // pred_check_branch
          %342 = sbr.rel (%p340) target = $region68
        $region67: #{tpu_custom_call.1} parent=47 // pred_region
          %344 = dma.done [#allocation5], 16
        $region68: #{tpu_custom_call.1} parent=47 // pred_fallthru
          _
        %345 = sfence
        %s346 = smul.u32 4, %s27
        %p347 = scmp.lt.s32.totalorder %s346, 7
        %s348 = scalar_select %p347, %s346, 7
        %s349 = smul.addr %s348, 4
        %s350 = smul.addr %s349, 4
        %s351 = scalar_lea.vmem %s0, %s350
        %p352 = pneg %p48
        %p353 = pneg %p45
        %s354 = sand.u32 %s61, 1
        %s355 = scalar_lea.sflag [#allocation3], %s354
        %s356 = sand.u32 %s61, 1
        %s357 = smul.addr %s356, 64
        %s358 = scalar_lea.vmem [#allocation2], %s357
        %p359 = pneg %p74
        %p360 = pneg %p71
        %p361 = pneg %p95
        %p362 = pneg %p92
        %p363 = pneg %p116
        %p364 = pneg %p113
        %p365 = pneg %p137
        %p366 = pneg %p134
        %p367 = pneg %p158
        %p368 = pneg %p155
        %p369 = pneg %p179
        %p370 = pneg %p176
        %p371 = pneg %p205
        %p372 = pneg %p202
        %s373 = sand.u32 %s192, 1
        %s374 = scalar_lea.sflag [#allocation4], %s373
        %s375 = sand.u32 %s192, 1
        %s376 = smul.addr %s375, 128
        %s377 = scalar_lea.vmem [#allocation12], %s376
        %s378 = smul.u32 4, %s27
        %p379 = scmp.lt.s32.totalorder %s378, 7
        %s380 = scalar_select %p379, %s378, 7
        %s381 = smul.addr %s380, 4
        %s382 = smul.addr %s381, 4
        %s383 = scalar_lea.vmem %s0, %s382
        %s384 = smul.u32 4, %s27
        %s385 = smul.u32 4, %s27
        %s386 = smul.u32 4, %s27
        %v388 = vld [vmem:[%s383] sm:$0xf]
        %v389 = vld [vmem:[%s383 + $0x4] sm:$0xf]
        %v390 = vld [vmem:[%s383 + $0x8] sm:$0xf]
        %v391 = vld [vmem:[%s383 + $0xc] sm:$0xf]
        %v392 = vld [vmem:[%s383 + $0x10] sm:$0xf]
        %v393 = vld [vmem:[%s383 + $0x14] sm:$0xf]
        %v394 = vld [vmem:[%s383 + $0x18] sm:$0xf]
        %v395 = vld [vmem:[%s383 + $0x1c] sm:$0xf]
        %v396 = vld [vmem:[%s383 + $0x20] sm:$0xf]
        %v397 = vld [vmem:[%s383 + $0x24] sm:$0xf]
        %v398 = vld [vmem:[%s383 + $0x28] sm:$0xf]
        %v399 = vld [vmem:[%s383 + $0x2c] sm:$0xf]
        %v400 = vld [vmem:[%s383 + $0x30] sm:$0xf]
        %v401 = vld [vmem:[%s383 + $0x34] sm:$0xf]
        %v402 = vld [vmem:[%s383 + $0x38] sm:$0xf]
        %v403 = vld [vmem:[%s383 + $0x3c] sm:$0xf]
        %v404 = vld [vmem:[%s319] sm:$0xf]
        %v405 = vld [vmem:[%s319 + $0x4] sm:$0xf]
        %v406 = vld [vmem:[%s319 + $0x8] sm:$0xf]
        %v407 = vld [vmem:[%s319 + $0xc] sm:$0xf]
        %v408 = vld [vmem:[%s319 + $0x10] sm:$0xf]
        %v409 = vld [vmem:[%s319 + $0x14] sm:$0xf]
        %v410 = vld [vmem:[%s319 + $0x18] sm:$0xf]
        %v411 = vld [vmem:[%s319 + $0x1c] sm:$0xf]
        %v412 = vld [vmem:[%s319 + $0x20] sm:$0xf]
        %v413 = vld [vmem:[%s319 + $0x24] sm:$0xf]
        %v414 = vld [vmem:[%s319 + $0x28] sm:$0xf]
        %v415 = vld [vmem:[%s319 + $0x2c] sm:$0xf]
        %v416 = vld [vmem:[%s319 + $0x30] sm:$0xf]
        %v417 = vld [vmem:[%s319 + $0x34] sm:$0xf]
        %v418 = vld [vmem:[%s319 + $0x38] sm:$0xf]
        %v419 = vld [vmem:[%s319 + $0x3c] sm:$0xf]
        %v420 = vunpack.c.l.bf16 %v388
        %v421 = vunpack.c.l.bf16 %v389
        %v422 = vunpack.c.l.bf16 %v390
        %v423 = vunpack.c.l.bf16 %v391
        %v424 = vunpack.c.l.bf16 %v392
        %v425 = vunpack.c.l.bf16 %v393
        %v426 = vunpack.c.l.bf16 %v394
        %v427 = vunpack.c.l.bf16 %v395
        %v428 = vunpack.c.l.bf16 %v396
        %v429 = vunpack.c.l.bf16 %v397
        %v430 = vunpack.c.l.bf16 %v398
        %v431 = vunpack.c.l.bf16 %v399
        %v432 = vunpack.c.l.bf16 %v400
        %v433 = vunpack.c.l.bf16 %v401
        %v434 = vunpack.c.l.bf16 %v402
        %v435 = vunpack.c.l.bf16 %v403
        %v436 = vld [vmem:[%s2] sm:$0xf]
        %v437 = vld [vmem:[%s2 + $0x4] sm:$0xf]
        %v438 = vld [vmem:[%s2 + $0x8] sm:$0xf]
        %v439 = vld [vmem:[%s2 + $0xc] sm:$0xf]
        %v456 = vunpack.c.l.b16 %v388
        %v457 = vunpack.c.l.b16 %v389
        %v458 = vunpack.c.l.b16 %v390
        %v459 = vunpack.c.l.b16 %v391
        %v460 = vunpack.c.l.b16 %v392
        %v461 = vunpack.c.l.b16 %v393
        %v462 = vunpack.c.l.b16 %v394
        %v463 = vunpack.c.l.b16 %v395
        %v464 = vunpack.c.l.b16 %v396
        %v465 = vunpack.c.l.b16 %v397
        %v466 = vunpack.c.l.b16 %v398
        %v467 = vunpack.c.l.b16 %v399
        %v468 = vunpack.c.l.b16 %v400
        %v469 = vunpack.c.l.b16 %v401
        %v470 = vunpack.c.l.b16 %v402
        %v471 = vunpack.c.l.b16 %v403
        %v472 = vpack.c.b16 %v457, %v456
        %v473 = vpack.c.b16 %v459, %v458
        %v474 = vpack.c.b16 %v461, %v460
        %v475 = vpack.c.b16 %v463, %v462
        %v476 = vpack.c.b16 %v465, %v464
        %v477 = vpack.c.b16 %v467, %v466
        %v478 = vpack.c.b16 %v469, %v468
        %v479 = vpack.c.b16 %v471, %v470
        %v484 = vunpack.c.l.b16 %v436
        %v485 = vunpack.c.l.b16 %v437
        %v486 = vunpack.c.l.b16 %v438
        %v487 = vunpack.c.l.b16 %v439
        %v488 = vpack.c.b16 %v485, %v484
        %v489 = vpack.c.b16 %v487, %v486
        %vm492 = vcmask 261120
        %v494 = vsel %vm492, %v472, 0
        %v497 = vsel %vm492, %v473, 0
        %v500 = vsel %vm492, %v474, 0
        %v503 = vsel %vm492, %v475, 0
        %v506 = vsel %vm492, %v476, 0
        %v509 = vsel %vm492, %v477, 0
        %v512 = vsel %vm492, %v478, 0
        %v515 = vsel %vm492, %v479, 0
        %517 = vmatpush.bf16.msra.mxu0 0
        %518 = vmatpush.bf16.msra.mxu0 0
        %519 = vmatpush.bf16.msra.mxu0 0
        %520 = vmatpush.bf16.msra.mxu0 0
        %521 = vmatpush.bf16.msra.mxu0 0
        %522 = vmatpush.bf16.msra.mxu0 0
        %523 = vmatpush.bf16.msra.mxu0 %v489
        %524 = vmatpush.bf16.msra.mxu0 %v488
        %525 = vmatmul.bf16.gmra.mxu0 %v494
        %v526 = vpop.f32.mrf.mxu0
        %v527 = vadd.f32 0.0, %v526
        %v528 = vpop.f32.mrf.mxu0
        %v529 = vadd.f32 0.0, %v528
        %530 = vmatmul.bf16.gmra.mxu0 %v497
        %v531 = vpop.f32.mrf.mxu0
        %v532 = vadd.f32 0.0, %v531
        %v533 = vpop.f32.mrf.mxu0
        %v534 = vadd.f32 0.0, %v533
        %535 = vmatmul.bf16.gmra.mxu0 %v500
        %v536 = vpop.f32.mrf.mxu0
        %v537 = vadd.f32 0.0, %v536
        %v538 = vpop.f32.mrf.mxu0
        %v539 = vadd.f32 0.0, %v538
        %540 = vmatmul.bf16.gmra.mxu0 %v503
        %v541 = vpop.f32.mrf.mxu0
        %v542 = vadd.f32 0.0, %v541
        %v543 = vpop.f32.mrf.mxu0
        %v544 = vadd.f32 0.0, %v543
        %545 = vmatmul.bf16.gmra.mxu0 %v506
        %v546 = vpop.f32.mrf.mxu0
        %v547 = vadd.f32 0.0, %v546
        %v548 = vpop.f32.mrf.mxu0
        %v549 = vadd.f32 0.0, %v548
        %550 = vmatmul.bf16.gmra.mxu0 %v509
        %v551 = vpop.f32.mrf.mxu0
        %v552 = vadd.f32 0.0, %v551
        %v553 = vpop.f32.mrf.mxu0
        %v554 = vadd.f32 0.0, %v553
        %555 = vmatmul.bf16.gmra.mxu0 %v512
        %v556 = vpop.f32.mrf.mxu0
        %v557 = vadd.f32 0.0, %v556
        %v558 = vpop.f32.mrf.mxu0
        %v559 = vadd.f32 0.0, %v558
        %560 = vmatmul.bf16.gmra.mxu0 %v515
        %v561 = vpop.f32.mrf.mxu0
        %v562 = vadd.f32 0.0, %v561
        %v563 = vpop.f32.mrf.mxu0
        %v564 = vadd.f32 0.0, %v563
        %565 = vdwg.mxu0
        %v566 = vpack.c.bf16 %v527, %v527
        %v567 = vpack.c.bf16 %v529, %v529
        %v568 = vpack.c.bf16 %v532, %v532
        %v569 = vpack.c.bf16 %v534, %v534
        %v570 = vpack.c.bf16 %v537, %v537
        %v571 = vpack.c.bf16 %v539, %v539
        %v572 = vpack.c.bf16 %v542, %v542
        %v573 = vpack.c.bf16 %v544, %v544
        %v574 = vpack.c.bf16 %v547, %v547
        %v575 = vpack.c.bf16 %v549, %v549
        %v576 = vpack.c.bf16 %v552, %v552
        %v577 = vpack.c.bf16 %v554, %v554
        %v578 = vpack.c.bf16 %v557, %v557
        %v579 = vpack.c.bf16 %v559, %v559
        %v580 = vpack.c.bf16 %v562, %v562
        %v581 = vpack.c.bf16 %v564, %v564
        %v582 = vunpack.c.l.bf16 %v404
        %v583 = vunpack.c.l.bf16 %v405
        %v584 = vunpack.c.l.bf16 %v406
        %v585 = vunpack.c.l.bf16 %v407
        %v586 = vunpack.c.l.bf16 %v408
        %v587 = vunpack.c.l.bf16 %v409
        %v588 = vunpack.c.l.bf16 %v410
        %v589 = vunpack.c.l.bf16 %v411
        %v590 = vunpack.c.l.bf16 %v412
        %v591 = vunpack.c.l.bf16 %v413
        %v592 = vunpack.c.l.bf16 %v414
        %v593 = vunpack.c.l.bf16 %v415
        %v594 = vunpack.c.l.bf16 %v416
        %v595 = vunpack.c.l.bf16 %v417
        %v596 = vunpack.c.l.bf16 %v418
        %v597 = vunpack.c.l.bf16 %v419
        %v598 = vsel %vm492, %v582, 0.0
        %599 = vadd.xlane.f32.xlu0 %v598
        %v600 = vpop.xlane.xlu0 %599
        %v601 = vsel %vm492, %v583, 0.0
        %602 = vadd.xlane.f32.xlu0 %v601
        %v603 = vpop.xlane.xlu0 %602
        %v604 = vsel %vm492, %v584, 0.0
        %605 = vadd.xlane.f32.xlu0 %v604
        %v606 = vpop.xlane.xlu0 %605
        %v607 = vsel %vm492, %v585, 0.0
        %608 = vadd.xlane.f32.xlu0 %v607
        %v609 = vpop.xlane.xlu0 %608
        %v610 = vsel %vm492, %v586, 0.0
        %611 = vadd.xlane.f32.xlu0 %v610
        %v612 = vpop.xlane.xlu0 %611
        %v613 = vsel %vm492, %v587, 0.0
        %614 = vadd.xlane.f32.xlu0 %v613
        %v615 = vpop.xlane.xlu0 %614
        %v616 = vsel %vm492, %v588, 0.0
        %617 = vadd.xlane.f32.xlu0 %v616
        %v618 = vpop.xlane.xlu0 %617
        %v619 = vsel %vm492, %v589, 0.0
        %620 = vadd.xlane.f32.xlu0 %v619
        %v621 = vpop.xlane.xlu0 %620
        %v622 = vsel %vm492, %v590, 0.0
        %623 = vadd.xlane.f32.xlu0 %v622
        %v624 = vpop.xlane.xlu0 %623
        %v625 = vsel %vm492, %v591, 0.0
        %626 = vadd.xlane.f32.xlu0 %v625
        %v627 = vpop.xlane.xlu0 %626
        %v628 = vsel %vm492, %v592, 0.0
        %629 = vadd.xlane.f32.xlu0 %v628
        %v630 = vpop.xlane.xlu0 %629
        %v631 = vsel %vm492, %v593, 0.0
        %632 = vadd.xlane.f32.xlu0 %v631
        %v633 = vpop.xlane.xlu0 %632
        %v634 = vsel %vm492, %v594, 0.0
        %635 = vadd.xlane.f32.xlu0 %v634
        %v636 = vpop.xlane.xlu0 %635
        %v637 = vsel %vm492, %v595, 0.0
        %638 = vadd.xlane.f32.xlu0 %v637
        %v639 = vpop.xlane.xlu0 %638
        %v640 = vsel %vm492, %v596, 0.0
        %641 = vadd.xlane.f32.xlu0 %v640
        %v642 = vpop.xlane.xlu0 %641
        %v643 = vsel %vm492, %v597, 0.0
        %644 = vadd.xlane.f32.xlu0 %v643
        %v645 = vpop.xlane.xlu0 %644
        %v646 = vadd.f32 %v600, 1.0
        %v647 = vadd.f32 %v603, 1.0
        %v648 = vadd.f32 %v606, 1.0
        %v649 = vadd.f32 %v609, 1.0
        %v650 = vadd.f32 %v612, 1.0
        %v651 = vadd.f32 %v615, 1.0
        %v652 = vadd.f32 %v618, 1.0
        %v653 = vadd.f32 %v621, 1.0
        %v654 = vadd.f32 %v624, 1.0
        %v655 = vadd.f32 %v627, 1.0
        %v656 = vadd.f32 %v630, 1.0
        %v657 = vadd.f32 %v633, 1.0
        %v658 = vadd.f32 %v636, 1.0
        %v659 = vadd.f32 %v639, 1.0
        %v660 = vadd.f32 %v642, 1.0
        %v661 = vadd.f32 %v645, 1.0
        %v662 = vrcp.pop %v646
        %v663 = vrcp.pop %v647
        %v664 = vrcp.pop %v648
        %v665 = vrcp.pop %v649
        %v666 = vrcp.pop %v650
        %v667 = vrcp.pop %v651
        %v668 = vrcp.pop %v652
        %v669 = vrcp.pop %v653
        %v670 = vrcp.pop %v654
        %v671 = vrcp.pop %v655
        %v672 = vrcp.pop %v656
        %v673 = vrcp.pop %v657
        %v674 = vrcp.pop %v658
        %v675 = vrcp.pop %v659
        %v676 = vrcp.pop %v660
        %v677 = vrcp.pop %v661
        %v682 = vunpack.c.l.b16 %v404
        %v683 = vunpack.c.l.b16 %v405
        %v684 = vunpack.c.l.b16 %v406
        %v685 = vunpack.c.l.b16 %v407
        %v686 = vpack.c.b16 %v683, %v682
        %v687 = vpack.c.b16 %v685, %v684
        %v692 = vunpack.c.l.b16 %v566
        %v693 = vunpack.c.l.b16 %v567
        %v694 = vunpack.c.l.b16 %v568
        %v695 = vunpack.c.l.b16 %v569
        %v696 = vpack.c.b16 %v693, %v692
        %v697 = vpack.c.b16 %v695, %v694
        %v701 = vsel %vm492, %v686, 0
        %v704 = vsel %vm492, %v687, 0
        %706 = vmatpush.bf16.msra.mxu0 0
        %707 = vmatpush.bf16.msra.mxu0 0
        %708 = vmatpush.bf16.msra.mxu0 0
        %709 = vmatpush.bf16.msra.mxu0 0
        %710 = vmatpush.bf16.msra.mxu0 0
        %711 = vmatpush.bf16.msra.mxu0 0
        %712 = vmatpush.bf16.msra.mxu0 %v697
        %713 = vmatpush.bf16.msra.mxu0 %v696
        %714 = vmatmul.bf16.gmra.mxu0 %v701
        %v715 = vpop.f32.mrf.mxu0
        %v716 = vadd.f32 0.0, %v715
        %v717 = vpop.f32.mrf.mxu0
        %v718 = vadd.f32 0.0, %v717
        %719 = vmatmul.bf16.gmra.mxu0 %v704
        %v720 = vpop.f32.mrf.mxu0
        %v721 = vadd.f32 0.0, %v720
        %v722 = vpop.f32.mrf.mxu0
        %v723 = vadd.f32 0.0, %v722
        %724 = vdwg.mxu0
        %v729 = vunpack.c.l.b16 %v408
        %v730 = vunpack.c.l.b16 %v409
        %v731 = vunpack.c.l.b16 %v410
        %v732 = vunpack.c.l.b16 %v411
        %v733 = vpack.c.b16 %v730, %v729
        %v734 = vpack.c.b16 %v732, %v731
        %v739 = vunpack.c.l.b16 %v570
        %v740 = vunpack.c.l.b16 %v571
        %v741 = vunpack.c.l.b16 %v572
        %v742 = vunpack.c.l.b16 %v573
        %v743 = vpack.c.b16 %v740, %v739
        %v744 = vpack.c.b16 %v742, %v741
        %v748 = vsel %vm492, %v733, 0
        %v751 = vsel %vm492, %v734, 0
        %753 = vmatpush.bf16.msra.mxu0 0
        %754 = vmatpush.bf16.msra.mxu0 0
        %755 = vmatpush.bf16.msra.mxu0 0
        %756 = vmatpush.bf16.msra.mxu0 0
        %757 = vmatpush.bf16.msra.mxu0 0
        %758 = vmatpush.bf16.msra.mxu0 0
        %759 = vmatpush.bf16.msra.mxu0 %v744
        %760 = vmatpush.bf16.msra.mxu0 %v743
        %761 = vmatmul.bf16.gmra.mxu0 %v748
        %v762 = vpop.f32.mrf.mxu0
        %v763 = vadd.f32 0.0, %v762
        %v764 = vpop.f32.mrf.mxu0
        %v765 = vadd.f32 0.0, %v764
        %766 = vmatmul.bf16.gmra.mxu0 %v751
        %v767 = vpop.f32.mrf.mxu0
        %v768 = vadd.f32 0.0, %v767
        %v769 = vpop.f32.mrf.mxu0
        %v770 = vadd.f32 0.0, %v769
        %771 = vdwg.mxu0
        %v776 = vunpack.c.l.b16 %v412
        %v777 = vunpack.c.l.b16 %v413
        %v778 = vunpack.c.l.b16 %v414
        %v779 = vunpack.c.l.b16 %v415
        %v780 = vpack.c.b16 %v777, %v776
        %v781 = vpack.c.b16 %v779, %v778
        %v786 = vunpack.c.l.b16 %v574
        %v787 = vunpack.c.l.b16 %v575
        %v788 = vunpack.c.l.b16 %v576
        %v789 = vunpack.c.l.b16 %v577
        %v790 = vpack.c.b16 %v787, %v786
        %v791 = vpack.c.b16 %v789, %v788
        %v795 = vsel %vm492, %v780, 0
        %v798 = vsel %vm492, %v781, 0
        %800 = vmatpush.bf16.msra.mxu0 0
        %801 = vmatpush.bf16.msra.mxu0 0
        %802 = vmatpush.bf16.msra.mxu0 0
        %803 = vmatpush.bf16.msra.mxu0 0
        %804 = vmatpush.bf16.msra.mxu0 0
        %805 = vmatpush.bf16.msra.mxu0 0
        %806 = vmatpush.bf16.msra.mxu0 %v791
        %807 = vmatpush.bf16.msra.mxu0 %v790
        %808 = vmatmul.bf16.gmra.mxu0 %v795
        %v809 = vpop.f32.mrf.mxu0
        %v810 = vadd.f32 0.0, %v809
        %v811 = vpop.f32.mrf.mxu0
        %v812 = vadd.f32 0.0, %v811
        %813 = vmatmul.bf16.gmra.mxu0 %v798
        %v814 = vpop.f32.mrf.mxu0
        %v815 = vadd.f32 0.0, %v814
        %v816 = vpop.f32.mrf.mxu0
        %v817 = vadd.f32 0.0, %v816
        %818 = vdwg.mxu0
        %v823 = vunpack.c.l.b16 %v416
        %v824 = vunpack.c.l.b16 %v417
        %v825 = vunpack.c.l.b16 %v418
        %v826 = vunpack.c.l.b16 %v419
        %v827 = vpack.c.b16 %v824, %v823
        %v828 = vpack.c.b16 %v826, %v825
        %v833 = vunpack.c.l.b16 %v578
        %v834 = vunpack.c.l.b16 %v579
        %v835 = vunpack.c.l.b16 %v580
        %v836 = vunpack.c.l.b16 %v581
        %v837 = vpack.c.b16 %v834, %v833
        %v838 = vpack.c.b16 %v836, %v835
        %v842 = vsel %vm492, %v827, 0
        %v845 = vsel %vm492, %v828, 0
        %847 = vmatpush.bf16.msra.mxu0 0
        %848 = vmatpush.bf16.msra.mxu0 0
        %849 = vmatpush.bf16.msra.mxu0 0
        %850 = vmatpush.bf16.msra.mxu0 0
        %851 = vmatpush.bf16.msra.mxu0 0
        %852 = vmatpush.bf16.msra.mxu0 0
        %853 = vmatpush.bf16.msra.mxu0 %v838
        %854 = vmatpush.bf16.msra.mxu0 %v837
        %855 = vmatmul.bf16.gmra.mxu0 %v842
        %v856 = vpop.f32.mrf.mxu0
        %v857 = vadd.f32 0.0, %v856
        %v858 = vpop.f32.mrf.mxu0
        %v859 = vadd.f32 0.0, %v858
        %860 = vmatmul.bf16.gmra.mxu0 %v845
        %v861 = vpop.f32.mrf.mxu0
        %v862 = vadd.f32 0.0, %v861
        %v863 = vpop.f32.mrf.mxu0
        %v864 = vadd.f32 0.0, %v863
        %865 = vdwg.mxu0
        %v866 = vmul.f32 %v716, %v662
        %v867 = vmul.f32 %v718, %v663
        %v868 = vmul.f32 %v721, %v664
        %v869 = vmul.f32 %v723, %v665
        %v870 = vmul.f32 %v763, %v666
        %v871 = vmul.f32 %v765, %v667
        %v872 = vmul.f32 %v768, %v668
        %v873 = vmul.f32 %v770, %v669
        %v874 = vmul.f32 %v810, %v670
        %v875 = vmul.f32 %v812, %v671
        %v876 = vmul.f32 %v815, %v672
        %v877 = vmul.f32 %v817, %v673
        %v878 = vmul.f32 %v857, %v674
        %v879 = vmul.f32 %v859, %v675
        %v880 = vmul.f32 %v862, %v676
        %v881 = vmul.f32 %v864, %v677
        %v882 = vld [vmem:[#allocation8] sm:$0x1]
        %v883 = vperm.slane %v882, 0
        %v884 = vadd.f32 %v866, %v883
        %v885 = vadd.f32 %v867, %v883
        %v886 = vadd.f32 %v868, %v883
        %v887 = vadd.f32 %v869, %v883
        %v888 = vadd.f32 %v870, %v883
        %v889 = vadd.f32 %v871, %v883
        %v890 = vadd.f32 %v872, %v883
        %v891 = vadd.f32 %v873, %v883
        %v892 = vadd.f32 %v874, %v883
        %v893 = vadd.f32 %v875, %v883
        %v894 = vadd.f32 %v876, %v883
        %v895 = vadd.f32 %v877, %v883
        %v896 = vadd.f32 %v878, %v883
        %v897 = vadd.f32 %v879, %v883
        %v898 = vadd.f32 %v880, %v883
        %v899 = vadd.f32 %v881, %v883
        %v900 = vmax.f32 %v884, 0.0
        %v901 = vmax.f32 %v885, 0.0
        %v902 = vmax.f32 %v886, 0.0
        %v903 = vmax.f32 %v887, 0.0
        %v904 = vmax.f32 %v888, 0.0
        %v905 = vmax.f32 %v889, 0.0
        %v906 = vmax.f32 %v890, 0.0
        %v907 = vmax.f32 %v891, 0.0
        %v908 = vmax.f32 %v892, 0.0
        %v909 = vmax.f32 %v893, 0.0
        %v910 = vmax.f32 %v894, 0.0
        %v911 = vmax.f32 %v895, 0.0
        %v912 = vmax.f32 %v896, 0.0
        %v913 = vmax.f32 %v897, 0.0
        %v914 = vmax.f32 %v898, 0.0
        %v915 = vmax.f32 %v899, 0.0
        %v916 = vld [vmem:[#allocation6] sm:$0xf]
        %v917 = vld [vmem:[#allocation6 + $0x4] sm:$0xf]
        %v918 = vld [vmem:[#allocation6 + $0x8] sm:$0xf]
        %v919 = vld [vmem:[#allocation6 + $0xc] sm:$0xf]
        %v920 = vunpack.c.l.bf16 %v916
        %v921 = vunpack.c.l.bf16 %v917
        %v922 = vunpack.c.l.bf16 %v918
        %v923 = vunpack.c.l.bf16 %v919
        %s924 = scalar_lea.vmem [#allocation6], 16
        %v925 = vld [vmem:[%s924] sm:$0xf]
        %v926 = vld [vmem:[%s924 + $0x4] sm:$0xf]
        %v927 = vld [vmem:[%s924 + $0x8] sm:$0xf]
        %v928 = vld [vmem:[%s924 + $0xc] sm:$0xf]
        %v929 = vunpack.c.l.bf16 %v925
        %v930 = vunpack.c.l.bf16 %v926
        %v931 = vunpack.c.l.bf16 %v927
        %v932 = vunpack.c.l.bf16 %v928
        %v933 = vsel %vm492, %v420, 0.0
        %934 = vadd.xlane.f32.xlu0 %v933
        %v935 = vpop.xlane.xlu0 %934
        %v936 = vsel %vm492, %v421, 0.0
        %937 = vadd.xlane.f32.xlu0 %v936
        %v938 = vpop.xlane.xlu0 %937
        %v939 = vsel %vm492, %v422, 0.0
        %940 = vadd.xlane.f32.xlu0 %v939
        %v941 = vpop.xlane.xlu0 %940
        %v942 = vsel %vm492, %v423, 0.0
        %943 = vadd.xlane.f32.xlu0 %v942
        %v944 = vpop.xlane.xlu0 %943
        %v945 = vsel %vm492, %v424, 0.0
        %946 = vadd.xlane.f32.xlu0 %v945
        %v947 = vpop.xlane.xlu0 %946
        %v948 = vsel %vm492, %v425, 0.0
        %949 = vadd.xlane.f32.xlu0 %v948
        %v950 = vpop.xlane.xlu0 %949
        %v951 = vsel %vm492, %v426, 0.0
        %952 = vadd.xlane.f32.xlu0 %v951
        %v953 = vpop.xlane.xlu0 %952
        %v954 = vsel %vm492, %v427, 0.0
        %955 = vadd.xlane.f32.xlu0 %v954
        %v956 = vpop.xlane.xlu0 %955
        %v957 = vsel %vm492, %v428, 0.0
        %958 = vadd.xlane.f32.xlu0 %v957
        %v959 = vpop.xlane.xlu0 %958
        %v960 = vsel %vm492, %v429, 0.0
        %961 = vadd.xlane.f32.xlu0 %v960
        %v962 = vpop.xlane.xlu0 %961
        %v963 = vsel %vm492, %v430, 0.0
        %964 = vadd.xlane.f32.xlu0 %v963
        %v965 = vpop.xlane.xlu0 %964
        %v966 = vsel %vm492, %v431, 0.0
        %967 = vadd.xlane.f32.xlu0 %v966
        %v968 = vpop.xlane.xlu0 %967
        %v969 = vsel %vm492, %v432, 0.0
        %970 = vadd.xlane.f32.xlu0 %v969
        %v971 = vpop.xlane.xlu0 %970
        %v972 = vsel %vm492, %v433, 0.0
        %973 = vadd.xlane.f32.xlu0 %v972
        %v974 = vpop.xlane.xlu0 %973
        %v975 = vsel %vm492, %v434, 0.0
        %976 = vadd.xlane.f32.xlu0 %v975
        %v977 = vpop.xlane.xlu0 %976
        %v978 = vsel %vm492, %v435, 0.0
        %979 = vadd.xlane.f32.xlu0 %v978
        %v980 = vpop.xlane.xlu0 %979
        %v981 = vadd.f32 %v935, %v938
        %v982 = vadd.f32 %v981, %v941
        %v983 = vadd.f32 %v982, %v944
        %v984 = vrot.slane %v983, 4
        %v985 = vadd.f32 %v983, %v984
        %v986 = vrot.slane %v985, 2
        %v987 = vadd.f32 %v985, %v986
        %v988 = vrot.slane %v987, 1
        %v989 = vadd.f32 %v987, %v988
        %v990 = vadd.f32 %v947, %v950
        %v991 = vadd.f32 %v990, %v953
        %v992 = vadd.f32 %v991, %v956
        %v993 = vrot.slane %v992, 4
        %v994 = vadd.f32 %v992, %v993
        %v995 = vrot.slane %v994, 2
        %v996 = vadd.f32 %v994, %v995
        %v997 = vrot.slane %v996, 1
        %v998 = vadd.f32 %v996, %v997
        %v999 = vadd.f32 %v959, %v962
        %v1000 = vadd.f32 %v999, %v965
        %v1001 = vadd.f32 %v1000, %v968
        %v1002 = vrot.slane %v1001, 4
        %v1003 = vadd.f32 %v1001, %v1002
        %v1004 = vrot.slane %v1003, 2
        %v1005 = vadd.f32 %v1003, %v1004
        %v1006 = vrot.slane %v1005, 1
        %v1007 = vadd.f32 %v1005, %v1006
        %v1008 = vadd.f32 %v971, %v974
        %v1009 = vadd.f32 %v1008, %v977
        %v1010 = vadd.f32 %v1009, %v980
        %v1011 = vrot.slane %v1010, 4
        %v1012 = vadd.f32 %v1010, %v1011
        %v1013 = vrot.slane %v1012, 2
        %v1014 = vadd.f32 %v1012, %v1013
        %v1015 = vrot.slane %v1014, 1
        %v1016 = vadd.f32 %v1014, %v1015
        %v1017 = vmul.f32 %v420, %v420
        %v1018 = vmul.f32 %v421, %v421
        %v1019 = vmul.f32 %v422, %v422
        %v1020 = vmul.f32 %v423, %v423
        %v1021 = vmul.f32 %v424, %v424
        %v1022 = vmul.f32 %v425, %v425
        %v1023 = vmul.f32 %v426, %v426
        %v1024 = vmul.f32 %v427, %v427
        %v1025 = vmul.f32 %v428, %v428
        %v1026 = vmul.f32 %v429, %v429
        %v1027 = vmul.f32 %v430, %v430
        %v1028 = vmul.f32 %v431, %v431
        %v1029 = vmul.f32 %v432, %v432
        %v1030 = vmul.f32 %v433, %v433
        %v1031 = vmul.f32 %v434, %v434
        %v1032 = vmul.f32 %v435, %v435
        %v1033 = vsel %vm492, %v1017, 0.0
        %1034 = vadd.xlane.f32.xlu0 %v1033
        %v1035 = vpop.xlane.xlu0 %1034
        %v1036 = vsel %vm492, %v1018, 0.0
        %1037 = vadd.xlane.f32.xlu0 %v1036
        %v1038 = vpop.xlane.xlu0 %1037
        %v1039 = vsel %vm492, %v1019, 0.0
        %1040 = vadd.xlane.f32.xlu0 %v1039
        %v1041 = vpop.xlane.xlu0 %1040
        %v1042 = vsel %vm492, %v1020, 0.0
        %1043 = vadd.xlane.f32.xlu0 %v1042
        %v1044 = vpop.xlane.xlu0 %1043
        %v1045 = vsel %vm492, %v1021, 0.0
        %1046 = vadd.xlane.f32.xlu0 %v1045
        %v1047 = vpop.xlane.xlu0 %1046
        %v1048 = vsel %vm492, %v1022, 0.0
        %1049 = vadd.xlane.f32.xlu0 %v1048
        %v1050 = vpop.xlane.xlu0 %1049
        %v1051 = vsel %vm492, %v1023, 0.0
        %1052 = vadd.xlane.f32.xlu0 %v1051
        %v1053 = vpop.xlane.xlu0 %1052
        %v1054 = vsel %vm492, %v1024, 0.0
        %1055 = vadd.xlane.f32.xlu0 %v1054
        %v1056 = vpop.xlane.xlu0 %1055
        %v1057 = vsel %vm492, %v1025, 0.0
        %1058 = vadd.xlane.f32.xlu0 %v1057
        %v1059 = vpop.xlane.xlu0 %1058
        %v1060 = vsel %vm492, %v1026, 0.0
        %1061 = vadd.xlane.f32.xlu0 %v1060
        %v1062 = vpop.xlane.xlu0 %1061
        %v1063 = vsel %vm492, %v1027, 0.0
        %1064 = vadd.xlane.f32.xlu0 %v1063
        %v1065 = vpop.xlane.xlu0 %1064
        %v1066 = vsel %vm492, %v1028, 0.0
        %1067 = vadd.xlane.f32.xlu0 %v1066
        %v1068 = vpop.xlane.xlu0 %1067
        %v1069 = vsel %vm492, %v1029, 0.0
        %1070 = vadd.xlane.f32.xlu0 %v1069
        %v1071 = vpop.xlane.xlu0 %1070
        %v1072 = vsel %vm492, %v1030, 0.0
        %1073 = vadd.xlane.f32.xlu0 %v1072
        %v1074 = vpop.xlane.xlu0 %1073
        %v1075 = vsel %vm492, %v1031, 0.0
        %1076 = vadd.xlane.f32.xlu0 %v1075
        %v1077 = vpop.xlane.xlu0 %1076
        %v1078 = vsel %vm492, %v1032, 0.0
        %1079 = vadd.xlane.f32.xlu0 %v1078
        %v1080 = vpop.xlane.xlu0 %1079
        %v1081 = vadd.f32 %v1035, %v1038
        %v1082 = vadd.f32 %v1081, %v1041
        %v1083 = vadd.f32 %v1082, %v1044
        %v1084 = vrot.slane %v1083, 4
        %v1085 = vadd.f32 %v1083, %v1084
        %v1086 = vrot.slane %v1085, 2
        %v1087 = vadd.f32 %v1085, %v1086
        %v1088 = vrot.slane %v1087, 1
        %v1089 = vadd.f32 %v1087, %v1088
        %v1090 = vadd.f32 %v1047, %v1050
        %v1091 = vadd.f32 %v1090, %v1053
        %v1092 = vadd.f32 %v1091, %v1056
        %v1093 = vrot.slane %v1092, 4
        %v1094 = vadd.f32 %v1092, %v1093
        %v1095 = vrot.slane %v1094, 2
        %v1096 = vadd.f32 %v1094, %v1095
        %v1097 = vrot.slane %v1096, 1
        %v1098 = vadd.f32 %v1096, %v1097
        %v1099 = vadd.f32 %v1059, %v1062
        %v1100 = vadd.f32 %v1099, %v1065
        %v1101 = vadd.f32 %v1100, %v1068
        %v1102 = vrot.slane %v1101, 4
        %v1103 = vadd.f32 %v1101, %v1102
        %v1104 = vrot.slane %v1103, 2
        %v1105 = vadd.f32 %v1103, %v1104
        %v1106 = vrot.slane %v1105, 1
        %v1107 = vadd.f32 %v1105, %v1106
        %v1108 = vadd.f32 %v1071, %v1074
        %v1109 = vadd.f32 %v1108, %v1077
        %v1110 = vadd.f32 %v1109, %v1080
        %v1111 = vrot.slane %v1110, 4
        %v1112 = vadd.f32 %v1110, %v1111
        %v1113 = vrot.slane %v1112, 2
        %v1114 = vadd.f32 %v1112, %v1113
        %v1115 = vrot.slane %v1114, 1
        %v1116 = vadd.f32 %v1114, %v1115
        %v1117 = vmul.f32 %v989, 0.0009765625
        %v1118 = vmul.f32 %v998, 0.0009765625
        %v1119 = vmul.f32 %v1007, 0.0009765625
        %v1120 = vmul.f32 %v1016, 0.0009765625
        %v1121 = vmul.f32 %v1089, 0.0009765625
        %v1122 = vmul.f32 %v1098, 0.0009765625
        %v1123 = vmul.f32 %v1107, 0.0009765625
        %v1124 = vmul.f32 %v1116, 0.0009765625
        %v1125 = vmul.f32 %v1117, %v1117
        %v1126 = vmul.f32 %v1118, %v1118
        %v1127 = vmul.f32 %v1119, %v1119
        %v1128 = vmul.f32 %v1120, %v1120
        %v1129 = vsub.f32 %v1121, %v1125
        %v1130 = vsub.f32 %v1122, %v1126
        %v1131 = vsub.f32 %v1123, %v1127
        %v1132 = vsub.f32 %v1124, %v1128
        %v1133 = vsub.f32 %v420, %v1117
        %v1134 = vsub.f32 %v421, %v1117
        %v1135 = vsub.f32 %v422, %v1117
        %v1136 = vsub.f32 %v423, %v1117
        %v1137 = vsub.f32 %v424, %v1118
        %v1138 = vsub.f32 %v425, %v1118
        %v1139 = vsub.f32 %v426, %v1118
        %v1140 = vsub.f32 %v427, %v1118
        %v1141 = vsub.f32 %v428, %v1119
        %v1142 = vsub.f32 %v429, %v1119
        %v1143 = vsub.f32 %v430, %v1119
        %v1144 = vsub.f32 %v431, %v1119
        %v1145 = vsub.f32 %v432, %v1120
        %v1146 = vsub.f32 %v433, %v1120
        %v1147 = vsub.f32 %v434, %v1120
        %v1148 = vsub.f32 %v435, %v1120
        %v1149 = vadd.f32 %v1129, 1e-05
        %v1150 = vadd.f32 %v1130, 1e-05
        %v1151 = vadd.f32 %v1131, 1e-05
        %v1152 = vadd.f32 %v1132, 1e-05
        %v1153 = vrsqrt.pop %v1149
        %v1154 = vmul.f32 %v1153, %v1149
        %v1155 = vmul.f32 %v1154, %v1153
        %v1156 = vmul.f32 0.5, %v1155
        %v1157 = vsub.f32 1.5, %v1156
        %v1158 = vmul.f32 %v1153, %v1157
        %vm1159 = vweird.f32 %v1149
        %vm1160 = vweird.f32 %v1153
        %vm1161 = vmor %vm1159, %vm1160
        %v1162 = vsel %vm1161, %v1153, %v1158
        %v1163 = vrsqrt.pop %v1150
        %v1164 = vmul.f32 %v1163, %v1150
        %v1165 = vmul.f32 %v1164, %v1163
        %v1166 = vmul.f32 0.5, %v1165
        %v1167 = vsub.f32 1.5, %v1166
        %v1168 = vmul.f32 %v1163, %v1167
        %vm1169 = vweird.f32 %v1150
        %vm1170 = vweird.f32 %v1163
        %vm1171 = vmor %vm1169, %vm1170
        %v1172 = vsel %vm1171, %v1163, %v1168
        %v1173 = vrsqrt.pop %v1151
        %v1174 = vmul.f32 %v1173, %v1151
        %v1175 = vmul.f32 %v1174, %v1173
        %v1176 = vmul.f32 0.5, %v1175
        %v1177 = vsub.f32 1.5, %v1176
        %v1178 = vmul.f32 %v1173, %v1177
        %vm1179 = vweird.f32 %v1151
        %vm1180 = vweird.f32 %v1173
        %vm1181 = vmor %vm1179, %vm1180
        %v1182 = vsel %vm1181, %v1173, %v1178
        %v1183 = vrsqrt.pop %v1152
        %v1184 = vmul.f32 %v1183, %v1152
        %v1185 = vmul.f32 %v1184, %v1183
        %v1186 = vmul.f32 0.5, %v1185
        %v1187 = vsub.f32 1.5, %v1186
        %v1188 = vmul.f32 %v1183, %v1187
        %vm1189 = vweird.f32 %v1152
        %vm1190 = vweird.f32 %v1183
        %vm1191 = vmor %vm1189, %vm1190
        %v1192 = vsel %vm1191, %v1183, %v1188
        %v1193 = vmul.f32 %v1133, %v1162
        %v1194 = vmul.f32 %v1134, %v1162
        %v1195 = vmul.f32 %v1135, %v1162
        %v1196 = vmul.f32 %v1136, %v1162
        %v1197 = vmul.f32 %v1137, %v1172
        %v1198 = vmul.f32 %v1138, %v1172
        %v1199 = vmul.f32 %v1139, %v1172
        %v1200 = vmul.f32 %v1140, %v1172
        %v1201 = vmul.f32 %v1141, %v1182
        %v1202 = vmul.f32 %v1142, %v1182
        %v1203 = vmul.f32 %v1143, %v1182
        %v1204 = vmul.f32 %v1144, %v1182
        %v1205 = vmul.f32 %v1145, %v1192
        %v1206 = vmul.f32 %v1146, %v1192
        %v1207 = vmul.f32 %v1147, %v1192
        %v1208 = vmul.f32 %v1148, %v1192
        %v1209 = vmul.f32 %v1193, %v920
        %v1210 = vmul.f32 %v1194, %v921
        %v1211 = vmul.f32 %v1195, %v922
        %v1212 = vmul.f32 %v1196, %v923
        %v1213 = vmul.f32 %v1197, %v920
        %v1214 = vmul.f32 %v1198, %v921
        %v1215 = vmul.f32 %v1199, %v922
        %v1216 = vmul.f32 %v1200, %v923
        %v1217 = vmul.f32 %v1201, %v920
        %v1218 = vmul.f32 %v1202, %v921
        %v1219 = vmul.f32 %v1203, %v922
        %v1220 = vmul.f32 %v1204, %v923
        %v1221 = vmul.f32 %v1205, %v920
        %v1222 = vmul.f32 %v1206, %v921
        %v1223 = vmul.f32 %v1207, %v922
        %v1224 = vmul.f32 %v1208, %v923
        %v1225 = vadd.f32 %v1209, %v929
        %v1226 = vadd.f32 %v1210, %v930
        %v1227 = vadd.f32 %v1211, %v931
        %v1228 = vadd.f32 %v1212, %v932
        %v1229 = vadd.f32 %v1213, %v929
        %v1230 = vadd.f32 %v1214, %v930
        %v1231 = vadd.f32 %v1215, %v931
        %v1232 = vadd.f32 %v1216, %v932
        %v1233 = vadd.f32 %v1217, %v929
        %v1234 = vadd.f32 %v1218, %v930
        %v1235 = vadd.f32 %v1219, %v931
        %v1236 = vadd.f32 %v1220, %v932
        %v1237 = vadd.f32 %v1221, %v929
        %v1238 = vadd.f32 %v1222, %v930
        %v1239 = vadd.f32 %v1223, %v931
        %v1240 = vadd.f32 %v1224, %v932
        %s1241 = scalar_lea.vmem [#allocation6], 32
        %v1242 = vld [vmem:[%s1241] sm:$0xf]
        %v1243 = vld [vmem:[%s1241 + $0x4] sm:$0xf]
        %v1244 = vld [vmem:[%s1241 + $0x8] sm:$0xf]
        %v1245 = vld [vmem:[%s1241 + $0xc] sm:$0xf]
        %v1246 = vunpack.c.l.bf16 %v1242
        %v1247 = vunpack.c.l.bf16 %v1243
        %v1248 = vunpack.c.l.bf16 %v1244
        %v1249 = vunpack.c.l.bf16 %v1245
        %s1250 = scalar_lea.vmem [#allocation6], 48
        %v1251 = vld [vmem:[%s1250] sm:$0xf]
        %v1252 = vld [vmem:[%s1250 + $0x4] sm:$0xf]
        %v1253 = vld [vmem:[%s1250 + $0x8] sm:$0xf]
        %v1254 = vld [vmem:[%s1250 + $0xc] sm:$0xf]
        %v1255 = vunpack.c.l.bf16 %v1251
        %v1256 = vunpack.c.l.bf16 %v1252
        %v1257 = vunpack.c.l.bf16 %v1253
        %v1258 = vunpack.c.l.bf16 %v1254
        %v1259 = vsel %vm492, %v900, 0.0
        %1260 = vadd.xlane.f32.xlu0 %v1259
        %v1261 = vpop.xlane.xlu0 %1260
        %v1262 = vsel %vm492, %v901, 0.0
        %1263 = vadd.xlane.f32.xlu0 %v1262
        %v1264 = vpop.xlane.xlu0 %1263
        %v1265 = vsel %vm492, %v902, 0.0
        %1266 = vadd.xlane.f32.xlu0 %v1265
        %v1267 = vpop.xlane.xlu0 %1266
        %v1268 = vsel %vm492, %v903, 0.0
        %1269 = vadd.xlane.f32.xlu0 %v1268
        %v1270 = vpop.xlane.xlu0 %1269
        %v1271 = vsel %vm492, %v904, 0.0
        %1272 = vadd.xlane.f32.xlu0 %v1271
        %v1273 = vpop.xlane.xlu0 %1272
        %v1274 = vsel %vm492, %v905, 0.0
        %1275 = vadd.xlane.f32.xlu0 %v1274
        %v1276 = vpop.xlane.xlu0 %1275
        %v1277 = vsel %vm492, %v906, 0.0
        %1278 = vadd.xlane.f32.xlu0 %v1277
        %v1279 = vpop.xlane.xlu0 %1278
        %v1280 = vsel %vm492, %v907, 0.0
        %1281 = vadd.xlane.f32.xlu0 %v1280
        %v1282 = vpop.xlane.xlu0 %1281
        %v1283 = vsel %vm492, %v908, 0.0
        %1284 = vadd.xlane.f32.xlu0 %v1283
        %v1285 = vpop.xlane.xlu0 %1284
        %v1286 = vsel %vm492, %v909, 0.0
        %1287 = vadd.xlane.f32.xlu0 %v1286
        %v1288 = vpop.xlane.xlu0 %1287
        %v1289 = vsel %vm492, %v910, 0.0
        %1290 = vadd.xlane.f32.xlu0 %v1289
        %v1291 = vpop.xlane.xlu0 %1290
        %v1292 = vsel %vm492, %v911, 0.0
        %1293 = vadd.xlane.f32.xlu0 %v1292
        %v1294 = vpop.xlane.xlu0 %1293
        %v1295 = vsel %vm492, %v912, 0.0
        %1296 = vadd.xlane.f32.xlu0 %v1295
        %v1297 = vpop.xlane.xlu0 %1296
        %v1298 = vsel %vm492, %v913, 0.0
        %1299 = vadd.xlane.f32.xlu0 %v1298
        %v1300 = vpop.xlane.xlu0 %1299
        %v1301 = vsel %vm492, %v914, 0.0
        %1302 = vadd.xlane.f32.xlu0 %v1301
        %v1303 = vpop.xlane.xlu0 %1302
        %v1304 = vsel %vm492, %v915, 0.0
        %1305 = vadd.xlane.f32.xlu0 %v1304
        %v1306 = vpop.xlane.xlu0 %1305
        %v1307 = vadd.f32 %v1261, %v1264
        %v1308 = vadd.f32 %v1307, %v1267
        %v1309 = vadd.f32 %v1308, %v1270
        %v1310 = vrot.slane %v1309, 4
        %v1311 = vadd.f32 %v1309, %v1310
        %v1312 = vrot.slane %v1311, 2
        %v1313 = vadd.f32 %v1311, %v1312
        %v1314 = vrot.slane %v1313, 1
        %v1315 = vadd.f32 %v1313, %v1314
        %v1316 = vadd.f32 %v1273, %v1276
        %v1317 = vadd.f32 %v1316, %v1279
        %v1318 = vadd.f32 %v1317, %v1282
        %v1319 = vrot.slane %v1318, 4
        %v1320 = vadd.f32 %v1318, %v1319
        %v1321 = vrot.slane %v1320, 2
        %v1322 = vadd.f32 %v1320, %v1321
        %v1323 = vrot.slane %v1322, 1
        %v1324 = vadd.f32 %v1322, %v1323
        %v1325 = vadd.f32 %v1285, %v1288
        %v1326 = vadd.f32 %v1325, %v1291
        %v1327 = vadd.f32 %v1326, %v1294
        %v1328 = vrot.slane %v1327, 4
        %v1329 = vadd.f32 %v1327, %v1328
        %v1330 = vrot.slane %v1329, 2
        %v1331 = vadd.f32 %v1329, %v1330
        %v1332 = vrot.slane %v1331, 1
        %v1333 = vadd.f32 %v1331, %v1332
        %v1334 = vadd.f32 %v1297, %v1300
        %v1335 = vadd.f32 %v1334, %v1303
        %v1336 = vadd.f32 %v1335, %v1306
        %v1337 = vrot.slane %v1336, 4
        %v1338 = vadd.f32 %v1336, %v1337
        %v1339 = vrot.slane %v1338, 2
        %v1340 = vadd.f32 %v1338, %v1339
        %v1341 = vrot.slane %v1340, 1
        %v1342 = vadd.f32 %v1340, %v1341
        %v1343 = vmul.f32 %v900, %v900
        %v1344 = vmul.f32 %v901, %v901
        %v1345 = vmul.f32 %v902, %v902
        %v1346 = vmul.f32 %v903, %v903
        %v1347 = vmul.f32 %v904, %v904
        %v1348 = vmul.f32 %v905, %v905
        %v1349 = vmul.f32 %v906, %v906
        %v1350 = vmul.f32 %v907, %v907
        %v1351 = vmul.f32 %v908, %v908
        %v1352 = vmul.f32 %v909, %v909
        %v1353 = vmul.f32 %v910, %v910
        %v1354 = vmul.f32 %v911, %v911
        %v1355 = vmul.f32 %v912, %v912
        %v1356 = vmul.f32 %v913, %v913
        %v1357 = vmul.f32 %v914, %v914
        %v1358 = vmul.f32 %v915, %v915
        %v1359 = vsel %vm492, %v1343, 0.0
        %1360 = vadd.xlane.f32.xlu0 %v1359
        %v1361 = vpop.xlane.xlu0 %1360
        %v1362 = vsel %vm492, %v1344, 0.0
        %1363 = vadd.xlane.f32.xlu0 %v1362
        %v1364 = vpop.xlane.xlu0 %1363
        %v1365 = vsel %vm492, %v1345, 0.0
        %1366 = vadd.xlane.f32.xlu0 %v1365
        %v1367 = vpop.xlane.xlu0 %1366
        %v1368 = vsel %vm492, %v1346, 0.0
        %1369 = vadd.xlane.f32.xlu0 %v1368
        %v1370 = vpop.xlane.xlu0 %1369
        %v1371 = vsel %vm492, %v1347, 0.0
        %1372 = vadd.xlane.f32.xlu0 %v1371
        %v1373 = vpop.xlane.xlu0 %1372
        %v1374 = vsel %vm492, %v1348, 0.0
        %1375 = vadd.xlane.f32.xlu0 %v1374
        %v1376 = vpop.xlane.xlu0 %1375
        %v1377 = vsel %vm492, %v1349, 0.0
        %1378 = vadd.xlane.f32.xlu0 %v1377
        %v1379 = vpop.xlane.xlu0 %1378
        %v1380 = vsel %vm492, %v1350, 0.0
        %1381 = vadd.xlane.f32.xlu0 %v1380
        %v1382 = vpop.xlane.xlu0 %1381
        %v1383 = vsel %vm492, %v1351, 0.0
        %1384 = vadd.xlane.f32.xlu0 %v1383
        %v1385 = vpop.xlane.xlu0 %1384
        %v1386 = vsel %vm492, %v1352, 0.0
        %1387 = vadd.xlane.f32.xlu0 %v1386
        %v1388 = vpop.xlane.xlu0 %1387
        %v1389 = vsel %vm492, %v1353, 0.0
        %1390 = vadd.xlane.f32.xlu0 %v1389
        %v1391 = vpop.xlane.xlu0 %1390
        %v1392 = vsel %vm492, %v1354, 0.0
        %1393 = vadd.xlane.f32.xlu0 %v1392
        %v1394 = vpop.xlane.xlu0 %1393
        %v1395 = vsel %vm492, %v1355, 0.0
        %1396 = vadd.xlane.f32.xlu0 %v1395
        %v1397 = vpop.xlane.xlu0 %1396
        %v1398 = vsel %vm492, %v1356, 0.0
        %1399 = vadd.xlane.f32.xlu0 %v1398
        %v1400 = vpop.xlane.xlu0 %1399
        %v1401 = vsel %vm492, %v1357, 0.0
        %1402 = vadd.xlane.f32.xlu0 %v1401
        %v1403 = vpop.xlane.xlu0 %1402
        %v1404 = vsel %vm492, %v1358, 0.0
        %1405 = vadd.xlane.f32.xlu0 %v1404
        %v1406 = vpop.xlane.xlu0 %1405
        %v1407 = vadd.f32 %v1361, %v1364
        %v1408 = vadd.f32 %v1407, %v1367
        %v1409 = vadd.f32 %v1408, %v1370
        %v1410 = vrot.slane %v1409, 4
        %v1411 = vadd.f32 %v1409, %v1410
        %v1412 = vrot.slane %v1411, 2
        %v1413 = vadd.f32 %v1411, %v1412
        %v1414 = vrot.slane %v1413, 1
        %v1415 = vadd.f32 %v1413, %v1414
        %v1416 = vadd.f32 %v1373, %v1376
        %v1417 = vadd.f32 %v1416, %v1379
        %v1418 = vadd.f32 %v1417, %v1382
        %v1419 = vrot.slane %v1418, 4
        %v1420 = vadd.f32 %v1418, %v1419
        %v1421 = vrot.slane %v1420, 2
        %v1422 = vadd.f32 %v1420, %v1421
        %v1423 = vrot.slane %v1422, 1
        %v1424 = vadd.f32 %v1422, %v1423
        %v1425 = vadd.f32 %v1385, %v1388
        %v1426 = vadd.f32 %v1425, %v1391
        %v1427 = vadd.f32 %v1426, %v1394
        %v1428 = vrot.slane %v1427, 4
        %v1429 = vadd.f32 %v1427, %v1428
        %v1430 = vrot.slane %v1429, 2
        %v1431 = vadd.f32 %v1429, %v1430
        %v1432 = vrot.slane %v1431, 1
        %v1433 = vadd.f32 %v1431, %v1432
        %v1434 = vadd.f32 %v1397, %v1400
        %v1435 = vadd.f32 %v1434, %v1403
        %v1436 = vadd.f32 %v1435, %v1406
        %v1437 = vrot.slane %v1436, 4
        %v1438 = vadd.f32 %v1436, %v1437
        %v1439 = vrot.slane %v1438, 2
        %v1440 = vadd.f32 %v1438, %v1439
        %v1441 = vrot.slane %v1440, 1
        %v1442 = vadd.f32 %v1440, %v1441
        %v1443 = vmul.f32 %v1315, 0.0009765625
        %v1444 = vmul.f32 %v1324, 0.0009765625
        %v1445 = vmul.f32 %v1333, 0.0009765625
        %v1446 = vmul.f32 %v1342, 0.0009765625
        %v1447 = vmul.f32 %v1415, 0.0009765625
        %v1448 = vmul.f32 %v1424, 0.0009765625
        %v1449 = vmul.f32 %v1433, 0.0009765625
        %v1450 = vmul.f32 %v1442, 0.0009765625
        %v1451 = vmul.f32 %v1443, %v1443
        %v1452 = vmul.f32 %v1444, %v1444
        %v1453 = vmul.f32 %v1445, %v1445
        %v1454 = vmul.f32 %v1446, %v1446
        %v1455 = vsub.f32 %v1447, %v1451
        %v1456 = vsub.f32 %v1448, %v1452
        %v1457 = vsub.f32 %v1449, %v1453
        %v1458 = vsub.f32 %v1450, %v1454
        %v1459 = vsub.f32 %v900, %v1443
        %v1460 = vsub.f32 %v901, %v1443
        %v1461 = vsub.f32 %v902, %v1443
        %v1462 = vsub.f32 %v903, %v1443
        %v1463 = vsub.f32 %v904, %v1444
        %v1464 = vsub.f32 %v905, %v1444
        %v1465 = vsub.f32 %v906, %v1444
        %v1466 = vsub.f32 %v907, %v1444
        %v1467 = vsub.f32 %v908, %v1445
        %v1468 = vsub.f32 %v909, %v1445
        %v1469 = vsub.f32 %v910, %v1445
        %v1470 = vsub.f32 %v911, %v1445
        %v1471 = vsub.f32 %v912, %v1446
        %v1472 = vsub.f32 %v913, %v1446
        %v1473 = vsub.f32 %v914, %v1446
        %v1474 = vsub.f32 %v915, %v1446
        %v1475 = vadd.f32 %v1455, 1e-05
        %v1476 = vadd.f32 %v1456, 1e-05
        %v1477 = vadd.f32 %v1457, 1e-05
        %v1478 = vadd.f32 %v1458, 1e-05
        %v1479 = vrsqrt.pop %v1475
        %v1480 = vmul.f32 %v1479, %v1475
        %v1481 = vmul.f32 %v1480, %v1479
        %v1482 = vmul.f32 0.5, %v1481
        %v1483 = vsub.f32 1.5, %v1482
        %v1484 = vmul.f32 %v1479, %v1483
        %vm1485 = vweird.f32 %v1475
        %vm1486 = vweird.f32 %v1479
        %vm1487 = vmor %vm1485, %vm1486
        %v1488 = vsel %vm1487, %v1479, %v1484
        %v1489 = vrsqrt.pop %v1476
        %v1490 = vmul.f32 %v1489, %v1476
        %v1491 = vmul.f32 %v1490, %v1489
        %v1492 = vmul.f32 0.5, %v1491
        %v1493 = vsub.f32 1.5, %v1492
        %v1494 = vmul.f32 %v1489, %v1493
        %vm1495 = vweird.f32 %v1476
        %vm1496 = vweird.f32 %v1489
        %vm1497 = vmor %vm1495, %vm1496
        %v1498 = vsel %vm1497, %v1489, %v1494
        %v1499 = vrsqrt.pop %v1477
        %v1500 = vmul.f32 %v1499, %v1477
        %v1501 = vmul.f32 %v1500, %v1499
        %v1502 = vmul.f32 0.5, %v1501
        %v1503 = vsub.f32 1.5, %v1502
        %v1504 = vmul.f32 %v1499, %v1503
        %vm1505 = vweird.f32 %v1477
        %vm1506 = vweird.f32 %v1499
        %vm1507 = vmor %vm1505, %vm1506
        %v1508 = vsel %vm1507, %v1499, %v1504
        %v1509 = vrsqrt.pop %v1478
        %v1510 = vmul.f32 %v1509, %v1478
        %v1511 = vmul.f32 %v1510, %v1509
        %v1512 = vmul.f32 0.5, %v1511
        %v1513 = vsub.f32 1.5, %v1512
        %v1514 = vmul.f32 %v1509, %v1513
        %vm1515 = vweird.f32 %v1478
        %vm1516 = vweird.f32 %v1509
        %vm1517 = vmor %vm1515, %vm1516
        %v1518 = vsel %vm1517, %v1509, %v1514
        %v1519 = vmul.f32 %v1459, %v1488
        %v1520 = vmul.f32 %v1460, %v1488
        %v1521 = vmul.f32 %v1461, %v1488
        %v1522 = vmul.f32 %v1462, %v1488
        %v1523 = vmul.f32 %v1463, %v1498
        %v1524 = vmul.f32 %v1464, %v1498
        %v1525 = vmul.f32 %v1465, %v1498
        %v1526 = vmul.f32 %v1466, %v1498
        %v1527 = vmul.f32 %v1467, %v1508
        %v1528 = vmul.f32 %v1468, %v1508
        %v1529 = vmul.f32 %v1469, %v1508
        %v1530 = vmul.f32 %v1470, %v1508
        %v1531 = vmul.f32 %v1471, %v1518
        %v1532 = vmul.f32 %v1472, %v1518
        %v1533 = vmul.f32 %v1473, %v1518
        %v1534 = vmul.f32 %v1474, %v1518
        %v1535 = vmul.f32 %v1519, %v1246
        %v1536 = vmul.f32 %v1520, %v1247
        %v1537 = vmul.f32 %v1521, %v1248
        %v1538 = vmul.f32 %v1522, %v1249
        %v1539 = vmul.f32 %v1523, %v1246
        %v1540 = vmul.f32 %v1524, %v1247
        %v1541 = vmul.f32 %v1525, %v1248
        %v1542 = vmul.f32 %v1526, %v1249
        %v1543 = vmul.f32 %v1527, %v1246
        %v1544 = vmul.f32 %v1528, %v1247
        %v1545 = vmul.f32 %v1529, %v1248
        %v1546 = vmul.f32 %v1530, %v1249
        %v1547 = vmul.f32 %v1531, %v1246
        %v1548 = vmul.f32 %v1532, %v1247
        %v1549 = vmul.f32 %v1533, %v1248
        %v1550 = vmul.f32 %v1534, %v1249
        %v1551 = vadd.f32 %v1535, %v1255
        %v1552 = vadd.f32 %v1536, %v1256
        %v1553 = vadd.f32 %v1537, %v1257
        %v1554 = vadd.f32 %v1538, %v1258
        %v1555 = vadd.f32 %v1539, %v1255
        %v1556 = vadd.f32 %v1540, %v1256
        %v1557 = vadd.f32 %v1541, %v1257
        %v1558 = vadd.f32 %v1542, %v1258
        %v1559 = vadd.f32 %v1543, %v1255
        %v1560 = vadd.f32 %v1544, %v1256
        %v1561 = vadd.f32 %v1545, %v1257
        %v1562 = vadd.f32 %v1546, %v1258
        %v1563 = vadd.f32 %v1547, %v1255
        %v1564 = vadd.f32 %v1548, %v1256
        %v1565 = vadd.f32 %v1549, %v1257
        %v1566 = vadd.f32 %v1550, %v1258
        %v1567 = vpack.c.bf16 %v1226, %v1225
        %v1568 = vpack.c.bf16 %v1228, %v1227
        %v1569 = vpack.c.bf16 %v1230, %v1229
        %v1570 = vpack.c.bf16 %v1232, %v1231
        %v1571 = vpack.c.bf16 %v1234, %v1233
        %v1572 = vpack.c.bf16 %v1236, %v1235
        %v1573 = vpack.c.bf16 %v1238, %v1237
        %v1574 = vpack.c.bf16 %v1240, %v1239
        %v1575 = vld [vmem:[%s2 + $0x10] sm:$0xf]
        %v1576 = vld [vmem:[%s2 + $0x14] sm:$0xf]
        %v1577 = vld [vmem:[%s2 + $0x18] sm:$0xf]
        %v1578 = vld [vmem:[%s2 + $0x1c] sm:$0xf]
        %v1579 = vpack.c.bf16 %v1552, %v1551
        %v1580 = vpack.c.bf16 %v1554, %v1553
        %v1581 = vpack.c.bf16 %v1556, %v1555
        %v1582 = vpack.c.bf16 %v1558, %v1557
        %v1583 = vpack.c.bf16 %v1560, %v1559
        %v1584 = vpack.c.bf16 %v1562, %v1561
        %v1585 = vpack.c.bf16 %v1564, %v1563
        %v1586 = vpack.c.bf16 %v1566, %v1565
        %v1587 = vld [vmem:[%s2 + $0x20] sm:$0xf]
        %v1588 = vld [vmem:[%s2 + $0x24] sm:$0xf]
        %v1589 = vld [vmem:[%s2 + $0x28] sm:$0xf]
        %v1590 = vld [vmem:[%s2 + $0x2c] sm:$0xf]
        %v1595 = vunpack.c.l.b16 %v1587
        %v1596 = vunpack.c.l.b16 %v1588
        %v1597 = vunpack.c.l.b16 %v1589
        %v1598 = vunpack.c.l.b16 %v1590
        %v1599 = vpack.c.b16 %v1596, %v1595
        %v1600 = vpack.c.b16 %v1598, %v1597
        %v1604 = vsel %vm492, %v1579, 0
        %v1607 = vsel %vm492, %v1580, 0
        %v1610 = vsel %vm492, %v1581, 0
        %v1613 = vsel %vm492, %v1582, 0
        %v1616 = vsel %vm492, %v1583, 0
        %v1619 = vsel %vm492, %v1584, 0
        %v1622 = vsel %vm492, %v1585, 0
        %v1625 = vsel %vm492, %v1586, 0
        %1627 = vmatpush.bf16.msra.mxu0 0
        %1628 = vmatpush.bf16.msra.mxu0 0
        %1629 = vmatpush.bf16.msra.mxu0 0
        %1630 = vmatpush.bf16.msra.mxu0 0
        %1631 = vmatpush.bf16.msra.mxu0 0
        %1632 = vmatpush.bf16.msra.mxu0 0
        %1633 = vmatpush.bf16.msra.mxu0 %v1600
        %1634 = vmatpush.bf16.msra.mxu0 %v1599
        %1635 = vmatmul.bf16.gmra.mxu0 %v1604
        %v1636 = vpop.f32.mrf.mxu0
        %v1637 = vadd.f32 0.0, %v1636
        %v1638 = vpop.f32.mrf.mxu0
        %v1639 = vadd.f32 0.0, %v1638
        %1640 = vmatmul.bf16.gmra.mxu0 %v1607
        %v1641 = vpop.f32.mrf.mxu0
        %v1642 = vadd.f32 0.0, %v1641
        %v1643 = vpop.f32.mrf.mxu0
        %v1644 = vadd.f32 0.0, %v1643
        %1645 = vmatmul.bf16.gmra.mxu0 %v1610
        %v1646 = vpop.f32.mrf.mxu0
        %v1647 = vadd.f32 0.0, %v1646
        %v1648 = vpop.f32.mrf.mxu0
        %v1649 = vadd.f32 0.0, %v1648
        %1650 = vmatmul.bf16.gmra.mxu0 %v1613
        %v1651 = vpop.f32.mrf.mxu0
        %v1652 = vadd.f32 0.0, %v1651
        %v1653 = vpop.f32.mrf.mxu0
        %v1654 = vadd.f32 0.0, %v1653
        %1655 = vmatmul.bf16.gmra.mxu0 %v1616
        %v1656 = vpop.f32.mrf.mxu0
        %v1657 = vadd.f32 0.0, %v1656
        %v1658 = vpop.f32.mrf.mxu0
        %v1659 = vadd.f32 0.0, %v1658
        %1660 = vmatmul.bf16.gmra.mxu0 %v1619
        %v1661 = vpop.f32.mrf.mxu0
        %v1662 = vadd.f32 0.0, %v1661
        %v1663 = vpop.f32.mrf.mxu0
        %v1664 = vadd.f32 0.0, %v1663
        %1665 = vmatmul.bf16.gmra.mxu0 %v1622
        %v1666 = vpop.f32.mrf.mxu0
        %v1667 = vadd.f32 0.0, %v1666
        %v1668 = vpop.f32.mrf.mxu0
        %v1669 = vadd.f32 0.0, %v1668
        %1670 = vmatmul.bf16.gmra.mxu0 %v1625
        %v1671 = vpop.f32.mrf.mxu0
        %v1672 = vadd.f32 0.0, %v1671
        %v1673 = vpop.f32.mrf.mxu0
        %v1674 = vadd.f32 0.0, %v1673
        %1675 = vdwg.mxu0
        %v1680 = vunpack.c.l.b16 %v1575
        %v1681 = vunpack.c.l.b16 %v1576
        %v1682 = vunpack.c.l.b16 %v1577
        %v1683 = vunpack.c.l.b16 %v1578
        %v1684 = vpack.c.b16 %v1681, %v1680
        %v1685 = vpack.c.b16 %v1683, %v1682
        %v1689 = vsel %vm492, %v1567, 0
        %v1692 = vsel %vm492, %v1568, 0
        %v1695 = vsel %vm492, %v1569, 0
        %v1698 = vsel %vm492, %v1570, 0
        %v1701 = vsel %vm492, %v1571, 0
        %v1704 = vsel %vm492, %v1572, 0
        %v1707 = vsel %vm492, %v1573, 0
        %v1710 = vsel %vm492, %v1574, 0
        %1712 = vmatpush.bf16.msra.mxu0 0
        %1713 = vmatpush.bf16.msra.mxu0 0
        %1714 = vmatpush.bf16.msra.mxu0 0
        %1715 = vmatpush.bf16.msra.mxu0 0
        %1716 = vmatpush.bf16.msra.mxu0 0
        %1717 = vmatpush.bf16.msra.mxu0 0
        %1718 = vmatpush.bf16.msra.mxu0 %v1685
        %1719 = vmatpush.bf16.msra.mxu0 %v1684
        %1720 = vmatmul.bf16.gmra.mxu0 %v1689
        %v1721 = vpop.f32.mrf.mxu0
        %v1722 = vadd.f32 %v1637, %v1721
        %v1723 = vpop.f32.mrf.mxu0
        %v1724 = vadd.f32 %v1639, %v1723
        %1725 = vmatmul.bf16.gmra.mxu0 %v1692
        %v1726 = vpop.f32.mrf.mxu0
        %v1727 = vadd.f32 %v1642, %v1726
        %v1728 = vpop.f32.mrf.mxu0
        %v1729 = vadd.f32 %v1644, %v1728
        %1730 = vmatmul.bf16.gmra.mxu0 %v1695
        %v1731 = vpop.f32.mrf.mxu0
        %v1732 = vadd.f32 %v1647, %v1731
        %v1733 = vpop.f32.mrf.mxu0
        %v1734 = vadd.f32 %v1649, %v1733
        %1735 = vmatmul.bf16.gmra.mxu0 %v1698
        %v1736 = vpop.f32.mrf.mxu0
        %v1737 = vadd.f32 %v1652, %v1736
        %v1738 = vpop.f32.mrf.mxu0
        %v1739 = vadd.f32 %v1654, %v1738
        %1740 = vmatmul.bf16.gmra.mxu0 %v1701
        %v1741 = vpop.f32.mrf.mxu0
        %v1742 = vadd.f32 %v1657, %v1741
        %v1743 = vpop.f32.mrf.mxu0
        %v1744 = vadd.f32 %v1659, %v1743
        %1745 = vmatmul.bf16.gmra.mxu0 %v1704
        %v1746 = vpop.f32.mrf.mxu0
        %v1747 = vadd.f32 %v1662, %v1746
        %v1748 = vpop.f32.mrf.mxu0
        %v1749 = vadd.f32 %v1664, %v1748
        %1750 = vmatmul.bf16.gmra.mxu0 %v1707
        %v1751 = vpop.f32.mrf.mxu0
        %v1752 = vadd.f32 %v1667, %v1751
        %v1753 = vpop.f32.mrf.mxu0
        %v1754 = vadd.f32 %v1669, %v1753
        %1755 = vmatmul.bf16.gmra.mxu0 %v1710
        %v1756 = vpop.f32.mrf.mxu0
        %v1757 = vadd.f32 %v1672, %v1756
        %v1758 = vpop.f32.mrf.mxu0
        %v1759 = vadd.f32 %v1674, %v1758
        %1760 = vdwg.mxu0
        %v1761 = vld [vmem:[#allocation8 + $0x1] sm:$0x1]
        %v1762 = vperm.slane %v1761, 0
        %v1763 = vadd.f32 %v1722, %v1762
        %v1764 = vadd.f32 %v1724, %v1762
        %v1765 = vadd.f32 %v1727, %v1762
        %v1766 = vadd.f32 %v1729, %v1762
        %v1767 = vadd.f32 %v1732, %v1762
        %v1768 = vadd.f32 %v1734, %v1762
        %v1769 = vadd.f32 %v1737, %v1762
        %v1770 = vadd.f32 %v1739, %v1762
        %v1771 = vadd.f32 %v1742, %v1762
        %v1772 = vadd.f32 %v1744, %v1762
        %v1773 = vadd.f32 %v1747, %v1762
        %v1774 = vadd.f32 %v1749, %v1762
        %v1775 = vadd.f32 %v1752, %v1762
        %v1776 = vadd.f32 %v1754, %v1762
        %v1777 = vadd.f32 %v1757, %v1762
        %v1778 = vadd.f32 %v1759, %v1762
        %v1779 = vpack.c.bf16 %v1764, %v1763
        %v1780 = vpack.c.bf16 %v1766, %v1765
        %v1781 = vpack.c.bf16 %v1768, %v1767
        %v1782 = vpack.c.bf16 %v1770, %v1769
        %v1783 = vpack.c.bf16 %v1772, %v1771
        %v1784 = vpack.c.bf16 %v1774, %v1773
        %v1785 = vpack.c.bf16 %v1776, %v1775
        %v1786 = vpack.c.bf16 %v1778, %v1777
        %v1787 = vld [vmem:[%s2 + $0x30] sm:$0xf]
        %v1788 = vld [vmem:[%s2 + $0x34] sm:$0xf]
        %v1789 = vld [vmem:[%s2 + $0x38] sm:$0xf]
        %v1790 = vld [vmem:[%s2 + $0x3c] sm:$0xf]
        %v1791 = vld [vmem:[#allocation8 + $0x2] sm:$0x1]
        %v1792 = vperm.slane %v1791, 0
        %v1797 = vunpack.c.l.b16 %v1787
        %v1798 = vunpack.c.l.b16 %v1788
        %v1799 = vunpack.c.l.b16 %v1789
        %v1800 = vunpack.c.l.b16 %v1790
        %v1801 = vpack.c.b16 %v1798, %v1797
        %v1802 = vpack.c.b16 %v1800, %v1799
        %v1806 = vsel %vm492, %v1779, 0
        %v1809 = vsel %vm492, %v1780, 0
        %v1812 = vsel %vm492, %v1781, 0
        %v1815 = vsel %vm492, %v1782, 0
        %v1818 = vsel %vm492, %v1783, 0
        %v1821 = vsel %vm492, %v1784, 0
        %v1824 = vsel %vm492, %v1785, 0
        %v1827 = vsel %vm492, %v1786, 0
        %1829 = vmatpush.bf16.msra.mxu0 0
        %1830 = vmatpush.bf16.msra.mxu0 0
        %1831 = vmatpush.bf16.msra.mxu0 0
        %1832 = vmatpush.bf16.msra.mxu0 0
        %1833 = vmatpush.bf16.msra.mxu0 0
        %1834 = vmatpush.bf16.msra.mxu0 0
        %1835 = vmatpush.bf16.msra.mxu0 %v1802
        %1836 = vmatpush.bf16.msra.mxu0 %v1801
        %1837 = vmatmul.bf16.gmra.mxu0 %v1806
        %v1838 = vpop.f32.mrf.mxu0
        %v1839 = vadd.f32 %v1792, %v1838
        %v1840 = vpop.f32.mrf.mxu0
        %v1841 = vadd.f32 %v1792, %v1840
        %1842 = vmatmul.bf16.gmra.mxu0 %v1809
        %v1843 = vpop.f32.mrf.mxu0
        %v1844 = vadd.f32 %v1792, %v1843
        %v1845 = vpop.f32.mrf.mxu0
        %v1846 = vadd.f32 %v1792, %v1845
        %1847 = vmatmul.bf16.gmra.mxu0 %v1812
        %v1848 = vpop.f32.mrf.mxu0
        %v1849 = vadd.f32 %v1792, %v1848
        %v1850 = vpop.f32.mrf.mxu0
        %v1851 = vadd.f32 %v1792, %v1850
        %1852 = vmatmul.bf16.gmra.mxu0 %v1815
        %v1853 = vpop.f32.mrf.mxu0
        %v1854 = vadd.f32 %v1792, %v1853
        %v1855 = vpop.f32.mrf.mxu0
        %v1856 = vadd.f32 %v1792, %v1855
        %1857 = vmatmul.bf16.gmra.mxu0 %v1818
        %v1858 = vpop.f32.mrf.mxu0
        %v1859 = vadd.f32 %v1792, %v1858
        %v1860 = vpop.f32.mrf.mxu0
        %v1861 = vadd.f32 %v1792, %v1860
        %1862 = vmatmul.bf16.gmra.mxu0 %v1821
        %v1863 = vpop.f32.mrf.mxu0
        %v1864 = vadd.f32 %v1792, %v1863
        %v1865 = vpop.f32.mrf.mxu0
        %v1866 = vadd.f32 %v1792, %v1865
        %1867 = vmatmul.bf16.gmra.mxu0 %v1824
        %v1868 = vpop.f32.mrf.mxu0
        %v1869 = vadd.f32 %v1792, %v1868
        %v1870 = vpop.f32.mrf.mxu0
        %v1871 = vadd.f32 %v1792, %v1870
        %1872 = vmatmul.bf16.gmra.mxu0 %v1827
        %v1873 = vpop.f32.mrf.mxu0
        %v1874 = vadd.f32 %v1792, %v1873
        %v1875 = vpop.f32.mrf.mxu0
        %v1876 = vadd.f32 %v1792, %v1875
        %1877 = vdwg.mxu0
        %vm1878 = vcmp.gt.f32.partialorder %v1839, 0.0
        %vm1879 = vcmp.gt.f32.partialorder %v1841, 0.0
        %vm1880 = vcmp.gt.f32.partialorder %v1844, 0.0
        %vm1881 = vcmp.gt.f32.partialorder %v1846, 0.0
        %vm1882 = vcmp.gt.f32.partialorder %v1849, 0.0
        %vm1883 = vcmp.gt.f32.partialorder %v1851, 0.0
        %vm1884 = vcmp.gt.f32.partialorder %v1854, 0.0
        %vm1885 = vcmp.gt.f32.partialorder %v1856, 0.0
        %vm1886 = vcmp.gt.f32.partialorder %v1859, 0.0
        %vm1887 = vcmp.gt.f32.partialorder %v1861, 0.0
        %vm1888 = vcmp.gt.f32.partialorder %v1864, 0.0
        %vm1889 = vcmp.gt.f32.partialorder %v1866, 0.0
        %vm1890 = vcmp.gt.f32.partialorder %v1869, 0.0
        %vm1891 = vcmp.gt.f32.partialorder %v1871, 0.0
        %vm1892 = vcmp.gt.f32.partialorder %v1874, 0.0
        %vm1893 = vcmp.gt.f32.partialorder %v1876, 0.0
        %v1894 = vmul.f32 %v1839, 0.01
        %v1895 = vmul.f32 %v1841, 0.01
        %v1896 = vmul.f32 %v1844, 0.01
        %v1897 = vmul.f32 %v1846, 0.01
        %v1898 = vmul.f32 %v1849, 0.01
        %v1899 = vmul.f32 %v1851, 0.01
        %v1900 = vmul.f32 %v1854, 0.01
        %v1901 = vmul.f32 %v1856, 0.01
        %v1902 = vmul.f32 %v1859, 0.01
        %v1903 = vmul.f32 %v1861, 0.01
        %v1904 = vmul.f32 %v1864, 0.01
        %v1905 = vmul.f32 %v1866, 0.01
        %v1906 = vmul.f32 %v1869, 0.01
        %v1907 = vmul.f32 %v1871, 0.01
        %v1908 = vmul.f32 %v1874, 0.01
        %v1909 = vmul.f32 %v1876, 0.01
        %v1910 = vsel %vm1878, %v1839, %v1894
        %v1911 = vsel %vm1879, %v1841, %v1895
        %v1912 = vsel %vm1880, %v1844, %v1896
        %v1913 = vsel %vm1881, %v1846, %v1897
        %v1914 = vsel %vm1882, %v1849, %v1898
        %v1915 = vsel %vm1883, %v1851, %v1899
        %v1916 = vsel %vm1884, %v1854, %v1900
        %v1917 = vsel %vm1885, %v1856, %v1901
        %v1918 = vsel %vm1886, %v1859, %v1902
        %v1919 = vsel %vm1887, %v1861, %v1903
        %v1920 = vsel %vm1888, %v1864, %v1904
        %v1921 = vsel %vm1889, %v1866, %v1905
        %v1922 = vsel %vm1890, %v1869, %v1906
        %v1923 = vsel %vm1891, %v1871, %v1907
        %v1924 = vsel %vm1892, %v1874, %v1908
        %v1925 = vsel %vm1893, %v1876, %v1909
        %v1926 = vpack.c.bf16 %v1911, %v1910
        %v1927 = vpack.c.bf16 %v1913, %v1912
        %v1928 = vpack.c.bf16 %v1915, %v1914
        %v1929 = vpack.c.bf16 %v1917, %v1916
        %v1930 = vpack.c.bf16 %v1919, %v1918
        %v1931 = vpack.c.bf16 %v1921, %v1920
        %v1932 = vpack.c.bf16 %v1923, %v1922
        %v1933 = vpack.c.bf16 %v1925, %v1924
        %v1934 = vld [vmem:[%s2 + $0x40] sm:$0xf]
        %v1935 = vld [vmem:[%s2 + $0x44] sm:$0xf]
        %v1936 = vld [vmem:[%s2 + $0x48] sm:$0xf]
        %v1937 = vld [vmem:[%s2 + $0x4c] sm:$0xf]
        %v1938 = vld [vmem:[#allocation8 + $0x3] sm:$0x1]
        %v1939 = vperm.slane %v1938, 0
        %v1944 = vunpack.c.l.b16 %v1934
        %v1945 = vunpack.c.l.b16 %v1935
        %v1946 = vunpack.c.l.b16 %v1936
        %v1947 = vunpack.c.l.b16 %v1937
        %v1948 = vpack.c.b16 %v1945, %v1944
        %v1949 = vpack.c.b16 %v1947, %v1946
        %v1953 = vsel %vm492, %v1926, 0
        %v1956 = vsel %vm492, %v1927, 0
        %v1959 = vsel %vm492, %v1928, 0
        %v1962 = vsel %vm492, %v1929, 0
        %v1965 = vsel %vm492, %v1930, 0
        %v1968 = vsel %vm492, %v1931, 0
        %v1971 = vsel %vm492, %v1932, 0
        %v1974 = vsel %vm492, %v1933, 0
        %1976 = vmatpush.bf16.msra.mxu0 0
        %1977 = vmatpush.bf16.msra.mxu0 0
        %1978 = vmatpush.bf16.msra.mxu0 0
        %1979 = vmatpush.bf16.msra.mxu0 0
        %1980 = vmatpush.bf16.msra.mxu0 0
        %1981 = vmatpush.bf16.msra.mxu0 0
        %1982 = vmatpush.bf16.msra.mxu0 %v1949
        %1983 = vmatpush.bf16.msra.mxu0 %v1948
        %1984 = vmatmul.bf16.gmra.mxu0 %v1953
        %v1985 = vpop.f32.mrf.mxu0
        %v1986 = vadd.f32 %v1939, %v1985
        %v1987 = vpop.f32.mrf.mxu0
        %v1988 = vadd.f32 %v1939, %v1987
        %1989 = vmatmul.bf16.gmra.mxu0 %v1956
        %v1990 = vpop.f32.mrf.mxu0
        %v1991 = vadd.f32 %v1939, %v1990
        %v1992 = vpop.f32.mrf.mxu0
        %v1993 = vadd.f32 %v1939, %v1992
        %1994 = vmatmul.bf16.gmra.mxu0 %v1959
        %v1995 = vpop.f32.mrf.mxu0
        %v1996 = vadd.f32 %v1939, %v1995
        %v1997 = vpop.f32.mrf.mxu0
        %v1998 = vadd.f32 %v1939, %v1997
        %1999 = vmatmul.bf16.gmra.mxu0 %v1962
        %v2000 = vpop.f32.mrf.mxu0
        %v2001 = vadd.f32 %v1939, %v2000
        %v2002 = vpop.f32.mrf.mxu0
        %v2003 = vadd.f32 %v1939, %v2002
        %2004 = vmatmul.bf16.gmra.mxu0 %v1965
        %v2005 = vpop.f32.mrf.mxu0
        %v2006 = vadd.f32 %v1939, %v2005
        %v2007 = vpop.f32.mrf.mxu0
        %v2008 = vadd.f32 %v1939, %v2007
        %2009 = vmatmul.bf16.gmra.mxu0 %v1968
        %v2010 = vpop.f32.mrf.mxu0
        %v2011 = vadd.f32 %v1939, %v2010
        %v2012 = vpop.f32.mrf.mxu0
        %v2013 = vadd.f32 %v1939, %v2012
        %2014 = vmatmul.bf16.gmra.mxu0 %v1971
        %v2015 = vpop.f32.mrf.mxu0
        %v2016 = vadd.f32 %v1939, %v2015
        %v2017 = vpop.f32.mrf.mxu0
        %v2018 = vadd.f32 %v1939, %v2017
        %2019 = vmatmul.bf16.gmra.mxu0 %v1974
        %v2020 = vpop.f32.mrf.mxu0
        %v2021 = vadd.f32 %v1939, %v2020
        %v2022 = vpop.f32.mrf.mxu0
        %v2023 = vadd.f32 %v1939, %v2022
        %2024 = vdwg.mxu0
        %v2025 = vld [vmem:[#allocation9] sm:$0x1]
        %v2026 = vperm.slane %v2025, 0
        %v2027 = vmul.f32 %v1910, %v2026
        %v2028 = vmul.f32 %v1911, %v2026
        %v2029 = vmul.f32 %v1912, %v2026
        %v2030 = vmul.f32 %v1913, %v2026
        %v2031 = vmul.f32 %v1914, %v2026
        %v2032 = vmul.f32 %v1915, %v2026
        %v2033 = vmul.f32 %v1916, %v2026
        %v2034 = vmul.f32 %v1917, %v2026
        %v2035 = vmul.f32 %v1918, %v2026
        %v2036 = vmul.f32 %v1919, %v2026
        %v2037 = vmul.f32 %v1920, %v2026
        %v2038 = vmul.f32 %v1921, %v2026
        %v2039 = vmul.f32 %v1922, %v2026
        %v2040 = vmul.f32 %v1923, %v2026
        %v2041 = vmul.f32 %v1924, %v2026
        %v2042 = vmul.f32 %v1925, %v2026
        %v2043 = vsel %vm492, %v2027, 0.0
        %2044 = vadd.xlane.f32.xlu0 %v2043
        %v2045 = vpop.xlane.xlu0 %2044
        %v2046 = vsel %vm492, %v2028, 0.0
        %2047 = vadd.xlane.f32.xlu0 %v2046
        %v2048 = vpop.xlane.xlu0 %2047
        %v2049 = vsel %vm492, %v2029, 0.0
        %2050 = vadd.xlane.f32.xlu0 %v2049
        %v2051 = vpop.xlane.xlu0 %2050
        %v2052 = vsel %vm492, %v2030, 0.0
        %2053 = vadd.xlane.f32.xlu0 %v2052
        %v2054 = vpop.xlane.xlu0 %2053
        %v2055 = vsel %vm492, %v2031, 0.0
        %2056 = vadd.xlane.f32.xlu0 %v2055
        %v2057 = vpop.xlane.xlu0 %2056
        %v2058 = vsel %vm492, %v2032, 0.0
        %2059 = vadd.xlane.f32.xlu0 %v2058
        %v2060 = vpop.xlane.xlu0 %2059
        %v2061 = vsel %vm492, %v2033, 0.0
        %2062 = vadd.xlane.f32.xlu0 %v2061
        %v2063 = vpop.xlane.xlu0 %2062
        %v2064 = vsel %vm492, %v2034, 0.0
        %2065 = vadd.xlane.f32.xlu0 %v2064
        %v2066 = vpop.xlane.xlu0 %2065
        %v2067 = vsel %vm492, %v2035, 0.0
        %2068 = vadd.xlane.f32.xlu0 %v2067
        %v2069 = vpop.xlane.xlu0 %2068
        %v2070 = vsel %vm492, %v2036, 0.0
        %2071 = vadd.xlane.f32.xlu0 %v2070
        %v2072 = vpop.xlane.xlu0 %2071
        %v2073 = vsel %vm492, %v2037, 0.0
        %2074 = vadd.xlane.f32.xlu0 %v2073
        %v2075 = vpop.xlane.xlu0 %2074
        %v2076 = vsel %vm492, %v2038, 0.0
        %2077 = vadd.xlane.f32.xlu0 %v2076
        %v2078 = vpop.xlane.xlu0 %2077
        %v2079 = vsel %vm492, %v2039, 0.0
        %2080 = vadd.xlane.f32.xlu0 %v2079
        %v2081 = vpop.xlane.xlu0 %2080
        %v2082 = vsel %vm492, %v2040, 0.0
        %2083 = vadd.xlane.f32.xlu0 %v2082
        %v2084 = vpop.xlane.xlu0 %2083
        %v2085 = vsel %vm492, %v2041, 0.0
        %2086 = vadd.xlane.f32.xlu0 %v2085
        %v2087 = vpop.xlane.xlu0 %2086
        %v2088 = vsel %vm492, %v2042, 0.0
        %2089 = vadd.xlane.f32.xlu0 %v2088
        %v2090 = vpop.xlane.xlu0 %2089
        %v2091 = vld [vmem:[#allocation9 + $0x1] sm:$0x1]
        %v2092 = vperm.slane %v2091, 0
        %v2093 = vmul.f32 %v1910, %v2092
        %v2094 = vmul.f32 %v1911, %v2092
        %v2095 = vmul.f32 %v1912, %v2092
        %v2096 = vmul.f32 %v1913, %v2092
        %v2097 = vmul.f32 %v1914, %v2092
        %v2098 = vmul.f32 %v1915, %v2092
        %v2099 = vmul.f32 %v1916, %v2092
        %v2100 = vmul.f32 %v1917, %v2092
        %v2101 = vmul.f32 %v1918, %v2092
        %v2102 = vmul.f32 %v1919, %v2092
        %v2103 = vmul.f32 %v1920, %v2092
        %v2104 = vmul.f32 %v1921, %v2092
        %v2105 = vmul.f32 %v1922, %v2092
        %v2106 = vmul.f32 %v1923, %v2092
        %v2107 = vmul.f32 %v1924, %v2092
        %v2108 = vmul.f32 %v1925, %v2092
        %v2109 = vsel %vm492, %v2093, 0.0
        %2110 = vadd.xlane.f32.xlu0 %v2109
        %v2111 = vpop.xlane.xlu0 %2110
        %v2112 = vsel %vm492, %v2094, 0.0
        %2113 = vadd.xlane.f32.xlu0 %v2112
        %v2114 = vpop.xlane.xlu0 %2113
        %v2115 = vsel %vm492, %v2095, 0.0
        %2116 = vadd.xlane.f32.xlu0 %v2115
        %v2117 = vpop.xlane.xlu0 %2116
        %v2118 = vsel %vm492, %v2096, 0.0
        %2119 = vadd.xlane.f32.xlu0 %v2118
        %v2120 = vpop.xlane.xlu0 %2119
        %v2121 = vsel %vm492, %v2097, 0.0
        %2122 = vadd.xlane.f32.xlu0 %v2121
        %v2123 = vpop.xlane.xlu0 %2122
        %v2124 = vsel %vm492, %v2098, 0.0
        %2125 = vadd.xlane.f32.xlu0 %v2124
        %v2126 = vpop.xlane.xlu0 %2125
        %v2127 = vsel %vm492, %v2099, 0.0
        %2128 = vadd.xlane.f32.xlu0 %v2127
        %v2129 = vpop.xlane.xlu0 %2128
        %v2130 = vsel %vm492, %v2100, 0.0
        %2131 = vadd.xlane.f32.xlu0 %v2130
        %v2132 = vpop.xlane.xlu0 %2131
        %v2133 = vsel %vm492, %v2101, 0.0
        %2134 = vadd.xlane.f32.xlu0 %v2133
        %v2135 = vpop.xlane.xlu0 %2134
        %v2136 = vsel %vm492, %v2102, 0.0
        %2137 = vadd.xlane.f32.xlu0 %v2136
        %v2138 = vpop.xlane.xlu0 %2137
        %v2139 = vsel %vm492, %v2103, 0.0
        %2140 = vadd.xlane.f32.xlu0 %v2139
        %v2141 = vpop.xlane.xlu0 %2140
        %v2142 = vsel %vm492, %v2104, 0.0
        %2143 = vadd.xlane.f32.xlu0 %v2142
        %v2144 = vpop.xlane.xlu0 %2143
        %v2145 = vsel %vm492, %v2105, 0.0
        %2146 = vadd.xlane.f32.xlu0 %v2145
        %v2147 = vpop.xlane.xlu0 %2146
        %v2148 = vsel %vm492, %v2106, 0.0
        %2149 = vadd.xlane.f32.xlu0 %v2148
        %v2150 = vpop.xlane.xlu0 %2149
        %v2151 = vsel %vm492, %v2107, 0.0
        %2152 = vadd.xlane.f32.xlu0 %v2151
        %v2153 = vpop.xlane.xlu0 %2152
        %v2154 = vsel %vm492, %v2108, 0.0
        %2155 = vadd.xlane.f32.xlu0 %v2154
        %v2156 = vpop.xlane.xlu0 %2155
        %v2157 = vld [vmem:[#allocation9 + $0x2] sm:$0x1]
        %v2158 = vld [vmem:[#allocation9 + $0x3] sm:$0x1]
        %s2159 = sld [smem:[#allocation11]]
        %2160 = vxpose.xlu0.b32.start [1/16] %v2111, 128
        %2161 = vxpose.xlu0.b32.cont [2/16] %v2114, 128
        %2162 = vxpose.xlu0.b32.cont [3/16] %v2117, 128
        %2163 = vxpose.xlu0.b32.cont [4/16] %v2120, 128
        %2164 = vxpose.xlu0.b32.cont [5/16] 0.0, 128
        %2165 = vxpose.xlu0.b32.cont [6/16] 0.0, 128
        %2166 = vxpose.xlu0.b32.cont [7/16] 0.0, 128
        %2167 = vxpose.xlu0.b32.cont [8/16] 0.0, 128
        %2168 = vxpose.xlu0.b32.cont [9/16] 0.0, 128
        %2169 = vxpose.xlu0.b32.cont [10/16] 0.0, 128
        %2170 = vxpose.xlu0.b32.cont [11/16] 0.0, 128
        %2171 = vxpose.xlu0.b32.cont [12/16] 0.0, 128
        %2172 = vxpose.xlu0.b32.cont [13/16] 0.0, 128
        %2173 = vxpose.xlu0.b32.cont [14/16] 0.0, 128
        %2174 = vxpose.xlu0.b32.cont [15/16] 0.0, 128
        %2175 = vxpose.xlu0.b32.end [16/16] 0.0, 128
        %v2176 = vpop.trf.xlu0
        %v2177 = vpop.trf.xlu0
        %v2178 = vpop.trf.xlu0
        %v2179 = vpop.trf.xlu0
        %v2180 = vpop.trf.xlu0
        %v2181 = vpop.trf.xlu0
        %v2182 = vpop.trf.xlu0
        %v2183 = vpop.trf.xlu0
        %v2184 = vpop.trf.xlu0
        %v2185 = vpop.trf.xlu0
        %v2186 = vpop.trf.xlu0
        %v2187 = vpop.trf.xlu0
        %v2188 = vpop.trf.xlu0
        %v2189 = vpop.trf.xlu0
        %v2190 = vpop.trf.xlu0
        %v2191 = vpop.trf.xlu0
        %2192 = vxpose.xlu0.b32.start [1/16] %v2123, 128
        %2193 = vxpose.xlu0.b32.cont [2/16] %v2126, 128
        %2194 = vxpose.xlu0.b32.cont [3/16] %v2129, 128
        %2195 = vxpose.xlu0.b32.cont [4/16] %v2132, 128
        %2196 = vxpose.xlu0.b32.cont [5/16] 0.0, 128
        %2197 = vxpose.xlu0.b32.cont [6/16] 0.0, 128
        %2198 = vxpose.xlu0.b32.cont [7/16] 0.0, 128
        %2199 = vxpose.xlu0.b32.cont [8/16] 0.0, 128
        %2200 = vxpose.xlu0.b32.cont [9/16] 0.0, 128
        %2201 = vxpose.xlu0.b32.cont [10/16] 0.0, 128
        %2202 = vxpose.xlu0.b32.cont [11/16] 0.0, 128
        %2203 = vxpose.xlu0.b32.cont [12/16] 0.0, 128
        %2204 = vxpose.xlu0.b32.cont [13/16] 0.0, 128
        %2205 = vxpose.xlu0.b32.cont [14/16] 0.0, 128
        %2206 = vxpose.xlu0.b32.cont [15/16] 0.0, 128
        %2207 = vxpose.xlu0.b32.end [16/16] 0.0, 128
        %v2208 = vpop.trf.xlu0
        %v2209 = vpop.trf.xlu0
        %v2210 = vpop.trf.xlu0
        %v2211 = vpop.trf.xlu0
        %v2212 = vpop.trf.xlu0
        %v2213 = vpop.trf.xlu0
        %v2214 = vpop.trf.xlu0
        %v2215 = vpop.trf.xlu0
        %v2216 = vpop.trf.xlu0
        %v2217 = vpop.trf.xlu0
        %v2218 = vpop.trf.xlu0
        %v2219 = vpop.trf.xlu0
        %v2220 = vpop.trf.xlu0
        %v2221 = vpop.trf.xlu0
        %v2222 = vpop.trf.xlu0
        %v2223 = vpop.trf.xlu0
        %2224 = vxpose.xlu0.b32.start [1/16] %v2135, 128
        %2225 = vxpose.xlu0.b32.cont [2/16] %v2138, 128
        %2226 = vxpose.xlu0.b32.cont [3/16] %v2141, 128
        %2227 = vxpose.xlu0.b32.cont [4/16] %v2144, 128
        %2228 = vxpose.xlu0.b32.cont [5/16] 0.0, 128
        %2229 = vxpose.xlu0.b32.cont [6/16] 0.0, 128
        %2230 = vxpose.xlu0.b32.cont [7/16] 0.0, 128
        %2231 = vxpose.xlu0.b32.cont [8/16] 0.0, 128
        %2232 = vxpose.xlu0.b32.cont [9/16] 0.0, 128
        %2233 = vxpose.xlu0.b32.cont [10/16] 0.0, 128
        %2234 = vxpose.xlu0.b32.cont [11/16] 0.0, 128
        %2235 = vxpose.xlu0.b32.cont [12/16] 0.0, 128
        %2236 = vxpose.xlu0.b32.cont [13/16] 0.0, 128
        %2237 = vxpose.xlu0.b32.cont [14/16] 0.0, 128
        %2238 = vxpose.xlu0.b32.cont [15/16] 0.0, 128
        %2239 = vxpose.xlu0.b32.end [16/16] 0.0, 128
        %v2240 = vpop.trf.xlu0
        %v2241 = vpop.trf.xlu0
        %v2242 = vpop.trf.xlu0
        %v2243 = vpop.trf.xlu0
        %v2244 = vpop.trf.xlu0
        %v2245 = vpop.trf.xlu0
        %v2246 = vpop.trf.xlu0
        %v2247 = vpop.trf.xlu0
        %v2248 = vpop.trf.xlu0
        %v2249 = vpop.trf.xlu0
        %v2250 = vpop.trf.xlu0
        %v2251 = vpop.trf.xlu0
        %v2252 = vpop.trf.xlu0
        %v2253 = vpop.trf.xlu0
        %v2254 = vpop.trf.xlu0
        %v2255 = vpop.trf.xlu0
        %2256 = vxpose.xlu0.b32.start [1/16] %v2147, 128
        %2257 = vxpose.xlu0.b32.cont [2/16] %v2150, 128
        %2258 = vxpose.xlu0.b32.cont [3/16] %v2153, 128
        %2259 = vxpose.xlu0.b32.cont [4/16] %v2156, 128
        %2260 = vxpose.xlu0.b32.cont [5/16] 0.0, 128
        %2261 = vxpose.xlu0.b32.cont [6/16] 0.0, 128
        %2262 = vxpose.xlu0.b32.cont [7/16] 0.0, 128
        %2263 = vxpose.xlu0.b32.cont [8/16] 0.0, 128
        %2264 = vxpose.xlu0.b32.cont [9/16] 0.0, 128
        %2265 = vxpose.xlu0.b32.cont [10/16] 0.0, 128
        %2266 = vxpose.xlu0.b32.cont [11/16] 0.0, 128
        %2267 = vxpose.xlu0.b32.cont [12/16] 0.0, 128
        %2268 = vxpose.xlu0.b32.cont [13/16] 0.0, 128
        %2269 = vxpose.xlu0.b32.cont [14/16] 0.0, 128
        %2270 = vxpose.xlu0.b32.cont [15/16] 0.0, 128
        %2271 = vxpose.xlu0.b32.end [16/16] 0.0, 128
        %v2272 = vpop.trf.xlu0
        %v2273 = vpop.trf.xlu0
        %v2274 = vpop.trf.xlu0
        %v2275 = vpop.trf.xlu0
        %v2276 = vpop.trf.xlu0
        %v2277 = vpop.trf.xlu0
        %v2278 = vpop.trf.xlu0
        %v2279 = vpop.trf.xlu0
        %v2280 = vpop.trf.xlu0
        %v2281 = vpop.trf.xlu0
        %v2282 = vpop.trf.xlu0
        %v2283 = vpop.trf.xlu0
        %v2284 = vpop.trf.xlu0
        %v2285 = vpop.trf.xlu0
        %v2286 = vpop.trf.xlu0
        %v2287 = vpop.trf.xlu0
        %v2288 = vperm.slane %v2176, 0
        %v2289 = vperm.slane %v2208, 0
        %v2290 = vperm.slane %v2240, 0
        %v2291 = vperm.slane %v2272, 0
        %v2292 = vadd.f32 %v2045, %v2288
        %v2293 = vadd.f32 %v2048, %v2288
        %v2294 = vadd.f32 %v2051, %v2288
        %v2295 = vadd.f32 %v2054, %v2288
        %v2296 = vadd.f32 %v2057, %v2289
        %v2297 = vadd.f32 %v2060, %v2289
        %v2298 = vadd.f32 %v2063, %v2289
        %v2299 = vadd.f32 %v2066, %v2289
        %v2300 = vadd.f32 %v2069, %v2290
        %v2301 = vadd.f32 %v2072, %v2290
        %v2302 = vadd.f32 %v2075, %v2290
        %v2303 = vadd.f32 %v2078, %v2290
        %v2304 = vadd.f32 %v2081, %v2291
        %v2305 = vadd.f32 %v2084, %v2291
        %v2306 = vadd.f32 %v2087, %v2291
        %v2307 = vadd.f32 %v2090, %v2291
        %v2308 = vsel %vm492, %v2292, -inf
        %2309 = vmax.xlane.f32.xlu0 %v2308
        %v2310 = vpop.xlane.xlu0 %2309
        %v2311 = vsel %vm492, %v2293, -inf
        %2312 = vmax.xlane.f32.xlu0 %v2311
        %v2313 = vpop.xlane.xlu0 %2312
        %v2314 = vsel %vm492, %v2294, -inf
        %2315 = vmax.xlane.f32.xlu0 %v2314
        %v2316 = vpop.xlane.xlu0 %2315
        %v2317 = vsel %vm492, %v2295, -inf
        %2318 = vmax.xlane.f32.xlu0 %v2317
        %v2319 = vpop.xlane.xlu0 %2318
        %v2320 = vsel %vm492, %v2296, -inf
        %2321 = vmax.xlane.f32.xlu0 %v2320
        %v2322 = vpop.xlane.xlu0 %2321
        %v2323 = vsel %vm492, %v2297, -inf
        %2324 = vmax.xlane.f32.xlu0 %v2323
        %v2325 = vpop.xlane.xlu0 %2324
        %v2326 = vsel %vm492, %v2298, -inf
        %2327 = vmax.xlane.f32.xlu0 %v2326
        %v2328 = vpop.xlane.xlu0 %2327
        %v2329 = vsel %vm492, %v2299, -inf
        %2330 = vmax.xlane.f32.xlu0 %v2329
        %v2331 = vpop.xlane.xlu0 %2330
        %v2332 = vsel %vm492, %v2300, -inf
        %2333 = vmax.xlane.f32.xlu0 %v2332
        %v2334 = vpop.xlane.xlu0 %2333
        %v2335 = vsel %vm492, %v2301, -inf
        %2336 = vmax.xlane.f32.xlu0 %v2335
        %v2337 = vpop.xlane.xlu0 %2336
        %v2338 = vsel %vm492, %v2302, -inf
        %2339 = vmax.xlane.f32.xlu0 %v2338
        %v2340 = vpop.xlane.xlu0 %2339
        %v2341 = vsel %vm492, %v2303, -inf
        %2342 = vmax.xlane.f32.xlu0 %v2341
        %v2343 = vpop.xlane.xlu0 %2342
        %v2344 = vsel %vm492, %v2304, -inf
        %2345 = vmax.xlane.f32.xlu0 %v2344
        %v2346 = vpop.xlane.xlu0 %2345
        %v2347 = vsel %vm492, %v2305, -inf
        %2348 = vmax.xlane.f32.xlu0 %v2347
        %v2349 = vpop.xlane.xlu0 %2348
        %v2350 = vsel %vm492, %v2306, -inf
        %2351 = vmax.xlane.f32.xlu0 %v2350
        %v2352 = vpop.xlane.xlu0 %2351
        %v2353 = vsel %vm492, %v2307, -inf
        %2354 = vmax.xlane.f32.xlu0 %v2353
        %v2355 = vpop.xlane.xlu0 %2354
        %v2356 = vsub.f32 %v2292, %v2310
        %v2357 = vsub.f32 %v2293, %v2313
        %v2358 = vsub.f32 %v2294, %v2316
        %v2359 = vsub.f32 %v2295, %v2319
        %v2360 = vsub.f32 %v2296, %v2322
        %v2361 = vsub.f32 %v2297, %v2325
        %v2362 = vsub.f32 %v2298, %v2328
        %v2363 = vsub.f32 %v2299, %v2331
        %v2364 = vsub.f32 %v2300, %v2334
        %v2365 = vsub.f32 %v2301, %v2337
        %v2366 = vsub.f32 %v2302, %v2340
        %v2367 = vsub.f32 %v2303, %v2343
        %v2368 = vsub.f32 %v2304, %v2346
        %v2369 = vsub.f32 %v2305, %v2349
        %v2370 = vsub.f32 %v2306, %v2352
        %v2371 = vsub.f32 %v2307, %v2355
        %v2372 = vmul.f32 %v2356, 1.442695
        %v2373 = vpow.pop %v2372
        %v2374 = vmul.f32 %v2357, 1.442695
        %v2375 = vpow.pop %v2374
        %v2376 = vmul.f32 %v2358, 1.442695
        %v2377 = vpow.pop %v2376
        %v2378 = vmul.f32 %v2359, 1.442695
        %v2379 = vpow.pop %v2378
        %v2380 = vmul.f32 %v2360, 1.442695
        %v2381 = vpow.pop %v2380
        %v2382 = vmul.f32 %v2361, 1.442695
        %v2383 = vpow.pop %v2382
        %v2384 = vmul.f32 %v2362, 1.442695
        %v2385 = vpow.pop %v2384
        %v2386 = vmul.f32 %v2363, 1.442695
        %v2387 = vpow.pop %v2386
        %v2388 = vmul.f32 %v2364, 1.442695
        %v2389 = vpow.pop %v2388
        %v2390 = vmul.f32 %v2365, 1.442695
        %v2391 = vpow.pop %v2390
        %v2392 = vmul.f32 %v2366, 1.442695
        %v2393 = vpow.pop %v2392
        %v2394 = vmul.f32 %v2367, 1.442695
        %v2395 = vpow.pop %v2394
        %v2396 = vmul.f32 %v2368, 1.442695
        %v2397 = vpow.pop %v2396
        %v2398 = vmul.f32 %v2369, 1.442695
        %v2399 = vpow.pop %v2398
        %v2400 = vmul.f32 %v2370, 1.442695
        %v2401 = vpow.pop %v2400
        %v2402 = vmul.f32 %v2371, 1.442695
        %v2403 = vpow.pop %v2402
        %v2404 = vsel %vm492, %v2373, 0.0
        %2405 = vadd.xlane.f32.xlu0 %v2404
        %v2406 = vpop.xlane.xlu0 %2405
        %v2407 = vsel %vm492, %v2375, 0.0
        %2408 = vadd.xlane.f32.xlu0 %v2407
        %v2409 = vpop.xlane.xlu0 %2408
        %v2410 = vsel %vm492, %v2377, 0.0
        %2411 = vadd.xlane.f32.xlu0 %v2410
        %v2412 = vpop.xlane.xlu0 %2411
        %v2413 = vsel %vm492, %v2379, 0.0
        %2414 = vadd.xlane.f32.xlu0 %v2413
        %v2415 = vpop.xlane.xlu0 %2414
        %v2416 = vsel %vm492, %v2381, 0.0
        %2417 = vadd.xlane.f32.xlu0 %v2416
        %v2418 = vpop.xlane.xlu0 %2417
        %v2419 = vsel %vm492, %v2383, 0.0
        %2420 = vadd.xlane.f32.xlu0 %v2419
        %v2421 = vpop.xlane.xlu0 %2420
        %v2422 = vsel %vm492, %v2385, 0.0
        %2423 = vadd.xlane.f32.xlu0 %v2422
        %v2424 = vpop.xlane.xlu0 %2423
        %v2425 = vsel %vm492, %v2387, 0.0
        %2426 = vadd.xlane.f32.xlu0 %v2425
        %v2427 = vpop.xlane.xlu0 %2426
        %v2428 = vsel %vm492, %v2389, 0.0
        %2429 = vadd.xlane.f32.xlu0 %v2428
        %v2430 = vpop.xlane.xlu0 %2429
        %v2431 = vsel %vm492, %v2391, 0.0
        %2432 = vadd.xlane.f32.xlu0 %v2431
        %v2433 = vpop.xlane.xlu0 %2432
        %v2434 = vsel %vm492, %v2393, 0.0
        %2435 = vadd.xlane.f32.xlu0 %v2434
        %v2436 = vpop.xlane.xlu0 %2435
        %v2437 = vsel %vm492, %v2395, 0.0
        %2438 = vadd.xlane.f32.xlu0 %v2437
        %v2439 = vpop.xlane.xlu0 %2438
        %v2440 = vsel %vm492, %v2397, 0.0
        %2441 = vadd.xlane.f32.xlu0 %v2440
        %v2442 = vpop.xlane.xlu0 %2441
        %v2443 = vsel %vm492, %v2399, 0.0
        %2444 = vadd.xlane.f32.xlu0 %v2443
        %v2445 = vpop.xlane.xlu0 %2444
        %v2446 = vsel %vm492, %v2401, 0.0
        %2447 = vadd.xlane.f32.xlu0 %v2446
        %v2448 = vpop.xlane.xlu0 %2447
        %v2449 = vsel %vm492, %v2403, 0.0
        %2450 = vadd.xlane.f32.xlu0 %v2449
        %v2451 = vpop.xlane.xlu0 %2450
        %v2452 = vrcp.pop %v2406
        %v2453 = vrcp.pop %v2409
        %v2454 = vrcp.pop %v2412
        %v2455 = vrcp.pop %v2415
        %v2456 = vrcp.pop %v2418
        %v2457 = vrcp.pop %v2421
        %v2458 = vrcp.pop %v2424
        %v2459 = vrcp.pop %v2427
        %v2460 = vrcp.pop %v2430
        %v2461 = vrcp.pop %v2433
        %v2462 = vrcp.pop %v2436
        %v2463 = vrcp.pop %v2439
        %v2464 = vrcp.pop %v2442
        %v2465 = vrcp.pop %v2445
        %v2466 = vrcp.pop %v2448
        %v2467 = vrcp.pop %v2451
        %v2468 = vmul.f32 %v2373, %v2452
        %v2469 = vmul.f32 %v2375, %v2453
        %v2470 = vmul.f32 %v2377, %v2454
        %v2471 = vmul.f32 %v2379, %v2455
        %v2472 = vmul.f32 %v2381, %v2456
        %v2473 = vmul.f32 %v2383, %v2457
        %v2474 = vmul.f32 %v2385, %v2458
        %v2475 = vmul.f32 %v2387, %v2459
        %v2476 = vmul.f32 %v2389, %v2460
        %v2477 = vmul.f32 %v2391, %v2461
        %v2478 = vmul.f32 %v2393, %v2462
        %v2479 = vmul.f32 %v2395, %v2463
        %v2480 = vmul.f32 %v2397, %v2464
        %v2481 = vmul.f32 %v2399, %v2465
        %v2482 = vmul.f32 %v2401, %v2466
        %v2483 = vmul.f32 %v2403, %v2467
        %v2484 = vpack.c.bf16 %v2468, %v2468
        %v2485 = vpack.c.bf16 %v2469, %v2469
        %v2486 = vpack.c.bf16 %v2470, %v2470
        %v2487 = vpack.c.bf16 %v2471, %v2471
        %v2488 = vpack.c.bf16 %v2472, %v2472
        %v2489 = vpack.c.bf16 %v2473, %v2473
        %v2490 = vpack.c.bf16 %v2474, %v2474
        %v2491 = vpack.c.bf16 %v2475, %v2475
        %v2492 = vpack.c.bf16 %v2476, %v2476
        %v2493 = vpack.c.bf16 %v2477, %v2477
        %v2494 = vpack.c.bf16 %v2478, %v2478
        %v2495 = vpack.c.bf16 %v2479, %v2479
        %v2496 = vpack.c.bf16 %v2480, %v2480
        %v2497 = vpack.c.bf16 %v2481, %v2481
        %v2498 = vpack.c.bf16 %v2482, %v2482
        %v2499 = vpack.c.bf16 %v2483, %v2483
        %v2500 = vpack.c.bf16 %v1986, %v1986
        %v2501 = vpack.c.bf16 %v1988, %v1988
        %v2502 = vpack.c.bf16 %v1991, %v1991
        %v2503 = vpack.c.bf16 %v1993, %v1993
        %v2504 = vpack.c.bf16 %v1996, %v1996
        %v2505 = vpack.c.bf16 %v1998, %v1998
        %v2506 = vpack.c.bf16 %v2001, %v2001
        %v2507 = vpack.c.bf16 %v2003, %v2003
        %v2508 = vpack.c.bf16 %v2006, %v2006
        %v2509 = vpack.c.bf16 %v2008, %v2008
        %v2510 = vpack.c.bf16 %v2011, %v2011
        %v2511 = vpack.c.bf16 %v2013, %v2013
        %v2512 = vpack.c.bf16 %v2016, %v2016
        %v2513 = vpack.c.bf16 %v2018, %v2018
        %v2514 = vpack.c.bf16 %v2021, %v2021
        %v2515 = vpack.c.bf16 %v2023, %v2023
        %v2520 = vunpack.c.l.b16 %v2484
        %v2521 = vunpack.c.l.b16 %v2485
        %v2522 = vunpack.c.l.b16 %v2486
        %v2523 = vunpack.c.l.b16 %v2487
        %v2524 = vpack.c.b16 %v2521, %v2520
        %v2525 = vpack.c.b16 %v2523, %v2522
        %v2530 = vunpack.c.l.b16 %v2500
        %v2531 = vunpack.c.l.b16 %v2501
        %v2532 = vunpack.c.l.b16 %v2502
        %v2533 = vunpack.c.l.b16 %v2503
        %v2534 = vpack.c.b16 %v2531, %v2530
        %v2535 = vpack.c.b16 %v2533, %v2532
        %v2539 = vsel %vm492, %v2524, 0
        %v2542 = vsel %vm492, %v2525, 0
        %2544 = vmatpush.bf16.msra.mxu0 0
        %2545 = vmatpush.bf16.msra.mxu0 0
        %2546 = vmatpush.bf16.msra.mxu0 0
        %2547 = vmatpush.bf16.msra.mxu0 0
        %2548 = vmatpush.bf16.msra.mxu0 0
        %2549 = vmatpush.bf16.msra.mxu0 0
        %2550 = vmatpush.bf16.msra.mxu0 %v2535
        %2551 = vmatpush.bf16.msra.mxu0 %v2534
        %2552 = vmatmul.bf16.gmra.mxu0 %v2539
        %v2553 = vpop.f32.mrf.mxu0
        %v2554 = vadd.f32 %v1910, %v2553
        %v2555 = vpop.f32.mrf.mxu0
        %v2556 = vadd.f32 %v1911, %v2555
        %2557 = vmatmul.bf16.gmra.mxu0 %v2542
        %v2558 = vpop.f32.mrf.mxu0
        %v2559 = vadd.f32 %v1912, %v2558
        %v2560 = vpop.f32.mrf.mxu0
        %v2561 = vadd.f32 %v1913, %v2560
        %2562 = vdwg.mxu0
        %v2567 = vunpack.c.l.b16 %v2488
        %v2568 = vunpack.c.l.b16 %v2489
        %v2569 = vunpack.c.l.b16 %v2490
        %v2570 = vunpack.c.l.b16 %v2491
        %v2571 = vpack.c.b16 %v2568, %v2567
        %v2572 = vpack.c.b16 %v2570, %v2569
        %v2577 = vunpack.c.l.b16 %v2504
        %v2578 = vunpack.c.l.b16 %v2505
        %v2579 = vunpack.c.l.b16 %v2506
        %v2580 = vunpack.c.l.b16 %v2507
        %v2581 = vpack.c.b16 %v2578, %v2577
        %v2582 = vpack.c.b16 %v2580, %v2579
        %v2586 = vsel %vm492, %v2571, 0
        %v2589 = vsel %vm492, %v2572, 0
        %2591 = vmatpush.bf16.msra.mxu0 0
        %2592 = vmatpush.bf16.msra.mxu0 0
        %2593 = vmatpush.bf16.msra.mxu0 0
        %2594 = vmatpush.bf16.msra.mxu0 0
        %2595 = vmatpush.bf16.msra.mxu0 0
        %2596 = vmatpush.bf16.msra.mxu0 0
        %2597 = vmatpush.bf16.msra.mxu0 %v2582
        %2598 = vmatpush.bf16.msra.mxu0 %v2581
        %2599 = vmatmul.bf16.gmra.mxu0 %v2586
        %v2600 = vpop.f32.mrf.mxu0
        %v2601 = vadd.f32 %v1914, %v2600
        %v2602 = vpop.f32.mrf.mxu0
        %v2603 = vadd.f32 %v1915, %v2602
        %2604 = vmatmul.bf16.gmra.mxu0 %v2589
        %v2605 = vpop.f32.mrf.mxu0
        %v2606 = vadd.f32 %v1916, %v2605
        %v2607 = vpop.f32.mrf.mxu0
        %v2608 = vadd.f32 %v1917, %v2607
        %2609 = vdwg.mxu0
        %v2614 = vunpack.c.l.b16 %v2492
        %v2615 = vunpack.c.l.b16 %v2493
        %v2616 = vunpack.c.l.b16 %v2494
        %v2617 = vunpack.c.l.b16 %v2495
        %v2618 = vpack.c.b16 %v2615, %v2614
        %v2619 = vpack.c.b16 %v2617, %v2616
        %v2624 = vunpack.c.l.b16 %v2508
        %v2625 = vunpack.c.l.b16 %v2509
        %v2626 = vunpack.c.l.b16 %v2510
        %v2627 = vunpack.c.l.b16 %v2511
        %v2628 = vpack.c.b16 %v2625, %v2624
        %v2629 = vpack.c.b16 %v2627, %v2626
        %v2633 = vsel %vm492, %v2618, 0
        %v2636 = vsel %vm492, %v2619, 0
        %2638 = vmatpush.bf16.msra.mxu0 0
        %2639 = vmatpush.bf16.msra.mxu0 0
        %2640 = vmatpush.bf16.msra.mxu0 0
        %2641 = vmatpush.bf16.msra.mxu0 0
        %2642 = vmatpush.bf16.msra.mxu0 0
        %2643 = vmatpush.bf16.msra.mxu0 0
        %2644 = vmatpush.bf16.msra.mxu0 %v2629
        %2645 = vmatpush.bf16.msra.mxu0 %v2628
        %2646 = vmatmul.bf16.gmra.mxu0 %v2633
        %v2647 = vpop.f32.mrf.mxu0
        %v2648 = vadd.f32 %v1918, %v2647
        %v2649 = vpop.f32.mrf.mxu0
        %v2650 = vadd.f32 %v1919, %v2649
        %2651 = vmatmul.bf16.gmra.mxu0 %v2636
        %v2652 = vpop.f32.mrf.mxu0
        %v2653 = vadd.f32 %v1920, %v2652
        %v2654 = vpop.f32.mrf.mxu0
        %v2655 = vadd.f32 %v1921, %v2654
        %2656 = vdwg.mxu0
        %v2661 = vunpack.c.l.b16 %v2496
        %v2662 = vunpack.c.l.b16 %v2497
        %v2663 = vunpack.c.l.b16 %v2498
        %v2664 = vunpack.c.l.b16 %v2499
        %v2665 = vpack.c.b16 %v2662, %v2661
        %v2666 = vpack.c.b16 %v2664, %v2663
        %v2671 = vunpack.c.l.b16 %v2512
        %v2672 = vunpack.c.l.b16 %v2513
        %v2673 = vunpack.c.l.b16 %v2514
        %v2674 = vunpack.c.l.b16 %v2515
        %v2675 = vpack.c.b16 %v2672, %v2671
        %v2676 = vpack.c.b16 %v2674, %v2673
        %v2680 = vsel %vm492, %v2665, 0
        %v2683 = vsel %vm492, %v2666, 0
        %2685 = vmatpush.bf16.msra.mxu0 0
        %2686 = vmatpush.bf16.msra.mxu0 0
        %2687 = vmatpush.bf16.msra.mxu0 0
        %2688 = vmatpush.bf16.msra.mxu0 0
        %2689 = vmatpush.bf16.msra.mxu0 0
        %2690 = vmatpush.bf16.msra.mxu0 0
        %2691 = vmatpush.bf16.msra.mxu0 %v2676
        %2692 = vmatpush.bf16.msra.mxu0 %v2675
        %2693 = vmatmul.bf16.gmra.mxu0 %v2680
        %v2694 = vpop.f32.mrf.mxu0
        %v2695 = vadd.f32 %v1922, %v2694
        %v2696 = vpop.f32.mrf.mxu0
        %v2697 = vadd.f32 %v1923, %v2696
        %2698 = vmatmul.bf16.gmra.mxu0 %v2683
        %v2699 = vpop.f32.mrf.mxu0
        %v2700 = vadd.f32 %v1924, %v2699
        %v2701 = vpop.f32.mrf.mxu0
        %v2702 = vadd.f32 %v1925, %v2701
        %2703 = vdwg.mxu0
        %v2704 = vperm.slane %v2157, 0
        %v2705 = vmul.f32 %v2554, %v2704
        %v2706 = vmul.f32 %v2556, %v2704
        %v2707 = vmul.f32 %v2559, %v2704
        %v2708 = vmul.f32 %v2561, %v2704
        %v2709 = vmul.f32 %v2601, %v2704
        %v2710 = vmul.f32 %v2603, %v2704
        %v2711 = vmul.f32 %v2606, %v2704
        %v2712 = vmul.f32 %v2608, %v2704
        %v2713 = vmul.f32 %v2648, %v2704
        %v2714 = vmul.f32 %v2650, %v2704
        %v2715 = vmul.f32 %v2653, %v2704
        %v2716 = vmul.f32 %v2655, %v2704
        %v2717 = vmul.f32 %v2695, %v2704
        %v2718 = vmul.f32 %v2697, %v2704
        %v2719 = vmul.f32 %v2700, %v2704
        %v2720 = vmul.f32 %v2702, %v2704
        %v2721 = vsel %vm492, %v2705, 0.0
        %2722 = vadd.xlane.f32.xlu0 %v2721
        %v2723 = vpop.xlane.xlu0 %2722
        %v2724 = vsel %vm492, %v2706, 0.0
        %2725 = vadd.xlane.f32.xlu0 %v2724
        %v2726 = vpop.xlane.xlu0 %2725
        %v2727 = vsel %vm492, %v2707, 0.0
        %2728 = vadd.xlane.f32.xlu0 %v2727
        %v2729 = vpop.xlane.xlu0 %2728
        %v2730 = vsel %vm492, %v2708, 0.0
        %2731 = vadd.xlane.f32.xlu0 %v2730
        %v2732 = vpop.xlane.xlu0 %2731
        %v2733 = vsel %vm492, %v2709, 0.0
        %2734 = vadd.xlane.f32.xlu0 %v2733
        %v2735 = vpop.xlane.xlu0 %2734
        %v2736 = vsel %vm492, %v2710, 0.0
        %2737 = vadd.xlane.f32.xlu0 %v2736
        %v2738 = vpop.xlane.xlu0 %2737
        %v2739 = vsel %vm492, %v2711, 0.0
        %2740 = vadd.xlane.f32.xlu0 %v2739
        %v2741 = vpop.xlane.xlu0 %2740
        %v2742 = vsel %vm492, %v2712, 0.0
        %2743 = vadd.xlane.f32.xlu0 %v2742
        %v2744 = vpop.xlane.xlu0 %2743
        %v2745 = vsel %vm492, %v2713, 0.0
        %2746 = vadd.xlane.f32.xlu0 %v2745
        %v2747 = vpop.xlane.xlu0 %2746
        %v2748 = vsel %vm492, %v2714, 0.0
        %2749 = vadd.xlane.f32.xlu0 %v2748
        %v2750 = vpop.xlane.xlu0 %2749
        %v2751 = vsel %vm492, %v2715, 0.0
        %2752 = vadd.xlane.f32.xlu0 %v2751
        %v2753 = vpop.xlane.xlu0 %2752
        %v2754 = vsel %vm492, %v2716, 0.0
        %2755 = vadd.xlane.f32.xlu0 %v2754
        %v2756 = vpop.xlane.xlu0 %2755
        %v2757 = vsel %vm492, %v2717, 0.0
        %2758 = vadd.xlane.f32.xlu0 %v2757
        %v2759 = vpop.xlane.xlu0 %2758
        %v2760 = vsel %vm492, %v2718, 0.0
        %2761 = vadd.xlane.f32.xlu0 %v2760
        %v2762 = vpop.xlane.xlu0 %2761
        %v2763 = vsel %vm492, %v2719, 0.0
        %2764 = vadd.xlane.f32.xlu0 %v2763
        %v2765 = vpop.xlane.xlu0 %2764
        %v2766 = vsel %vm492, %v2720, 0.0
        %2767 = vadd.xlane.f32.xlu0 %v2766
        %v2768 = vpop.xlane.xlu0 %2767
        %v2769 = vperm.slane %v2158, 0
        %v2770 = vmul.f32 %v1910, %v2769
        %v2771 = vmul.f32 %v1911, %v2769
        %v2772 = vmul.f32 %v1912, %v2769
        %v2773 = vmul.f32 %v1913, %v2769
        %v2774 = vmul.f32 %v1914, %v2769
        %v2775 = vmul.f32 %v1915, %v2769
        %v2776 = vmul.f32 %v1916, %v2769
        %v2777 = vmul.f32 %v1917, %v2769
        %v2778 = vmul.f32 %v1918, %v2769
        %v2779 = vmul.f32 %v1919, %v2769
        %v2780 = vmul.f32 %v1920, %v2769
        %v2781 = vmul.f32 %v1921, %v2769
        %v2782 = vmul.f32 %v1922, %v2769
        %v2783 = vmul.f32 %v1923, %v2769
        %v2784 = vmul.f32 %v1924, %v2769
        %v2785 = vmul.f32 %v1925, %v2769
        %v2786 = vsel %vm492, %v2770, 0.0
        %2787 = vadd.xlane.f32.xlu0 %v2786
        %v2788 = vpop.xlane.xlu0 %2787
        %v2789 = vsel %vm492, %v2771, 0.0
        %2790 = vadd.xlane.f32.xlu0 %v2789
        %v2791 = vpop.xlane.xlu0 %2790
        %v2792 = vsel %vm492, %v2772, 0.0
        %2793 = vadd.xlane.f32.xlu0 %v2792
        %v2794 = vpop.xlane.xlu0 %2793
        %v2795 = vsel %vm492, %v2773, 0.0
        %2796 = vadd.xlane.f32.xlu0 %v2795
        %v2797 = vpop.xlane.xlu0 %2796
        %v2798 = vsel %vm492, %v2774, 0.0
        %2799 = vadd.xlane.f32.xlu0 %v2798
        %v2800 = vpop.xlane.xlu0 %2799
        %v2801 = vsel %vm492, %v2775, 0.0
        %2802 = vadd.xlane.f32.xlu0 %v2801
        %v2803 = vpop.xlane.xlu0 %2802
        %v2804 = vsel %vm492, %v2776, 0.0
        %2805 = vadd.xlane.f32.xlu0 %v2804
        %v2806 = vpop.xlane.xlu0 %2805
        %v2807 = vsel %vm492, %v2777, 0.0
        %2808 = vadd.xlane.f32.xlu0 %v2807
        %v2809 = vpop.xlane.xlu0 %2808
        %v2810 = vsel %vm492, %v2778, 0.0
        %2811 = vadd.xlane.f32.xlu0 %v2810
        %v2812 = vpop.xlane.xlu0 %2811
        %v2813 = vsel %vm492, %v2779, 0.0
        %2814 = vadd.xlane.f32.xlu0 %v2813
        %v2815 = vpop.xlane.xlu0 %2814
        %v2816 = vsel %vm492, %v2780, 0.0
        %2817 = vadd.xlane.f32.xlu0 %v2816
        %v2818 = vpop.xlane.xlu0 %2817
        %v2819 = vsel %vm492, %v2781, 0.0
        %2820 = vadd.xlane.f32.xlu0 %v2819
        %v2821 = vpop.xlane.xlu0 %2820
        %v2822 = vsel %vm492, %v2782, 0.0
        %2823 = vadd.xlane.f32.xlu0 %v2822
        %v2824 = vpop.xlane.xlu0 %2823
        %v2825 = vsel %vm492, %v2783, 0.0
        %2826 = vadd.xlane.f32.xlu0 %v2825
        %v2827 = vpop.xlane.xlu0 %2826
        %v2828 = vsel %vm492, %v2784, 0.0
        %2829 = vadd.xlane.f32.xlu0 %v2828
        %v2830 = vpop.xlane.xlu0 %2829
        %v2831 = vsel %vm492, %v2785, 0.0
        %2832 = vadd.xlane.f32.xlu0 %v2831
        %v2833 = vpop.xlane.xlu0 %2832
        %v2834 = vadd.f32 %v2723, %v2788
        %v2835 = vadd.f32 %v2726, %v2791
        %v2836 = vadd.f32 %v2729, %v2794
        %v2837 = vadd.f32 %v2732, %v2797
        %v2838 = vadd.f32 %v2735, %v2800
        %v2839 = vadd.f32 %v2738, %v2803
        %v2840 = vadd.f32 %v2741, %v2806
        %v2841 = vadd.f32 %v2744, %v2809
        %v2842 = vadd.f32 %v2747, %v2812
        %v2843 = vadd.f32 %v2750, %v2815
        %v2844 = vadd.f32 %v2753, %v2818
        %v2845 = vadd.f32 %v2756, %v2821
        %v2846 = vadd.f32 %v2759, %v2824
        %v2847 = vadd.f32 %v2762, %v2827
        %v2848 = vadd.f32 %v2765, %v2830
        %v2849 = vadd.f32 %v2768, %v2833
        %v2850 = vstv %s2159
        %v2851 = vadd.f32 %v2834, %v2850
        %v2852 = vadd.f32 %v2835, %v2850
        %v2853 = vadd.f32 %v2836, %v2850
        %v2854 = vadd.f32 %v2837, %v2850
        %v2855 = vadd.f32 %v2838, %v2850
        %v2856 = vadd.f32 %v2839, %v2850
        %v2857 = vadd.f32 %v2840, %v2850
        %v2858 = vadd.f32 %v2841, %v2850
        %v2859 = vadd.f32 %v2842, %v2850
        %v2860 = vadd.f32 %v2843, %v2850
        %v2861 = vadd.f32 %v2844, %v2850
        %v2862 = vadd.f32 %v2845, %v2850
        %v2863 = vadd.f32 %v2846, %v2850
        %v2864 = vadd.f32 %v2847, %v2850
        %v2865 = vadd.f32 %v2848, %v2850
        %v2866 = vadd.f32 %v2849, %v2850
        %v2867 = vxor.u32 %v2851, 2147483648
        %v2868 = vxor.u32 %v2852, 2147483648
        %v2869 = vxor.u32 %v2853, 2147483648
        %v2870 = vxor.u32 %v2854, 2147483648
        %v2871 = vxor.u32 %v2855, 2147483648
        %v2872 = vxor.u32 %v2856, 2147483648
        %v2873 = vxor.u32 %v2857, 2147483648
        %v2874 = vxor.u32 %v2858, 2147483648
        %v2875 = vxor.u32 %v2859, 2147483648
        %v2876 = vxor.u32 %v2860, 2147483648
        %v2877 = vxor.u32 %v2861, 2147483648
        %v2878 = vxor.u32 %v2862, 2147483648
        %v2879 = vxor.u32 %v2863, 2147483648
        %v2880 = vxor.u32 %v2864, 2147483648
        %v2881 = vxor.u32 %v2865, 2147483648
        %v2882 = vxor.u32 %v2866, 2147483648
        %v2883 = vmul.f32 %v2867, 1.442695
        %v2884 = vpow.pop %v2883
        %v2885 = vmul.f32 %v2868, 1.442695
        %v2886 = vpow.pop %v2885
        %v2887 = vmul.f32 %v2869, 1.442695
        %v2888 = vpow.pop %v2887
        %v2889 = vmul.f32 %v2870, 1.442695
        %v2890 = vpow.pop %v2889
        %v2891 = vmul.f32 %v2871, 1.442695
        %v2892 = vpow.pop %v2891
        %v2893 = vmul.f32 %v2872, 1.442695
        %v2894 = vpow.pop %v2893
        %v2895 = vmul.f32 %v2873, 1.442695
        %v2896 = vpow.pop %v2895
        %v2897 = vmul.f32 %v2874, 1.442695
        %v2898 = vpow.pop %v2897
        %v2899 = vmul.f32 %v2875, 1.442695
        %v2900 = vpow.pop %v2899
        %v2901 = vmul.f32 %v2876, 1.442695
        %v2902 = vpow.pop %v2901
        %v2903 = vmul.f32 %v2877, 1.442695
        %v2904 = vpow.pop %v2903
        %v2905 = vmul.f32 %v2878, 1.442695
        %v2906 = vpow.pop %v2905
        %v2907 = vmul.f32 %v2879, 1.442695
        %v2908 = vpow.pop %v2907
        %v2909 = vmul.f32 %v2880, 1.442695
        %v2910 = vpow.pop %v2909
        %v2911 = vmul.f32 %v2881, 1.442695
        %v2912 = vpow.pop %v2911
        %v2913 = vmul.f32 %v2882, 1.442695
        %v2914 = vpow.pop %v2913
        %v2915 = vadd.f32 %v2884, 1.0
        %v2916 = vadd.f32 %v2886, 1.0
        %v2917 = vadd.f32 %v2888, 1.0
        %v2918 = vadd.f32 %v2890, 1.0
        %v2919 = vadd.f32 %v2892, 1.0
        %v2920 = vadd.f32 %v2894, 1.0
        %v2921 = vadd.f32 %v2896, 1.0
        %v2922 = vadd.f32 %v2898, 1.0
        %v2923 = vadd.f32 %v2900, 1.0
        %v2924 = vadd.f32 %v2902, 1.0
        %v2925 = vadd.f32 %v2904, 1.0
        %v2926 = vadd.f32 %v2906, 1.0
        %v2927 = vadd.f32 %v2908, 1.0
        %v2928 = vadd.f32 %v2910, 1.0
        %v2929 = vadd.f32 %v2912, 1.0
        %v2930 = vadd.f32 %v2914, 1.0
        %v2931 = vrcp.pop %v2915
        %v2932 = vmul.f32 %v2915, %v2931
        %v2933 = vsub.f32 1.0, %v2932
        %v2934 = vmul.f32 %v2931, %v2933
        %v2935 = vadd.f32 %v2931, %v2934
        %vm2936 = vweird.f32 %v2915
        %vm2937 = vweird.f32 %v2931
        %vm2938 = vmor %vm2936, %vm2937
        %v2939 = vsel %vm2938, %v2931, %v2935
        %v2940 = vand.u32 2147483647, %v2915
        %vm2941 = vcmp.eq.f32.partialorder %v2940, 8.507059e+37
        %v2942 = vand.u32 %v2915, 2147483648
        %v2943 = vor.u32 1.1754944e-38, %v2942
        %v2944 = vsel %vm2941, %v2943, %v2939
        %v2945 = vmul.f32 1.0, %v2944
        %v2946 = vrcp.pop %v2916
        %v2947 = vmul.f32 %v2916, %v2946
        %v2948 = vsub.f32 1.0, %v2947
        %v2949 = vmul.f32 %v2946, %v2948
        %v2950 = vadd.f32 %v2946, %v2949
        %vm2951 = vweird.f32 %v2916
        %vm2952 = vweird.f32 %v2946
        %vm2953 = vmor %vm2951, %vm2952
        %v2954 = vsel %vm2953, %v2946, %v2950
        %v2955 = vand.u32 2147483647, %v2916
        %vm2956 = vcmp.eq.f32.partialorder %v2955, 8.507059e+37
        %v2957 = vand.u32 %v2916, 2147483648
        %v2958 = vor.u32 1.1754944e-38, %v2957
        %v2959 = vsel %vm2956, %v2958, %v2954
        %v2960 = vmul.f32 1.0, %v2959
        %v2961 = vrcp.pop %v2917
        %v2962 = vmul.f32 %v2917, %v2961
        %v2963 = vsub.f32 1.0, %v2962
        %v2964 = vmul.f32 %v2961, %v2963
        %v2965 = vadd.f32 %v2961, %v2964
        %vm2966 = vweird.f32 %v2917
        %vm2967 = vweird.f32 %v2961
        %vm2968 = vmor %vm2966, %vm2967
        %v2969 = vsel %vm2968, %v2961, %v2965
        %v2970 = vand.u32 2147483647, %v2917
        %vm2971 = vcmp.eq.f32.partialorder %v2970, 8.507059e+37
        %v2972 = vand.u32 %v2917, 2147483648
        %v2973 = vor.u32 1.1754944e-38, %v2972
        %v2974 = vsel %vm2971, %v2973, %v2969
        %v2975 = vmul.f32 1.0, %v2974
        %v2976 = vrcp.pop %v2918
        %v2977 = vmul.f32 %v2918, %v2976
        %v2978 = vsub.f32 1.0, %v2977
        %v2979 = vmul.f32 %v2976, %v2978
        %v2980 = vadd.f32 %v2976, %v2979
        %vm2981 = vweird.f32 %v2918
        %vm2982 = vweird.f32 %v2976
        %vm2983 = vmor %vm2981, %vm2982
        %v2984 = vsel %vm2983, %v2976, %v2980
        %v2985 = vand.u32 2147483647, %v2918
        %vm2986 = vcmp.eq.f32.partialorder %v2985, 8.507059e+37
        %v2987 = vand.u32 %v2918, 2147483648
        %v2988 = vor.u32 1.1754944e-38, %v2987
        %v2989 = vsel %vm2986, %v2988, %v2984
        %v2990 = vmul.f32 1.0, %v2989
        %v2991 = vrcp.pop %v2919
        %v2992 = vmul.f32 %v2919, %v2991
        %v2993 = vsub.f32 1.0, %v2992
        %v2994 = vmul.f32 %v2991, %v2993
        %v2995 = vadd.f32 %v2991, %v2994
        %vm2996 = vweird.f32 %v2919
        %vm2997 = vweird.f32 %v2991
        %vm2998 = vmor %vm2996, %vm2997
        %v2999 = vsel %vm2998, %v2991, %v2995
        %v3000 = vand.u32 2147483647, %v2919
        %vm3001 = vcmp.eq.f32.partialorder %v3000, 8.507059e+37
        %v3002 = vand.u32 %v2919, 2147483648
        %v3003 = vor.u32 1.1754944e-38, %v3002
        %v3004 = vsel %vm3001, %v3003, %v2999
        %v3005 = vmul.f32 1.0, %v3004
        %v3006 = vrcp.pop %v2920
        %v3007 = vmul.f32 %v2920, %v3006
        %v3008 = vsub.f32 1.0, %v3007
        %v3009 = vmul.f32 %v3006, %v3008
        %v3010 = vadd.f32 %v3006, %v3009
        %vm3011 = vweird.f32 %v2920
        %vm3012 = vweird.f32 %v3006
        %vm3013 = vmor %vm3011, %vm3012
        %v3014 = vsel %vm3013, %v3006, %v3010
        %v3015 = vand.u32 2147483647, %v2920
        %vm3016 = vcmp.eq.f32.partialorder %v3015, 8.507059e+37
        %v3017 = vand.u32 %v2920, 2147483648
        %v3018 = vor.u32 1.1754944e-38, %v3017
        %v3019 = vsel %vm3016, %v3018, %v3014
        %v3020 = vmul.f32 1.0, %v3019
        %v3021 = vrcp.pop %v2921
        %v3022 = vmul.f32 %v2921, %v3021
        %v3023 = vsub.f32 1.0, %v3022
        %v3024 = vmul.f32 %v3021, %v3023
        %v3025 = vadd.f32 %v3021, %v3024
        %vm3026 = vweird.f32 %v2921
        %vm3027 = vweird.f32 %v3021
        %vm3028 = vmor %vm3026, %vm3027
        %v3029 = vsel %vm3028, %v3021, %v3025
        %v3030 = vand.u32 2147483647, %v2921
        %vm3031 = vcmp.eq.f32.partialorder %v3030, 8.507059e+37
        %v3032 = vand.u32 %v2921, 2147483648
        %v3033 = vor.u32 1.1754944e-38, %v3032
        %v3034 = vsel %vm3031, %v3033, %v3029
        %v3035 = vmul.f32 1.0, %v3034
        %v3036 = vrcp.pop %v2922
        %v3037 = vmul.f32 %v2922, %v3036
        %v3038 = vsub.f32 1.0, %v3037
        %v3039 = vmul.f32 %v3036, %v3038
        %v3040 = vadd.f32 %v3036, %v3039
        %vm3041 = vweird.f32 %v2922
        %vm3042 = vweird.f32 %v3036
        %vm3043 = vmor %vm3041, %vm3042
        %v3044 = vsel %vm3043, %v3036, %v3040
        %v3045 = vand.u32 2147483647, %v2922
        %vm3046 = vcmp.eq.f32.partialorder %v3045, 8.507059e+37
        %v3047 = vand.u32 %v2922, 2147483648
        %v3048 = vor.u32 1.1754944e-38, %v3047
        %v3049 = vsel %vm3046, %v3048, %v3044
        %v3050 = vmul.f32 1.0, %v3049
        %v3051 = vrcp.pop %v2923
        %v3052 = vmul.f32 %v2923, %v3051
        %v3053 = vsub.f32 1.0, %v3052
        %v3054 = vmul.f32 %v3051, %v3053
        %v3055 = vadd.f32 %v3051, %v3054
        %vm3056 = vweird.f32 %v2923
        %vm3057 = vweird.f32 %v3051
        %vm3058 = vmor %vm3056, %vm3057
        %v3059 = vsel %vm3058, %v3051, %v3055
        %v3060 = vand.u32 2147483647, %v2923
        %vm3061 = vcmp.eq.f32.partialorder %v3060, 8.507059e+37
        %v3062 = vand.u32 %v2923, 2147483648
        %v3063 = vor.u32 1.1754944e-38, %v3062
        %v3064 = vsel %vm3061, %v3063, %v3059
        %v3065 = vmul.f32 1.0, %v3064
        %v3066 = vrcp.pop %v2924
        %v3067 = vmul.f32 %v2924, %v3066
        %v3068 = vsub.f32 1.0, %v3067
        %v3069 = vmul.f32 %v3066, %v3068
        %v3070 = vadd.f32 %v3066, %v3069
        %vm3071 = vweird.f32 %v2924
        %vm3072 = vweird.f32 %v3066
        %vm3073 = vmor %vm3071, %vm3072
        %v3074 = vsel %vm3073, %v3066, %v3070
        %v3075 = vand.u32 2147483647, %v2924
        %vm3076 = vcmp.eq.f32.partialorder %v3075, 8.507059e+37
        %v3077 = vand.u32 %v2924, 2147483648
        %v3078 = vor.u32 1.1754944e-38, %v3077
        %v3079 = vsel %vm3076, %v3078, %v3074
        %v3080 = vmul.f32 1.0, %v3079
        %v3081 = vrcp.pop %v2925
        %v3082 = vmul.f32 %v2925, %v3081
        %v3083 = vsub.f32 1.0, %v3082
        %v3084 = vmul.f32 %v3081, %v3083
        %v3085 = vadd.f32 %v3081, %v3084
        %vm3086 = vweird.f32 %v2925
        %vm3087 = vweird.f32 %v3081
        %vm3088 = vmor %vm3086, %vm3087
        %v3089 = vsel %vm3088, %v3081, %v3085
        %v3090 = vand.u32 2147483647, %v2925
        %vm3091 = vcmp.eq.f32.partialorder %v3090, 8.507059e+37
        %v3092 = vand.u32 %v2925, 2147483648
        %v3093 = vor.u32 1.1754944e-38, %v3092
        %v3094 = vsel %vm3091, %v3093, %v3089
        %v3095 = vmul.f32 1.0, %v3094
        %v3096 = vrcp.pop %v2926
        %v3097 = vmul.f32 %v2926, %v3096
        %v3098 = vsub.f32 1.0, %v3097
        %v3099 = vmul.f32 %v3096, %v3098
        %v3100 = vadd.f32 %v3096, %v3099
        %vm3101 = vweird.f32 %v2926
        %vm3102 = vweird.f32 %v3096
        %vm3103 = vmor %vm3101, %vm3102
        %v3104 = vsel %vm3103, %v3096, %v3100
        %v3105 = vand.u32 2147483647, %v2926
        %vm3106 = vcmp.eq.f32.partialorder %v3105, 8.507059e+37
        %v3107 = vand.u32 %v2926, 2147483648
        %v3108 = vor.u32 1.1754944e-38, %v3107
        %v3109 = vsel %vm3106, %v3108, %v3104
        %v3110 = vmul.f32 1.0, %v3109
        %v3111 = vrcp.pop %v2927
        %v3112 = vmul.f32 %v2927, %v3111
        %v3113 = vsub.f32 1.0, %v3112
        %v3114 = vmul.f32 %v3111, %v3113
        %v3115 = vadd.f32 %v3111, %v3114
        %vm3116 = vweird.f32 %v2927
        %vm3117 = vweird.f32 %v3111
        %vm3118 = vmor %vm3116, %vm3117
        %v3119 = vsel %vm3118, %v3111, %v3115
        %v3120 = vand.u32 2147483647, %v2927
        %vm3121 = vcmp.eq.f32.partialorder %v3120, 8.507059e+37
        %v3122 = vand.u32 %v2927, 2147483648
        %v3123 = vor.u32 1.1754944e-38, %v3122
        %v3124 = vsel %vm3121, %v3123, %v3119
        %v3125 = vmul.f32 1.0, %v3124
        %v3126 = vrcp.pop %v2928
        %v3127 = vmul.f32 %v2928, %v3126
        %v3128 = vsub.f32 1.0, %v3127
        %v3129 = vmul.f32 %v3126, %v3128
        %v3130 = vadd.f32 %v3126, %v3129
        %vm3131 = vweird.f32 %v2928
        %vm3132 = vweird.f32 %v3126
        %vm3133 = vmor %vm3131, %vm3132
        %v3134 = vsel %vm3133, %v3126, %v3130
        %v3135 = vand.u32 2147483647, %v2928
        %vm3136 = vcmp.eq.f32.partialorder %v3135, 8.507059e+37
        %v3137 = vand.u32 %v2928, 2147483648
        %v3138 = vor.u32 1.1754944e-38, %v3137
        %v3139 = vsel %vm3136, %v3138, %v3134
        %v3140 = vmul.f32 1.0, %v3139
        %v3141 = vrcp.pop %v2929
        %v3142 = vmul.f32 %v2929, %v3141
        %v3143 = vsub.f32 1.0, %v3142
        %v3144 = vmul.f32 %v3141, %v3143
        %v3145 = vadd.f32 %v3141, %v3144
        %vm3146 = vweird.f32 %v2929
        %vm3147 = vweird.f32 %v3141
        %vm3148 = vmor %vm3146, %vm3147
        %v3149 = vsel %vm3148, %v3141, %v3145
        %v3150 = vand.u32 2147483647, %v2929
        %vm3151 = vcmp.eq.f32.partialorder %v3150, 8.507059e+37
        %v3152 = vand.u32 %v2929, 2147483648
        %v3153 = vor.u32 1.1754944e-38, %v3152
        %v3154 = vsel %vm3151, %v3153, %v3149
        %v3155 = vmul.f32 1.0, %v3154
        %v3156 = vrcp.pop %v2930
        %v3157 = vmul.f32 %v2930, %v3156
        %v3158 = vsub.f32 1.0, %v3157
        %v3159 = vmul.f32 %v3156, %v3158
        %v3160 = vadd.f32 %v3156, %v3159
        %vm3161 = vweird.f32 %v2930
        %vm3162 = vweird.f32 %v3156
        %vm3163 = vmor %vm3161, %vm3162
        %v3164 = vsel %vm3163, %v3156, %v3160
        %v3165 = vand.u32 2147483647, %v2930
        %vm3166 = vcmp.eq.f32.partialorder %v3165, 8.507059e+37
        %v3167 = vand.u32 %v2930, 2147483648
        %v3168 = vor.u32 1.1754944e-38, %v3167
        %v3169 = vsel %vm3166, %v3168, %v3164
        %v3170 = vmul.f32 1.0, %v3169
        %v3171 = vmul.f32 %v2945, %v2554
        %v3172 = vmul.f32 %v2960, %v2556
        %v3173 = vmul.f32 %v2975, %v2559
        %v3174 = vmul.f32 %v2990, %v2561
        %v3175 = vmul.f32 %v3005, %v2601
        %v3176 = vmul.f32 %v3020, %v2603
        %v3177 = vmul.f32 %v3035, %v2606
        %v3178 = vmul.f32 %v3050, %v2608
        %v3179 = vmul.f32 %v3065, %v2648
        %v3180 = vmul.f32 %v3080, %v2650
        %v3181 = vmul.f32 %v3095, %v2653
        %v3182 = vmul.f32 %v3110, %v2655
        %v3183 = vmul.f32 %v3125, %v2695
        %v3184 = vmul.f32 %v3140, %v2697
        %v3185 = vmul.f32 %v3155, %v2700
        %v3186 = vmul.f32 %v3170, %v2702
        %v3187 = vsub.f32 1.0, %v2945
        %v3188 = vsub.f32 1.0, %v2960
        %v3189 = vsub.f32 1.0, %v2975
        %v3190 = vsub.f32 1.0, %v2990
        %v3191 = vsub.f32 1.0, %v3005
        %v3192 = vsub.f32 1.0, %v3020
        %v3193 = vsub.f32 1.0, %v3035
        %v3194 = vsub.f32 1.0, %v3050
        %v3195 = vsub.f32 1.0, %v3065
        %v3196 = vsub.f32 1.0, %v3080
        %v3197 = vsub.f32 1.0, %v3095
        %v3198 = vsub.f32 1.0, %v3110
        %v3199 = vsub.f32 1.0, %v3125
        %v3200 = vsub.f32 1.0, %v3140
        %v3201 = vsub.f32 1.0, %v3155
        %v3202 = vsub.f32 1.0, %v3170
        %v3203 = vmul.f32 %v3187, %v1910
        %v3204 = vmul.f32 %v3188, %v1911
        %v3205 = vmul.f32 %v3189, %v1912
        %v3206 = vmul.f32 %v3190, %v1913
        %v3207 = vmul.f32 %v3191, %v1914
        %v3208 = vmul.f32 %v3192, %v1915
        %v3209 = vmul.f32 %v3193, %v1916
        %v3210 = vmul.f32 %v3194, %v1917
        %v3211 = vmul.f32 %v3195, %v1918
        %v3212 = vmul.f32 %v3196, %v1919
        %v3213 = vmul.f32 %v3197, %v1920
        %v3214 = vmul.f32 %v3198, %v1921
        %v3215 = vmul.f32 %v3199, %v1922
        %v3216 = vmul.f32 %v3200, %v1923
        %v3217 = vmul.f32 %v3201, %v1924
        %v3218 = vmul.f32 %v3202, %v1925
        %v3219 = vadd.f32 %v3171, %v3203
        %v3220 = vadd.f32 %v3172, %v3204
        %v3221 = vadd.f32 %v3173, %v3205
        %v3222 = vadd.f32 %v3174, %v3206
        %v3223 = vadd.f32 %v3175, %v3207
        %v3224 = vadd.f32 %v3176, %v3208
        %v3225 = vadd.f32 %v3177, %v3209
        %v3226 = vadd.f32 %v3178, %v3210
        %v3227 = vadd.f32 %v3179, %v3211
        %v3228 = vadd.f32 %v3180, %v3212
        %v3229 = vadd.f32 %v3181, %v3213
        %v3230 = vadd.f32 %v3182, %v3214
        %v3231 = vadd.f32 %v3183, %v3215
        %v3232 = vadd.f32 %v3184, %v3216
        %v3233 = vadd.f32 %v3185, %v3217
        %v3234 = vadd.f32 %v3186, %v3218
        %v3235 = vadd.f32 %v3219, %v1910
        %v3236 = vadd.f32 %v3220, %v1911
        %v3237 = vadd.f32 %v3221, %v1912
        %v3238 = vadd.f32 %v3222, %v1913
        %v3239 = vadd.f32 %v3223, %v1914
        %v3240 = vadd.f32 %v3224, %v1915
        %v3241 = vadd.f32 %v3225, %v1916
        %v3242 = vadd.f32 %v3226, %v1917
        %v3243 = vadd.f32 %v3227, %v1918
        %v3244 = vadd.f32 %v3228, %v1919
        %v3245 = vadd.f32 %v3229, %v1920
        %v3246 = vadd.f32 %v3230, %v1921
        %v3247 = vadd.f32 %v3231, %v1922
        %v3248 = vadd.f32 %v3232, %v1923
        %v3249 = vadd.f32 %v3233, %v1924
        %v3250 = vadd.f32 %v3234, %v1925
        %v3251 = vpack.c.bf16 %v3236, %v3235
        %v3252 = vpack.c.bf16 %v3238, %v3237
        %v3253 = vpack.c.bf16 %v3240, %v3239
        %v3254 = vpack.c.bf16 %v3242, %v3241
        %v3255 = vpack.c.bf16 %v3244, %v3243
        %v3256 = vpack.c.bf16 %v3246, %v3245
        %v3257 = vpack.c.bf16 %v3248, %v3247
        %v3258 = vpack.c.bf16 %v3250, %v3249
        %v3259 = vld [vmem:[%s2 + $0x50] sm:$0xf]
        %v3260 = vld [vmem:[%s2 + $0x54] sm:$0xf]
        %v3261 = vld [vmem:[%s2 + $0x58] sm:$0xf]
        %v3262 = vld [vmem:[%s2 + $0x5c] sm:$0xf]
        %v3263 = vld [vmem:[#allocation8 + $0x4] sm:$0x1]
        %v3264 = vperm.slane %v3263, 0
        %v3269 = vunpack.c.l.b16 %v3259
        %v3270 = vunpack.c.l.b16 %v3260
        %v3271 = vunpack.c.l.b16 %v3261
        %v3272 = vunpack.c.l.b16 %v3262
        %v3273 = vpack.c.b16 %v3270, %v3269
        %v3274 = vpack.c.b16 %v3272, %v3271
        %v3278 = vsel %vm492, %v3251, 0
        %v3281 = vsel %vm492, %v3252, 0
        %v3284 = vsel %vm492, %v3253, 0
        %v3287 = vsel %vm492, %v3254, 0
        %v3290 = vsel %vm492, %v3255, 0
        %v3293 = vsel %vm492, %v3256, 0
        %v3296 = vsel %vm492, %v3257, 0
        %v3299 = vsel %vm492, %v3258, 0
        %3301 = vmatpush.bf16.msra.mxu0 0
        %3302 = vmatpush.bf16.msra.mxu0 0
        %3303 = vmatpush.bf16.msra.mxu0 0
        %3304 = vmatpush.bf16.msra.mxu0 0
        %3305 = vmatpush.bf16.msra.mxu0 0
        %3306 = vmatpush.bf16.msra.mxu0 0
        %3307 = vmatpush.bf16.msra.mxu0 %v3274
        %3308 = vmatpush.bf16.msra.mxu0 %v3273
        %3309 = vmatmul.bf16.gmra.mxu0 %v3278
        %v3310 = vpop.f32.mrf.mxu0
        %v3311 = vadd.f32 %v3264, %v3310
        %v3312 = vpop.f32.mrf.mxu0
        %v3313 = vadd.f32 %v3264, %v3312
        %3314 = vmatmul.bf16.gmra.mxu0 %v3281
        %v3315 = vpop.f32.mrf.mxu0
        %v3316 = vadd.f32 %v3264, %v3315
        %v3317 = vpop.f32.mrf.mxu0
        %v3318 = vadd.f32 %v3264, %v3317
        %3319 = vmatmul.bf16.gmra.mxu0 %v3284
        %v3320 = vpop.f32.mrf.mxu0
        %v3321 = vadd.f32 %v3264, %v3320
        %v3322 = vpop.f32.mrf.mxu0
        %v3323 = vadd.f32 %v3264, %v3322
        %3324 = vmatmul.bf16.gmra.mxu0 %v3287
        %v3325 = vpop.f32.mrf.mxu0
        %v3326 = vadd.f32 %v3264, %v3325
        %v3327 = vpop.f32.mrf.mxu0
        %v3328 = vadd.f32 %v3264, %v3327
        %3329 = vmatmul.bf16.gmra.mxu0 %v3290
        %v3330 = vpop.f32.mrf.mxu0
        %v3331 = vadd.f32 %v3264, %v3330
        %v3332 = vpop.f32.mrf.mxu0
        %v3333 = vadd.f32 %v3264, %v3332
        %3334 = vmatmul.bf16.gmra.mxu0 %v3293
        %v3335 = vpop.f32.mrf.mxu0
        %v3336 = vadd.f32 %v3264, %v3335
        %v3337 = vpop.f32.mrf.mxu0
        %v3338 = vadd.f32 %v3264, %v3337
        %3339 = vmatmul.bf16.gmra.mxu0 %v3296
        %v3340 = vpop.f32.mrf.mxu0
        %v3341 = vadd.f32 %v3264, %v3340
        %v3342 = vpop.f32.mrf.mxu0
        %v3343 = vadd.f32 %v3264, %v3342
        %3344 = vmatmul.bf16.gmra.mxu0 %v3299
        %v3345 = vpop.f32.mrf.mxu0
        %v3346 = vadd.f32 %v3264, %v3345
        %v3347 = vpop.f32.mrf.mxu0
        %v3348 = vadd.f32 %v3264, %v3347
        %3349 = vdwg.mxu0
        %v3350 = vld [vmem:[#allocation9 + $0x4] sm:$0x1]
        %v3351 = vperm.slane %v3350, 0
        %v3352 = vmul.f32 %v1910, %v3351
        %v3353 = vmul.f32 %v1911, %v3351
        %v3354 = vmul.f32 %v1912, %v3351
        %v3355 = vmul.f32 %v1913, %v3351
        %v3356 = vmul.f32 %v1914, %v3351
        %v3357 = vmul.f32 %v1915, %v3351
        %v3358 = vmul.f32 %v1916, %v3351
        %v3359 = vmul.f32 %v1917, %v3351
        %v3360 = vmul.f32 %v1918, %v3351
        %v3361 = vmul.f32 %v1919, %v3351
        %v3362 = vmul.f32 %v1920, %v3351
        %v3363 = vmul.f32 %v1921, %v3351
        %v3364 = vmul.f32 %v1922, %v3351
        %v3365 = vmul.f32 %v1923, %v3351
        %v3366 = vmul.f32 %v1924, %v3351
        %v3367 = vmul.f32 %v1925, %v3351
        %v3368 = vsel %vm492, %v3352, 0.0
        %3369 = vadd.xlane.f32.xlu0 %v3368
        %v3370 = vpop.xlane.xlu0 %3369
        %v3371 = vsel %vm492, %v3353, 0.0
        %3372 = vadd.xlane.f32.xlu0 %v3371
        %v3373 = vpop.xlane.xlu0 %3372
        %v3374 = vsel %vm492, %v3354, 0.0
        %3375 = vadd.xlane.f32.xlu0 %v3374
        %v3376 = vpop.xlane.xlu0 %3375
        %v3377 = vsel %vm492, %v3355, 0.0
        %3378 = vadd.xlane.f32.xlu0 %v3377
        %v3379 = vpop.xlane.xlu0 %3378
        %v3380 = vsel %vm492, %v3356, 0.0
        %3381 = vadd.xlane.f32.xlu0 %v3380
        %v3382 = vpop.xlane.xlu0 %3381
        %v3383 = vsel %vm492, %v3357, 0.0
        %3384 = vadd.xlane.f32.xlu0 %v3383
        %v3385 = vpop.xlane.xlu0 %3384
        %v3386 = vsel %vm492, %v3358, 0.0
        %3387 = vadd.xlane.f32.xlu0 %v3386
        %v3388 = vpop.xlane.xlu0 %3387
        %v3389 = vsel %vm492, %v3359, 0.0
        %3390 = vadd.xlane.f32.xlu0 %v3389
        %v3391 = vpop.xlane.xlu0 %3390
        %v3392 = vsel %vm492, %v3360, 0.0
        %3393 = vadd.xlane.f32.xlu0 %v3392
        %v3394 = vpop.xlane.xlu0 %3393
        %v3395 = vsel %vm492, %v3361, 0.0
        %3396 = vadd.xlane.f32.xlu0 %v3395
        %v3397 = vpop.xlane.xlu0 %3396
        %v3398 = vsel %vm492, %v3362, 0.0
        %3399 = vadd.xlane.f32.xlu0 %v3398
        %v3400 = vpop.xlane.xlu0 %3399
        %v3401 = vsel %vm492, %v3363, 0.0
        %3402 = vadd.xlane.f32.xlu0 %v3401
        %v3403 = vpop.xlane.xlu0 %3402
        %v3404 = vsel %vm492, %v3364, 0.0
        %3405 = vadd.xlane.f32.xlu0 %v3404
        %v3406 = vpop.xlane.xlu0 %3405
        %v3407 = vsel %vm492, %v3365, 0.0
        %3408 = vadd.xlane.f32.xlu0 %v3407
        %v3409 = vpop.xlane.xlu0 %3408
        %v3410 = vsel %vm492, %v3366, 0.0
        %3411 = vadd.xlane.f32.xlu0 %v3410
        %v3412 = vpop.xlane.xlu0 %3411
        %v3413 = vsel %vm492, %v3367, 0.0
        %3414 = vadd.xlane.f32.xlu0 %v3413
        %v3415 = vpop.xlane.xlu0 %3414
        %v3416 = vld [vmem:[#allocation9 + $0x5] sm:$0x1]
        %v3417 = vperm.slane %v3416, 0
        %v3418 = vmul.f32 %v3235, %v3417
        %v3419 = vmul.f32 %v3236, %v3417
        %v3420 = vmul.f32 %v3237, %v3417
        %v3421 = vmul.f32 %v3238, %v3417
        %v3422 = vmul.f32 %v3239, %v3417
        %v3423 = vmul.f32 %v3240, %v3417
        %v3424 = vmul.f32 %v3241, %v3417
        %v3425 = vmul.f32 %v3242, %v3417
        %v3426 = vmul.f32 %v3243, %v3417
        %v3427 = vmul.f32 %v3244, %v3417
        %v3428 = vmul.f32 %v3245, %v3417
        %v3429 = vmul.f32 %v3246, %v3417
        %v3430 = vmul.f32 %v3247, %v3417
        %v3431 = vmul.f32 %v3248, %v3417
        %v3432 = vmul.f32 %v3249, %v3417
        %v3433 = vmul.f32 %v3250, %v3417
        %v3434 = vsel %vm492, %v3418, 0.0
        %3435 = vadd.xlane.f32.xlu0 %v3434
        %v3436 = vpop.xlane.xlu0 %3435
        %v3437 = vsel %vm492, %v3419, 0.0
        %3438 = vadd.xlane.f32.xlu0 %v3437
        %v3439 = vpop.xlane.xlu0 %3438
        %v3440 = vsel %vm492, %v3420, 0.0
        %3441 = vadd.xlane.f32.xlu0 %v3440
        %v3442 = vpop.xlane.xlu0 %3441
        %v3443 = vsel %vm492, %v3421, 0.0
        %3444 = vadd.xlane.f32.xlu0 %v3443
        %v3445 = vpop.xlane.xlu0 %3444
        %v3446 = vsel %vm492, %v3422, 0.0
        %3447 = vadd.xlane.f32.xlu0 %v3446
        %v3448 = vpop.xlane.xlu0 %3447
        %v3449 = vsel %vm492, %v3423, 0.0
        %3450 = vadd.xlane.f32.xlu0 %v3449
        %v3451 = vpop.xlane.xlu0 %3450
        %v3452 = vsel %vm492, %v3424, 0.0
        %3453 = vadd.xlane.f32.xlu0 %v3452
        %v3454 = vpop.xlane.xlu0 %3453
        %v3455 = vsel %vm492, %v3425, 0.0
        %3456 = vadd.xlane.f32.xlu0 %v3455
        %v3457 = vpop.xlane.xlu0 %3456
        %v3458 = vsel %vm492, %v3426, 0.0
        %3459 = vadd.xlane.f32.xlu0 %v3458
        %v3460 = vpop.xlane.xlu0 %3459
        %v3461 = vsel %vm492, %v3427, 0.0
        %3462 = vadd.xlane.f32.xlu0 %v3461
        %v3463 = vpop.xlane.xlu0 %3462
        %v3464 = vsel %vm492, %v3428, 0.0
        %3465 = vadd.xlane.f32.xlu0 %v3464
        %v3466 = vpop.xlane.xlu0 %3465
        %v3467 = vsel %vm492, %v3429, 0.0
        %3468 = vadd.xlane.f32.xlu0 %v3467
        %v3469 = vpop.xlane.xlu0 %3468
        %v3470 = vsel %vm492, %v3430, 0.0
        %3471 = vadd.xlane.f32.xlu0 %v3470
        %v3472 = vpop.xlane.xlu0 %3471
        %v3473 = vsel %vm492, %v3431, 0.0
        %3474 = vadd.xlane.f32.xlu0 %v3473
        %v3475 = vpop.xlane.xlu0 %3474
        %v3476 = vsel %vm492, %v3432, 0.0
        %3477 = vadd.xlane.f32.xlu0 %v3476
        %v3478 = vpop.xlane.xlu0 %3477
        %v3479 = vsel %vm492, %v3433, 0.0
        %3480 = vadd.xlane.f32.xlu0 %v3479
        %v3481 = vpop.xlane.xlu0 %3480
        %v3482 = vld [vmem:[#allocation9 + $0x6] sm:$0x1]
        %v3483 = vld [vmem:[#allocation9 + $0x7] sm:$0x1]
        %s3484 = sld [smem:[#allocation11 + $0x1]]
        %3485 = vxpose.xlu0.b32.start [1/16] %v3436, 128
        %3486 = vxpose.xlu0.b32.cont [2/16] %v3439, 128
        %3487 = vxpose.xlu0.b32.cont [3/16] %v3442, 128
        %3488 = vxpose.xlu0.b32.cont [4/16] %v3445, 128
        %3489 = vxpose.xlu0.b32.cont [5/16] 0.0, 128
        %3490 = vxpose.xlu0.b32.cont [6/16] 0.0, 128
        %3491 = vxpose.xlu0.b32.cont [7/16] 0.0, 128
        %3492 = vxpose.xlu0.b32.cont [8/16] 0.0, 128
        %3493 = vxpose.xlu0.b32.cont [9/16] 0.0, 128
        %3494 = vxpose.xlu0.b32.cont [10/16] 0.0, 128
        %3495 = vxpose.xlu0.b32.cont [11/16] 0.0, 128
        %3496 = vxpose.xlu0.b32.cont [12/16] 0.0, 128
        %3497 = vxpose.xlu0.b32.cont [13/16] 0.0, 128
        %3498 = vxpose.xlu0.b32.cont [14/16] 0.0, 128
        %3499 = vxpose.xlu0.b32.cont [15/16] 0.0, 128
        %3500 = vxpose.xlu0.b32.end [16/16] 0.0, 128
        %v3501 = vpop.trf.xlu0
        %v3502 = vpop.trf.xlu0
        %v3503 = vpop.trf.xlu0
        %v3504 = vpop.trf.xlu0
        %v3505 = vpop.trf.xlu0
        %v3506 = vpop.trf.xlu0
        %v3507 = vpop.trf.xlu0
        %v3508 = vpop.trf.xlu0
        %v3509 = vpop.trf.xlu0
        %v3510 = vpop.trf.xlu0
        %v3511 = vpop.trf.xlu0
        %v3512 = vpop.trf.xlu0
        %v3513 = vpop.trf.xlu0
        %v3514 = vpop.trf.xlu0
        %v3515 = vpop.trf.xlu0
        %v3516 = vpop.trf.xlu0
        %3517 = vxpose.xlu0.b32.start [1/16] %v3448, 128
        %3518 = vxpose.xlu0.b32.cont [2/16] %v3451, 128
        %3519 = vxpose.xlu0.b32.cont [3/16] %v3454, 128
        %3520 = vxpose.xlu0.b32.cont [4/16] %v3457, 128
        %3521 = vxpose.xlu0.b32.cont [5/16] 0.0, 128
        %3522 = vxpose.xlu0.b32.cont [6/16] 0.0, 128
        %3523 = vxpose.xlu0.b32.cont [7/16] 0.0, 128
        %3524 = vxpose.xlu0.b32.cont [8/16] 0.0, 128
        %3525 = vxpose.xlu0.b32.cont [9/16] 0.0, 128
        %3526 = vxpose.xlu0.b32.cont [10/16] 0.0, 128
        %3527 = vxpose.xlu0.b32.cont [11/16] 0.0, 128
        %3528 = vxpose.xlu0.b32.cont [12/16] 0.0, 128
        %3529 = vxpose.xlu0.b32.cont [13/16] 0.0, 128
        %3530 = vxpose.xlu0.b32.cont [14/16] 0.0, 128
        %3531 = vxpose.xlu0.b32.cont [15/16] 0.0, 128
        %3532 = vxpose.xlu0.b32.end [16/16] 0.0, 128
        %v3533 = vpop.trf.xlu0
        %v3534 = vpop.trf.xlu0
        %v3535 = vpop.trf.xlu0
        %v3536 = vpop.trf.xlu0
        %v3537 = vpop.trf.xlu0
        %v3538 = vpop.trf.xlu0
        %v3539 = vpop.trf.xlu0
        %v3540 = vpop.trf.xlu0
        %v3541 = vpop.trf.xlu0
        %v3542 = vpop.trf.xlu0
        %v3543 = vpop.trf.xlu0
        %v3544 = vpop.trf.xlu0
        %v3545 = vpop.trf.xlu0
        %v3546 = vpop.trf.xlu0
        %v3547 = vpop.trf.xlu0
        %v3548 = vpop.trf.xlu0
        %3549 = vxpose.xlu0.b32.start [1/16] %v3460, 128
        %3550 = vxpose.xlu0.b32.cont [2/16] %v3463, 128
        %3551 = vxpose.xlu0.b32.cont [3/16] %v3466, 128
        %3552 = vxpose.xlu0.b32.cont [4/16] %v3469, 128
        %3553 = vxpose.xlu0.b32.cont [5/16] 0.0, 128
        %3554 = vxpose.xlu0.b32.cont [6/16] 0.0, 128
        %3555 = vxpose.xlu0.b32.cont [7/16] 0.0, 128
        %3556 = vxpose.xlu0.b32.cont [8/16] 0.0, 128
        %3557 = vxpose.xlu0.b32.cont [9/16] 0.0, 128
        %3558 = vxpose.xlu0.b32.cont [10/16] 0.0, 128
        %3559 = vxpose.xlu0.b32.cont [11/16] 0.0, 128
        %3560 = vxpose.xlu0.b32.cont [12/16] 0.0, 128
        %3561 = vxpose.xlu0.b32.cont [13/16] 0.0, 128
        %3562 = vxpose.xlu0.b32.cont [14/16] 0.0, 128
        %3563 = vxpose.xlu0.b32.cont [15/16] 0.0, 128
        %3564 = vxpose.xlu0.b32.end [16/16] 0.0, 128
        %v3565 = vpop.trf.xlu0
        %v3566 = vpop.trf.xlu0
        %v3567 = vpop.trf.xlu0
        %v3568 = vpop.trf.xlu0
        %v3569 = vpop.trf.xlu0
        %v3570 = vpop.trf.xlu0
        %v3571 = vpop.trf.xlu0
        %v3572 = vpop.trf.xlu0
        %v3573 = vpop.trf.xlu0
        %v3574 = vpop.trf.xlu0
        %v3575 = vpop.trf.xlu0
        %v3576 = vpop.trf.xlu0
        %v3577 = vpop.trf.xlu0
        %v3578 = vpop.trf.xlu0
        %v3579 = vpop.trf.xlu0
        %v3580 = vpop.trf.xlu0
        %3581 = vxpose.xlu0.b32.start [1/16] %v3472, 128
        %3582 = vxpose.xlu0.b32.cont [2/16] %v3475, 128
        %3583 = vxpose.xlu0.b32.cont [3/16] %v3478, 128
        %3584 = vxpose.xlu0.b32.cont [4/16] %v3481, 128
        %3585 = vxpose.xlu0.b32.cont [5/16] 0.0, 128
        %3586 = vxpose.xlu0.b32.cont [6/16] 0.0, 128
        %3587 = vxpose.xlu0.b32.cont [7/16] 0.0, 128
        %3588 = vxpose.xlu0.b32.cont [8/16] 0.0, 128
        %3589 = vxpose.xlu0.b32.cont [9/16] 0.0, 128
        %3590 = vxpose.xlu0.b32.cont [10/16] 0.0, 128
        %3591 = vxpose.xlu0.b32.cont [11/16] 0.0, 128
        %3592 = vxpose.xlu0.b32.cont [12/16] 0.0, 128
        %3593 = vxpose.xlu0.b32.cont [13/16] 0.0, 128
        %3594 = vxpose.xlu0.b32.cont [14/16] 0.0, 128
        %3595 = vxpose.xlu0.b32.cont [15/16] 0.0, 128
        %3596 = vxpose.xlu0.b32.end [16/16] 0.0, 128
        %v3597 = vpop.trf.xlu0
        %v3598 = vpop.trf.xlu0
        %v3599 = vpop.trf.xlu0
        %v3600 = vpop.trf.xlu0
        %v3601 = vpop.trf.xlu0
        %v3602 = vpop.trf.xlu0
        %v3603 = vpop.trf.xlu0
        %v3604 = vpop.trf.xlu0
        %v3605 = vpop.trf.xlu0
        %v3606 = vpop.trf.xlu0
        %v3607 = vpop.trf.xlu0
        %v3608 = vpop.trf.xlu0
        %v3609 = vpop.trf.xlu0
        %v3610 = vpop.trf.xlu0
        %v3611 = vpop.trf.xlu0
        %v3612 = vpop.trf.xlu0
        %v3613 = vperm.slane %v3501, 0
        %v3614 = vperm.slane %v3533, 0
        %v3615 = vperm.slane %v3565, 0
        %v3616 = vperm.slane %v3597, 0
        %v3617 = vadd.f32 %v3370, %v3613
        %v3618 = vadd.f32 %v3373, %v3613
        %v3619 = vadd.f32 %v3376, %v3613
        %v3620 = vadd.f32 %v3379, %v3613
        %v3621 = vadd.f32 %v3382, %v3614
        %v3622 = vadd.f32 %v3385, %v3614
        %v3623 = vadd.f32 %v3388, %v3614
        %v3624 = vadd.f32 %v3391, %v3614
        %v3625 = vadd.f32 %v3394, %v3615
        %v3626 = vadd.f32 %v3397, %v3615
        %v3627 = vadd.f32 %v3400, %v3615
        %v3628 = vadd.f32 %v3403, %v3615
        %v3629 = vadd.f32 %v3406, %v3616
        %v3630 = vadd.f32 %v3409, %v3616
        %v3631 = vadd.f32 %v3412, %v3616
        %v3632 = vadd.f32 %v3415, %v3616
        %v3633 = vsel %vm492, %v3617, -inf
        %3634 = vmax.xlane.f32.xlu0 %v3633
        %v3635 = vpop.xlane.xlu0 %3634
        %v3636 = vsel %vm492, %v3618, -inf
        %3637 = vmax.xlane.f32.xlu0 %v3636
        %v3638 = vpop.xlane.xlu0 %3637
        %v3639 = vsel %vm492, %v3619, -inf
        %3640 = vmax.xlane.f32.xlu0 %v3639
        %v3641 = vpop.xlane.xlu0 %3640
        %v3642 = vsel %vm492, %v3620, -inf
        %3643 = vmax.xlane.f32.xlu0 %v3642
        %v3644 = vpop.xlane.xlu0 %3643
        %v3645 = vsel %vm492, %v3621, -inf
        %3646 = vmax.xlane.f32.xlu0 %v3645
        %v3647 = vpop.xlane.xlu0 %3646
        %v3648 = vsel %vm492, %v3622, -inf
        %3649 = vmax.xlane.f32.xlu0 %v3648
        %v3650 = vpop.xlane.xlu0 %3649
        %v3651 = vsel %vm492, %v3623, -inf
        %3652 = vmax.xlane.f32.xlu0 %v3651
        %v3653 = vpop.xlane.xlu0 %3652
        %v3654 = vsel %vm492, %v3624, -inf
        %3655 = vmax.xlane.f32.xlu0 %v3654
        %v3656 = vpop.xlane.xlu0 %3655
        %v3657 = vsel %vm492, %v3625, -inf
        %3658 = vmax.xlane.f32.xlu0 %v3657
        %v3659 = vpop.xlane.xlu0 %3658
        %v3660 = vsel %vm492, %v3626, -inf
        %3661 = vmax.xlane.f32.xlu0 %v3660
        %v3662 = vpop.xlane.xlu0 %3661
        %v3663 = vsel %vm492, %v3627, -inf
        %3664 = vmax.xlane.f32.xlu0 %v3663
        %v3665 = vpop.xlane.xlu0 %3664
        %v3666 = vsel %vm492, %v3628, -inf
        %3667 = vmax.xlane.f32.xlu0 %v3666
        %v3668 = vpop.xlane.xlu0 %3667
        %v3669 = vsel %vm492, %v3629, -inf
        %3670 = vmax.xlane.f32.xlu0 %v3669
        %v3671 = vpop.xlane.xlu0 %3670
        %v3672 = vsel %vm492, %v3630, -inf
        %3673 = vmax.xlane.f32.xlu0 %v3672
        %v3674 = vpop.xlane.xlu0 %3673
        %v3675 = vsel %vm492, %v3631, -inf
        %3676 = vmax.xlane.f32.xlu0 %v3675
        %v3677 = vpop.xlane.xlu0 %3676
        %v3678 = vsel %vm492, %v3632, -inf
        %3679 = vmax.xlane.f32.xlu0 %v3678
        %v3680 = vpop.xlane.xlu0 %3679
        %v3681 = vsub.f32 %v3617, %v3635
        %v3682 = vsub.f32 %v3618, %v3638
        %v3683 = vsub.f32 %v3619, %v3641
        %v3684 = vsub.f32 %v3620, %v3644
        %v3685 = vsub.f32 %v3621, %v3647
        %v3686 = vsub.f32 %v3622, %v3650
        %v3687 = vsub.f32 %v3623, %v3653
        %v3688 = vsub.f32 %v3624, %v3656
        %v3689 = vsub.f32 %v3625, %v3659
        %v3690 = vsub.f32 %v3626, %v3662
        %v3691 = vsub.f32 %v3627, %v3665
        %v3692 = vsub.f32 %v3628, %v3668
        %v3693 = vsub.f32 %v3629, %v3671
        %v3694 = vsub.f32 %v3630, %v3674
        %v3695 = vsub.f32 %v3631, %v3677
        %v3696 = vsub.f32 %v3632, %v3680
        %v3697 = vmul.f32 %v3681, 1.442695
        %v3698 = vpow.pop %v3697
        %v3699 = vmul.f32 %v3682, 1.442695
        %v3700 = vpow.pop %v3699
        %v3701 = vmul.f32 %v3683, 1.442695
        %v3702 = vpow.pop %v3701
        %v3703 = vmul.f32 %v3684, 1.442695
        %v3704 = vpow.pop %v3703
        %v3705 = vmul.f32 %v3685, 1.442695
        %v3706 = vpow.pop %v3705
        %v3707 = vmul.f32 %v3686, 1.442695
        %v3708 = vpow.pop %v3707
        %v3709 = vmul.f32 %v3687, 1.442695
        %v3710 = vpow.pop %v3709
        %v3711 = vmul.f32 %v3688, 1.442695
        %v3712 = vpow.pop %v3711
        %v3713 = vmul.f32 %v3689, 1.442695
        %v3714 = vpow.pop %v3713
        %v3715 = vmul.f32 %v3690, 1.442695
        %v3716 = vpow.pop %v3715
        %v3717 = vmul.f32 %v3691, 1.442695
        %v3718 = vpow.pop %v3717
        %v3719 = vmul.f32 %v3692, 1.442695
        %v3720 = vpow.pop %v3719
        %v3721 = vmul.f32 %v3693, 1.442695
        %v3722 = vpow.pop %v3721
        %v3723 = vmul.f32 %v3694, 1.442695
        %v3724 = vpow.pop %v3723
        %v3725 = vmul.f32 %v3695, 1.442695
        %v3726 = vpow.pop %v3725
        %v3727 = vmul.f32 %v3696, 1.442695
        %v3728 = vpow.pop %v3727
        %v3729 = vsel %vm492, %v3698, 0.0
        %3730 = vadd.xlane.f32.xlu0 %v3729
        %v3731 = vpop.xlane.xlu0 %3730
        %v3732 = vsel %vm492, %v3700, 0.0
        %3733 = vadd.xlane.f32.xlu0 %v3732
        %v3734 = vpop.xlane.xlu0 %3733
        %v3735 = vsel %vm492, %v3702, 0.0
        %3736 = vadd.xlane.f32.xlu0 %v3735
        %v3737 = vpop.xlane.xlu0 %3736
        %v3738 = vsel %vm492, %v3704, 0.0
        %3739 = vadd.xlane.f32.xlu0 %v3738
        %v3740 = vpop.xlane.xlu0 %3739
        %v3741 = vsel %vm492, %v3706, 0.0
        %3742 = vadd.xlane.f32.xlu0 %v3741
        %v3743 = vpop.xlane.xlu0 %3742
        %v3744 = vsel %vm492, %v3708, 0.0
        %3745 = vadd.xlane.f32.xlu0 %v3744
        %v3746 = vpop.xlane.xlu0 %3745
        %v3747 = vsel %vm492, %v3710, 0.0
        %3748 = vadd.xlane.f32.xlu0 %v3747
        %v3749 = vpop.xlane.xlu0 %3748
        %v3750 = vsel %vm492, %v3712, 0.0
        %3751 = vadd.xlane.f32.xlu0 %v3750
        %v3752 = vpop.xlane.xlu0 %3751
        %v3753 = vsel %vm492, %v3714, 0.0
        %3754 = vadd.xlane.f32.xlu0 %v3753
        %v3755 = vpop.xlane.xlu0 %3754
        %v3756 = vsel %vm492, %v3716, 0.0
        %3757 = vadd.xlane.f32.xlu0 %v3756
        %v3758 = vpop.xlane.xlu0 %3757
        %v3759 = vsel %vm492, %v3718, 0.0
        %3760 = vadd.xlane.f32.xlu0 %v3759
        %v3761 = vpop.xlane.xlu0 %3760
        %v3762 = vsel %vm492, %v3720, 0.0
        %3763 = vadd.xlane.f32.xlu0 %v3762
        %v3764 = vpop.xlane.xlu0 %3763
        %v3765 = vsel %vm492, %v3722, 0.0
        %3766 = vadd.xlane.f32.xlu0 %v3765
        %v3767 = vpop.xlane.xlu0 %3766
        %v3768 = vsel %vm492, %v3724, 0.0
        %3769 = vadd.xlane.f32.xlu0 %v3768
        %v3770 = vpop.xlane.xlu0 %3769
        %v3771 = vsel %vm492, %v3726, 0.0
        %3772 = vadd.xlane.f32.xlu0 %v3771
        %v3773 = vpop.xlane.xlu0 %3772
        %v3774 = vsel %vm492, %v3728, 0.0
        %3775 = vadd.xlane.f32.xlu0 %v3774
        %v3776 = vpop.xlane.xlu0 %3775
        %v3777 = vrcp.pop %v3731
        %v3778 = vrcp.pop %v3734
        %v3779 = vrcp.pop %v3737
        %v3780 = vrcp.pop %v3740
        %v3781 = vrcp.pop %v3743
        %v3782 = vrcp.pop %v3746
        %v3783 = vrcp.pop %v3749
        %v3784 = vrcp.pop %v3752
        %v3785 = vrcp.pop %v3755
        %v3786 = vrcp.pop %v3758
        %v3787 = vrcp.pop %v3761
        %v3788 = vrcp.pop %v3764
        %v3789 = vrcp.pop %v3767
        %v3790 = vrcp.pop %v3770
        %v3791 = vrcp.pop %v3773
        %v3792 = vrcp.pop %v3776
        %v3793 = vmul.f32 %v3698, %v3777
        %v3794 = vmul.f32 %v3700, %v3778
        %v3795 = vmul.f32 %v3702, %v3779
        %v3796 = vmul.f32 %v3704, %v3780
        %v3797 = vmul.f32 %v3706, %v3781
        %v3798 = vmul.f32 %v3708, %v3782
        %v3799 = vmul.f32 %v3710, %v3783
        %v3800 = vmul.f32 %v3712, %v3784
        %v3801 = vmul.f32 %v3714, %v3785
        %v3802 = vmul.f32 %v3716, %v3786
        %v3803 = vmul.f32 %v3718, %v3787
        %v3804 = vmul.f32 %v3720, %v3788
        %v3805 = vmul.f32 %v3722, %v3789
        %v3806 = vmul.f32 %v3724, %v3790
        %v3807 = vmul.f32 %v3726, %v3791
        %v3808 = vmul.f32 %v3728, %v3792
        %v3809 = vpack.c.bf16 %v3793, %v3793
        %v3810 = vpack.c.bf16 %v3794, %v3794
        %v3811 = vpack.c.bf16 %v3795, %v3795
        %v3812 = vpack.c.bf16 %v3796, %v3796
        %v3813 = vpack.c.bf16 %v3797, %v3797
        %v3814 = vpack.c.bf16 %v3798, %v3798
        %v3815 = vpack.c.bf16 %v3799, %v3799
        %v3816 = vpack.c.bf16 %v3800, %v3800
        %v3817 = vpack.c.bf16 %v3801, %v3801
        %v3818 = vpack.c.bf16 %v3802, %v3802
        %v3819 = vpack.c.bf16 %v3803, %v3803
        %v3820 = vpack.c.bf16 %v3804, %v3804
        %v3821 = vpack.c.bf16 %v3805, %v3805
        %v3822 = vpack.c.bf16 %v3806, %v3806
        %v3823 = vpack.c.bf16 %v3807, %v3807
        %v3824 = vpack.c.bf16 %v3808, %v3808
        %v3825 = vpack.c.bf16 %v3311, %v3311
        %v3826 = vpack.c.bf16 %v3313, %v3313
        %v3827 = vpack.c.bf16 %v3316, %v3316
        %v3828 = vpack.c.bf16 %v3318, %v3318
        %v3829 = vpack.c.bf16 %v3321, %v3321
        %v3830 = vpack.c.bf16 %v3323, %v3323
        %v3831 = vpack.c.bf16 %v3326, %v3326
        %v3832 = vpack.c.bf16 %v3328, %v3328
        %v3833 = vpack.c.bf16 %v3331, %v3331
        %v3834 = vpack.c.bf16 %v3333, %v3333
        %v3835 = vpack.c.bf16 %v3336, %v3336
        %v3836 = vpack.c.bf16 %v3338, %v3338
        %v3837 = vpack.c.bf16 %v3341, %v3341
        %v3838 = vpack.c.bf16 %v3343, %v3343
        %v3839 = vpack.c.bf16 %v3346, %v3346
        %v3840 = vpack.c.bf16 %v3348, %v3348
        %v3845 = vunpack.c.l.b16 %v3809
        %v3846 = vunpack.c.l.b16 %v3810
        %v3847 = vunpack.c.l.b16 %v3811
        %v3848 = vunpack.c.l.b16 %v3812
        %v3849 = vpack.c.b16 %v3846, %v3845
        %v3850 = vpack.c.b16 %v3848, %v3847
        %v3855 = vunpack.c.l.b16 %v3825
        %v3856 = vunpack.c.l.b16 %v3826
        %v3857 = vunpack.c.l.b16 %v3827
        %v3858 = vunpack.c.l.b16 %v3828
        %v3859 = vpack.c.b16 %v3856, %v3855
        %v3860 = vpack.c.b16 %v3858, %v3857
        %v3864 = vsel %vm492, %v3849, 0
        %v3867 = vsel %vm492, %v3850, 0
        %3869 = vmatpush.bf16.msra.mxu0 0
        %3870 = vmatpush.bf16.msra.mxu0 0
        %3871 = vmatpush.bf16.msra.mxu0 0
        %3872 = vmatpush.bf16.msra.mxu0 0
        %3873 = vmatpush.bf16.msra.mxu0 0
        %3874 = vmatpush.bf16.msra.mxu0 0
        %3875 = vmatpush.bf16.msra.mxu0 %v3860
        %3876 = vmatpush.bf16.msra.mxu0 %v3859
        %3877 = vmatmul.bf16.gmra.mxu0 %v3864
        %v3878 = vpop.f32.mrf.mxu0
        %v3879 = vadd.f32 %v1910, %v3878
        %v3880 = vpop.f32.mrf.mxu0
        %v3881 = vadd.f32 %v1911, %v3880
        %3882 = vmatmul.bf16.gmra.mxu0 %v3867
        %v3883 = vpop.f32.mrf.mxu0
        %v3884 = vadd.f32 %v1912, %v3883
        %v3885 = vpop.f32.mrf.mxu0
        %v3886 = vadd.f32 %v1913, %v3885
        %3887 = vdwg.mxu0
        %v3892 = vunpack.c.l.b16 %v3813
        %v3893 = vunpack.c.l.b16 %v3814
        %v3894 = vunpack.c.l.b16 %v3815
        %v3895 = vunpack.c.l.b16 %v3816
        %v3896 = vpack.c.b16 %v3893, %v3892
        %v3897 = vpack.c.b16 %v3895, %v3894
        %v3902 = vunpack.c.l.b16 %v3829
        %v3903 = vunpack.c.l.b16 %v3830
        %v3904 = vunpack.c.l.b16 %v3831
        %v3905 = vunpack.c.l.b16 %v3832
        %v3906 = vpack.c.b16 %v3903, %v3902
        %v3907 = vpack.c.b16 %v3905, %v3904
        %v3911 = vsel %vm492, %v3896, 0
        %v3914 = vsel %vm492, %v3897, 0
        %3916 = vmatpush.bf16.msra.mxu0 0
        %3917 = vmatpush.bf16.msra.mxu0 0
        %3918 = vmatpush.bf16.msra.mxu0 0
        %3919 = vmatpush.bf16.msra.mxu0 0
        %3920 = vmatpush.bf16.msra.mxu0 0
        %3921 = vmatpush.bf16.msra.mxu0 0
        %3922 = vmatpush.bf16.msra.mxu0 %v3907
        %3923 = vmatpush.bf16.msra.mxu0 %v3906
        %3924 = vmatmul.bf16.gmra.mxu0 %v3911
        %v3925 = vpop.f32.mrf.mxu0
        %v3926 = vadd.f32 %v1914, %v3925
        %v3927 = vpop.f32.mrf.mxu0
        %v3928 = vadd.f32 %v1915, %v3927
        %3929 = vmatmul.bf16.gmra.mxu0 %v3914
        %v3930 = vpop.f32.mrf.mxu0
        %v3931 = vadd.f32 %v1916, %v3930
        %v3932 = vpop.f32.mrf.mxu0
        %v3933 = vadd.f32 %v1917, %v3932
        %3934 = vdwg.mxu0
        %v3939 = vunpack.c.l.b16 %v3817
        %v3940 = vunpack.c.l.b16 %v3818
        %v3941 = vunpack.c.l.b16 %v3819
        %v3942 = vunpack.c.l.b16 %v3820
        %v3943 = vpack.c.b16 %v3940, %v3939
        %v3944 = vpack.c.b16 %v3942, %v3941
        %v3949 = vunpack.c.l.b16 %v3833
        %v3950 = vunpack.c.l.b16 %v3834
        %v3951 = vunpack.c.l.b16 %v3835
        %v3952 = vunpack.c.l.b16 %v3836
        %v3953 = vpack.c.b16 %v3950, %v3949
        %v3954 = vpack.c.b16 %v3952, %v3951
        %v3958 = vsel %vm492, %v3943, 0
        %v3961 = vsel %vm492, %v3944, 0
        %3963 = vmatpush.bf16.msra.mxu0 0
        %3964 = vmatpush.bf16.msra.mxu0 0
        %3965 = vmatpush.bf16.msra.mxu0 0
        %3966 = vmatpush.bf16.msra.mxu0 0
        %3967 = vmatpush.bf16.msra.mxu0 0
        %3968 = vmatpush.bf16.msra.mxu0 0
        %3969 = vmatpush.bf16.msra.mxu0 %v3954
        %3970 = vmatpush.bf16.msra.mxu0 %v3953
        %3971 = vmatmul.bf16.gmra.mxu0 %v3958
        %v3972 = vpop.f32.mrf.mxu0
        %v3973 = vadd.f32 %v1918, %v3972
        %v3974 = vpop.f32.mrf.mxu0
        %v3975 = vadd.f32 %v1919, %v3974
        %3976 = vmatmul.bf16.gmra.mxu0 %v3961
        %v3977 = vpop.f32.mrf.mxu0
        %v3978 = vadd.f32 %v1920, %v3977
        %v3979 = vpop.f32.mrf.mxu0
        %v3980 = vadd.f32 %v1921, %v3979
        %3981 = vdwg.mxu0
        %v3986 = vunpack.c.l.b16 %v3821
        %v3987 = vunpack.c.l.b16 %v3822
        %v3988 = vunpack.c.l.b16 %v3823
        %v3989 = vunpack.c.l.b16 %v3824
        %v3990 = vpack.c.b16 %v3987, %v3986
        %v3991 = vpack.c.b16 %v3989, %v3988
        %v3996 = vunpack.c.l.b16 %v3837
        %v3997 = vunpack.c.l.b16 %v3838
        %v3998 = vunpack.c.l.b16 %v3839
        %v3999 = vunpack.c.l.b16 %v3840
        %v4000 = vpack.c.b16 %v3997, %v3996
        %v4001 = vpack.c.b16 %v3999, %v3998
        %v4005 = vsel %vm492, %v3990, 0
        %v4008 = vsel %vm492, %v3991, 0
        %4010 = vmatpush.bf16.msra.mxu0 0
        %4011 = vmatpush.bf16.msra.mxu0 0
        %4012 = vmatpush.bf16.msra.mxu0 0
        %4013 = vmatpush.bf16.msra.mxu0 0
        %4014 = vmatpush.bf16.msra.mxu0 0
        %4015 = vmatpush.bf16.msra.mxu0 0
        %4016 = vmatpush.bf16.msra.mxu0 %v4001
        %4017 = vmatpush.bf16.msra.mxu0 %v4000
        %4018 = vmatmul.bf16.gmra.mxu0 %v4005
        %v4019 = vpop.f32.mrf.mxu0
        %v4020 = vadd.f32 %v1922, %v4019
        %v4021 = vpop.f32.mrf.mxu0
        %v4022 = vadd.f32 %v1923, %v4021
        %4023 = vmatmul.bf16.gmra.mxu0 %v4008
        %v4024 = vpop.f32.mrf.mxu0
        %v4025 = vadd.f32 %v1924, %v4024
        %v4026 = vpop.f32.mrf.mxu0
        %v4027 = vadd.f32 %v1925, %v4026
        %4028 = vdwg.mxu0
        %v4029 = vperm.slane %v3482, 0
        %v4030 = vmul.f32 %v3879, %v4029
        %v4031 = vmul.f32 %v3881, %v4029
        %v4032 = vmul.f32 %v3884, %v4029
        %v4033 = vmul.f32 %v3886, %v4029
        %v4034 = vmul.f32 %v3926, %v4029
        %v4035 = vmul.f32 %v3928, %v4029
        %v4036 = vmul.f32 %v3931, %v4029
        %v4037 = vmul.f32 %v3933, %v4029
        %v4038 = vmul.f32 %v3973, %v4029
        %v4039 = vmul.f32 %v3975, %v4029
        %v4040 = vmul.f32 %v3978, %v4029
        %v4041 = vmul.f32 %v3980, %v4029
        %v4042 = vmul.f32 %v4020, %v4029
        %v4043 = vmul.f32 %v4022, %v4029
        %v4044 = vmul.f32 %v4025, %v4029
        %v4045 = vmul.f32 %v4027, %v4029
        %v4046 = vsel %vm492, %v4030, 0.0
        %4047 = vadd.xlane.f32.xlu0 %v4046
        %v4048 = vpop.xlane.xlu0 %4047
        %v4049 = vsel %vm492, %v4031, 0.0
        %4050 = vadd.xlane.f32.xlu0 %v4049
        %v4051 = vpop.xlane.xlu0 %4050
        %v4052 = vsel %vm492, %v4032, 0.0
        %4053 = vadd.xlane.f32.xlu0 %v4052
        %v4054 = vpop.xlane.xlu0 %4053
        %v4055 = vsel %vm492, %v4033, 0.0
        %4056 = vadd.xlane.f32.xlu0 %v4055
        %v4057 = vpop.xlane.xlu0 %4056
        %v4058 = vsel %vm492, %v4034, 0.0
        %4059 = vadd.xlane.f32.xlu0 %v4058
        %v4060 = vpop.xlane.xlu0 %4059
        %v4061 = vsel %vm492, %v4035, 0.0
        %4062 = vadd.xlane.f32.xlu0 %v4061
        %v4063 = vpop.xlane.xlu0 %4062
        %v4064 = vsel %vm492, %v4036, 0.0
        %4065 = vadd.xlane.f32.xlu0 %v4064
        %v4066 = vpop.xlane.xlu0 %4065
        %v4067 = vsel %vm492, %v4037, 0.0
        %4068 = vadd.xlane.f32.xlu0 %v4067
        %v4069 = vpop.xlane.xlu0 %4068
        %v4070 = vsel %vm492, %v4038, 0.0
        %4071 = vadd.xlane.f32.xlu0 %v4070
        %v4072 = vpop.xlane.xlu0 %4071
        %v4073 = vsel %vm492, %v4039, 0.0
        %4074 = vadd.xlane.f32.xlu0 %v4073
        %v4075 = vpop.xlane.xlu0 %4074
        %v4076 = vsel %vm492, %v4040, 0.0
        %4077 = vadd.xlane.f32.xlu0 %v4076
        %v4078 = vpop.xlane.xlu0 %4077
        %v4079 = vsel %vm492, %v4041, 0.0
        %4080 = vadd.xlane.f32.xlu0 %v4079
        %v4081 = vpop.xlane.xlu0 %4080
        %v4082 = vsel %vm492, %v4042, 0.0
        %4083 = vadd.xlane.f32.xlu0 %v4082
        %v4084 = vpop.xlane.xlu0 %4083
        %v4085 = vsel %vm492, %v4043, 0.0
        %4086 = vadd.xlane.f32.xlu0 %v4085
        %v4087 = vpop.xlane.xlu0 %4086
        %v4088 = vsel %vm492, %v4044, 0.0
        %4089 = vadd.xlane.f32.xlu0 %v4088
        %v4090 = vpop.xlane.xlu0 %4089
        %v4091 = vsel %vm492, %v4045, 0.0
        %4092 = vadd.xlane.f32.xlu0 %v4091
        %v4093 = vpop.xlane.xlu0 %4092
        %v4094 = vperm.slane %v3483, 0
        %v4095 = vmul.f32 %v1910, %v4094
        %v4096 = vmul.f32 %v1911, %v4094
        %v4097 = vmul.f32 %v1912, %v4094
        %v4098 = vmul.f32 %v1913, %v4094
        %v4099 = vmul.f32 %v1914, %v4094
        %v4100 = vmul.f32 %v1915, %v4094
        %v4101 = vmul.f32 %v1916, %v4094
        %v4102 = vmul.f32 %v1917, %v4094
        %v4103 = vmul.f32 %v1918, %v4094
        %v4104 = vmul.f32 %v1919, %v4094
        %v4105 = vmul.f32 %v1920, %v4094
        %v4106 = vmul.f32 %v1921, %v4094
        %v4107 = vmul.f32 %v1922, %v4094
        %v4108 = vmul.f32 %v1923, %v4094
        %v4109 = vmul.f32 %v1924, %v4094
        %v4110 = vmul.f32 %v1925, %v4094
        %v4111 = vsel %vm492, %v4095, 0.0
        %4112 = vadd.xlane.f32.xlu0 %v4111
        %v4113 = vpop.xlane.xlu0 %4112
        %v4114 = vsel %vm492, %v4096, 0.0
        %4115 = vadd.xlane.f32.xlu0 %v4114
        %v4116 = vpop.xlane.xlu0 %4115
        %v4117 = vsel %vm492, %v4097, 0.0
        %4118 = vadd.xlane.f32.xlu0 %v4117
        %v4119 = vpop.xlane.xlu0 %4118
        %v4120 = vsel %vm492, %v4098, 0.0
        %4121 = vadd.xlane.f32.xlu0 %v4120
        %v4122 = vpop.xlane.xlu0 %4121
        %v4123 = vsel %vm492, %v4099, 0.0
        %4124 = vadd.xlane.f32.xlu0 %v4123
        %v4125 = vpop.xlane.xlu0 %4124
        %v4126 = vsel %vm492, %v4100, 0.0
        %4127 = vadd.xlane.f32.xlu0 %v4126
        %v4128 = vpop.xlane.xlu0 %4127
        %v4129 = vsel %vm492, %v4101, 0.0
        %4130 = vadd.xlane.f32.xlu0 %v4129
        %v4131 = vpop.xlane.xlu0 %4130
        %v4132 = vsel %vm492, %v4102, 0.0
        %4133 = vadd.xlane.f32.xlu0 %v4132
        %v4134 = vpop.xlane.xlu0 %4133
        %v4135 = vsel %vm492, %v4103, 0.0
        %4136 = vadd.xlane.f32.xlu0 %v4135
        %v4137 = vpop.xlane.xlu0 %4136
        %v4138 = vsel %vm492, %v4104, 0.0
        %4139 = vadd.xlane.f32.xlu0 %v4138
        %v4140 = vpop.xlane.xlu0 %4139
        %v4141 = vsel %vm492, %v4105, 0.0
        %4142 = vadd.xlane.f32.xlu0 %v4141
        %v4143 = vpop.xlane.xlu0 %4142
        %v4144 = vsel %vm492, %v4106, 0.0
        %4145 = vadd.xlane.f32.xlu0 %v4144
        %v4146 = vpop.xlane.xlu0 %4145
        %v4147 = vsel %vm492, %v4107, 0.0
        %4148 = vadd.xlane.f32.xlu0 %v4147
        %v4149 = vpop.xlane.xlu0 %4148
        %v4150 = vsel %vm492, %v4108, 0.0
        %4151 = vadd.xlane.f32.xlu0 %v4150
        %v4152 = vpop.xlane.xlu0 %4151
        %v4153 = vsel %vm492, %v4109, 0.0
        %4154 = vadd.xlane.f32.xlu0 %v4153
        %v4155 = vpop.xlane.xlu0 %4154
        %v4156 = vsel %vm492, %v4110, 0.0
        %4157 = vadd.xlane.f32.xlu0 %v4156
        %v4158 = vpop.xlane.xlu0 %4157
        %v4159 = vadd.f32 %v4048, %v4113
        %v4160 = vadd.f32 %v4051, %v4116
        %v4161 = vadd.f32 %v4054, %v4119
        %v4162 = vadd.f32 %v4057, %v4122
        %v4163 = vadd.f32 %v4060, %v4125
        %v4164 = vadd.f32 %v4063, %v4128
        %v4165 = vadd.f32 %v4066, %v4131
        %v4166 = vadd.f32 %v4069, %v4134
        %v4167 = vadd.f32 %v4072, %v4137
        %v4168 = vadd.f32 %v4075, %v4140
        %v4169 = vadd.f32 %v4078, %v4143
        %v4170 = vadd.f32 %v4081, %v4146
        %v4171 = vadd.f32 %v4084, %v4149
        %v4172 = vadd.f32 %v4087, %v4152
        %v4173 = vadd.f32 %v4090, %v4155
        %v4174 = vadd.f32 %v4093, %v4158
        %v4175 = vstv %s3484
        %v4176 = vadd.f32 %v4159, %v4175
        %v4177 = vadd.f32 %v4160, %v4175
        %v4178 = vadd.f32 %v4161, %v4175
        %v4179 = vadd.f32 %v4162, %v4175
        %v4180 = vadd.f32 %v4163, %v4175
        %v4181 = vadd.f32 %v4164, %v4175
        %v4182 = vadd.f32 %v4165, %v4175
        %v4183 = vadd.f32 %v4166, %v4175
        %v4184 = vadd.f32 %v4167, %v4175
        %v4185 = vadd.f32 %v4168, %v4175
        %v4186 = vadd.f32 %v4169, %v4175
        %v4187 = vadd.f32 %v4170, %v4175
        %v4188 = vadd.f32 %v4171, %v4175
        %v4189 = vadd.f32 %v4172, %v4175
        %v4190 = vadd.f32 %v4173, %v4175
        %v4191 = vadd.f32 %v4174, %v4175
        %v4192 = vxor.u32 %v4176, 2147483648
        %v4193 = vxor.u32 %v4177, 2147483648
        %v4194 = vxor.u32 %v4178, 2147483648
        %v4195 = vxor.u32 %v4179, 2147483648
        %v4196 = vxor.u32 %v4180, 2147483648
        %v4197 = vxor.u32 %v4181, 2147483648
        %v4198 = vxor.u32 %v4182, 2147483648
        %v4199 = vxor.u32 %v4183, 2147483648
        %v4200 = vxor.u32 %v4184, 2147483648
        %v4201 = vxor.u32 %v4185, 2147483648
        %v4202 = vxor.u32 %v4186, 2147483648
        %v4203 = vxor.u32 %v4187, 2147483648
        %v4204 = vxor.u32 %v4188, 2147483648
        %v4205 = vxor.u32 %v4189, 2147483648
        %v4206 = vxor.u32 %v4190, 2147483648
        %v4207 = vxor.u32 %v4191, 2147483648
        %v4208 = vmul.f32 %v4192, 1.442695
        %v4209 = vpow.pop %v4208
        %v4210 = vmul.f32 %v4193, 1.442695
        %v4211 = vpow.pop %v4210
        %v4212 = vmul.f32 %v4194, 1.442695
        %v4213 = vpow.pop %v4212
        %v4214 = vmul.f32 %v4195, 1.442695
        %v4215 = vpow.pop %v4214
        %v4216 = vmul.f32 %v4196, 1.442695
        %v4217 = vpow.pop %v4216
        %v4218 = vmul.f32 %v4197, 1.442695
        %v4219 = vpow.pop %v4218
        %v4220 = vmul.f32 %v4198, 1.442695
        %v4221 = vpow.pop %v4220
        %v4222 = vmul.f32 %v4199, 1.442695
        %v4223 = vpow.pop %v4222
        %v4224 = vmul.f32 %v4200, 1.442695
        %v4225 = vpow.pop %v4224
        %v4226 = vmul.f32 %v4201, 1.442695
        %v4227 = vpow.pop %v4226
        %v4228 = vmul.f32 %v4202, 1.442695
        %v4229 = vpow.pop %v4228
        %v4230 = vmul.f32 %v4203, 1.442695
        %v4231 = vpow.pop %v4230
        %v4232 = vmul.f32 %v4204, 1.442695
        %v4233 = vpow.pop %v4232
        %v4234 = vmul.f32 %v4205, 1.442695
        %v4235 = vpow.pop %v4234
        %v4236 = vmul.f32 %v4206, 1.442695
        %v4237 = vpow.pop %v4236
        %v4238 = vmul.f32 %v4207, 1.442695
        %v4239 = vpow.pop %v4238
        %v4240 = vadd.f32 %v4209, 1.0
        %v4241 = vadd.f32 %v4211, 1.0
        %v4242 = vadd.f32 %v4213, 1.0
        %v4243 = vadd.f32 %v4215, 1.0
        %v4244 = vadd.f32 %v4217, 1.0
        %v4245 = vadd.f32 %v4219, 1.0
        %v4246 = vadd.f32 %v4221, 1.0
        %v4247 = vadd.f32 %v4223, 1.0
        %v4248 = vadd.f32 %v4225, 1.0
        %v4249 = vadd.f32 %v4227, 1.0
        %v4250 = vadd.f32 %v4229, 1.0
        %v4251 = vadd.f32 %v4231, 1.0
        %v4252 = vadd.f32 %v4233, 1.0
        %v4253 = vadd.f32 %v4235, 1.0
        %v4254 = vadd.f32 %v4237, 1.0
        %v4255 = vadd.f32 %v4239, 1.0
        %v4256 = vrcp.pop %v4240
        %v4257 = vmul.f32 %v4240, %v4256
        %v4258 = vsub.f32 1.0, %v4257
        %v4259 = vmul.f32 %v4256, %v4258
        %v4260 = vadd.f32 %v4256, %v4259
        %vm4261 = vweird.f32 %v4240
        %vm4262 = vweird.f32 %v4256
        %vm4263 = vmor %vm4261, %vm4262
        %v4264 = vsel %vm4263, %v4256, %v4260
        %v4265 = vand.u32 2147483647, %v4240
        %vm4266 = vcmp.eq.f32.partialorder %v4265, 8.507059e+37
        %v4267 = vand.u32 %v4240, 2147483648
        %v4268 = vor.u32 1.1754944e-38, %v4267
        %v4269 = vsel %vm4266, %v4268, %v4264
        %v4270 = vmul.f32 1.0, %v4269
        %v4271 = vrcp.pop %v4241
        %v4272 = vmul.f32 %v4241, %v4271
        %v4273 = vsub.f32 1.0, %v4272
        %v4274 = vmul.f32 %v4271, %v4273
        %v4275 = vadd.f32 %v4271, %v4274
        %vm4276 = vweird.f32 %v4241
        %vm4277 = vweird.f32 %v4271
        %vm4278 = vmor %vm4276, %vm4277
        %v4279 = vsel %vm4278, %v4271, %v4275
        %v4280 = vand.u32 2147483647, %v4241
        %vm4281 = vcmp.eq.f32.partialorder %v4280, 8.507059e+37
        %v4282 = vand.u32 %v4241, 2147483648
        %v4283 = vor.u32 1.1754944e-38, %v4282
        %v4284 = vsel %vm4281, %v4283, %v4279
        %v4285 = vmul.f32 1.0, %v4284
        %v4286 = vrcp.pop %v4242
        %v4287 = vmul.f32 %v4242, %v4286
        %v4288 = vsub.f32 1.0, %v4287
        %v4289 = vmul.f32 %v4286, %v4288
        %v4290 = vadd.f32 %v4286, %v4289
        %vm4291 = vweird.f32 %v4242
        %vm4292 = vweird.f32 %v4286
        %vm4293 = vmor %vm4291, %vm4292
        %v4294 = vsel %vm4293, %v4286, %v4290
        %v4295 = vand.u32 2147483647, %v4242
        %vm4296 = vcmp.eq.f32.partialorder %v4295, 8.507059e+37
        %v4297 = vand.u32 %v4242, 2147483648
        %v4298 = vor.u32 1.1754944e-38, %v4297
        %v4299 = vsel %vm4296, %v4298, %v4294
        %v4300 = vmul.f32 1.0, %v4299
        %v4301 = vrcp.pop %v4243
        %v4302 = vmul.f32 %v4243, %v4301
        %v4303 = vsub.f32 1.0, %v4302
        %v4304 = vmul.f32 %v4301, %v4303
        %v4305 = vadd.f32 %v4301, %v4304
        %vm4306 = vweird.f32 %v4243
        %vm4307 = vweird.f32 %v4301
        %vm4308 = vmor %vm4306, %vm4307
        %v4309 = vsel %vm4308, %v4301, %v4305
        %v4310 = vand.u32 2147483647, %v4243
        %vm4311 = vcmp.eq.f32.partialorder %v4310, 8.507059e+37
        %v4312 = vand.u32 %v4243, 2147483648
        %v4313 = vor.u32 1.1754944e-38, %v4312
        %v4314 = vsel %vm4311, %v4313, %v4309
        %v4315 = vmul.f32 1.0, %v4314
        %v4316 = vrcp.pop %v4244
        %v4317 = vmul.f32 %v4244, %v4316
        %v4318 = vsub.f32 1.0, %v4317
        %v4319 = vmul.f32 %v4316, %v4318
        %v4320 = vadd.f32 %v4316, %v4319
        %vm4321 = vweird.f32 %v4244
        %vm4322 = vweird.f32 %v4316
        %vm4323 = vmor %vm4321, %vm4322
        %v4324 = vsel %vm4323, %v4316, %v4320
        %v4325 = vand.u32 2147483647, %v4244
        %vm4326 = vcmp.eq.f32.partialorder %v4325, 8.507059e+37
        %v4327 = vand.u32 %v4244, 2147483648
        %v4328 = vor.u32 1.1754944e-38, %v4327
        %v4329 = vsel %vm4326, %v4328, %v4324
        %v4330 = vmul.f32 1.0, %v4329
        %v4331 = vrcp.pop %v4245
        %v4332 = vmul.f32 %v4245, %v4331
        %v4333 = vsub.f32 1.0, %v4332
        %v4334 = vmul.f32 %v4331, %v4333
        %v4335 = vadd.f32 %v4331, %v4334
        %vm4336 = vweird.f32 %v4245
        %vm4337 = vweird.f32 %v4331
        %vm4338 = vmor %vm4336, %vm4337
        %v4339 = vsel %vm4338, %v4331, %v4335
        %v4340 = vand.u32 2147483647, %v4245
        %vm4341 = vcmp.eq.f32.partialorder %v4340, 8.507059e+37
        %v4342 = vand.u32 %v4245, 2147483648
        %v4343 = vor.u32 1.1754944e-38, %v4342
        %v4344 = vsel %vm4341, %v4343, %v4339
        %v4345 = vmul.f32 1.0, %v4344
        %v4346 = vrcp.pop %v4246
        %v4347 = vmul.f32 %v4246, %v4346
        %v4348 = vsub.f32 1.0, %v4347
        %v4349 = vmul.f32 %v4346, %v4348
        %v4350 = vadd.f32 %v4346, %v4349
        %vm4351 = vweird.f32 %v4246
        %vm4352 = vweird.f32 %v4346
        %vm4353 = vmor %vm4351, %vm4352
        %v4354 = vsel %vm4353, %v4346, %v4350
        %v4355 = vand.u32 2147483647, %v4246
        %vm4356 = vcmp.eq.f32.partialorder %v4355, 8.507059e+37
        %v4357 = vand.u32 %v4246, 2147483648
        %v4358 = vor.u32 1.1754944e-38, %v4357
        %v4359 = vsel %vm4356, %v4358, %v4354
        %v4360 = vmul.f32 1.0, %v4359
        %v4361 = vrcp.pop %v4247
        %v4362 = vmul.f32 %v4247, %v4361
        %v4363 = vsub.f32 1.0, %v4362
        %v4364 = vmul.f32 %v4361, %v4363
        %v4365 = vadd.f32 %v4361, %v4364
        %vm4366 = vweird.f32 %v4247
        %vm4367 = vweird.f32 %v4361
        %vm4368 = vmor %vm4366, %vm4367
        %v4369 = vsel %vm4368, %v4361, %v4365
        %v4370 = vand.u32 2147483647, %v4247
        %vm4371 = vcmp.eq.f32.partialorder %v4370, 8.507059e+37
        %v4372 = vand.u32 %v4247, 2147483648
        %v4373 = vor.u32 1.1754944e-38, %v4372
        %v4374 = vsel %vm4371, %v4373, %v4369
        %v4375 = vmul.f32 1.0, %v4374
        %v4376 = vrcp.pop %v4248
        %v4377 = vmul.f32 %v4248, %v4376
        %v4378 = vsub.f32 1.0, %v4377
        %v4379 = vmul.f32 %v4376, %v4378
        %v4380 = vadd.f32 %v4376, %v4379
        %vm4381 = vweird.f32 %v4248
        %vm4382 = vweird.f32 %v4376
        %vm4383 = vmor %vm4381, %vm4382
        %v4384 = vsel %vm4383, %v4376, %v4380
        %v4385 = vand.u32 2147483647, %v4248
        %vm4386 = vcmp.eq.f32.partialorder %v4385, 8.507059e+37
        %v4387 = vand.u32 %v4248, 2147483648
        %v4388 = vor.u32 1.1754944e-38, %v4387
        %v4389 = vsel %vm4386, %v4388, %v4384
        %v4390 = vmul.f32 1.0, %v4389
        %v4391 = vrcp.pop %v4249
        %v4392 = vmul.f32 %v4249, %v4391
        %v4393 = vsub.f32 1.0, %v4392
        %v4394 = vmul.f32 %v4391, %v4393
        %v4395 = vadd.f32 %v4391, %v4394
        %vm4396 = vweird.f32 %v4249
        %vm4397 = vweird.f32 %v4391
        %vm4398 = vmor %vm4396, %vm4397
        %v4399 = vsel %vm4398, %v4391, %v4395
        %v4400 = vand.u32 2147483647, %v4249
        %vm4401 = vcmp.eq.f32.partialorder %v4400, 8.507059e+37
        %v4402 = vand.u32 %v4249, 2147483648
        %v4403 = vor.u32 1.1754944e-38, %v4402
        %v4404 = vsel %vm4401, %v4403, %v4399
        %v4405 = vmul.f32 1.0, %v4404
        %v4406 = vrcp.pop %v4250
        %v4407 = vmul.f32 %v4250, %v4406
        %v4408 = vsub.f32 1.0, %v4407
        %v4409 = vmul.f32 %v4406, %v4408
        %v4410 = vadd.f32 %v4406, %v4409
        %vm4411 = vweird.f32 %v4250
        %vm4412 = vweird.f32 %v4406
        %vm4413 = vmor %vm4411, %vm4412
        %v4414 = vsel %vm4413, %v4406, %v4410
        %v4415 = vand.u32 2147483647, %v4250
        %vm4416 = vcmp.eq.f32.partialorder %v4415, 8.507059e+37
        %v4417 = vand.u32 %v4250, 2147483648
        %v4418 = vor.u32 1.1754944e-38, %v4417
        %v4419 = vsel %vm4416, %v4418, %v4414
        %v4420 = vmul.f32 1.0, %v4419
        %v4421 = vrcp.pop %v4251
        %v4422 = vmul.f32 %v4251, %v4421
        %v4423 = vsub.f32 1.0, %v4422
        %v4424 = vmul.f32 %v4421, %v4423
        %v4425 = vadd.f32 %v4421, %v4424
        %vm4426 = vweird.f32 %v4251
        %vm4427 = vweird.f32 %v4421
        %vm4428 = vmor %vm4426, %vm4427
        %v4429 = vsel %vm4428, %v4421, %v4425
        %v4430 = vand.u32 2147483647, %v4251
        %vm4431 = vcmp.eq.f32.partialorder %v4430, 8.507059e+37
        %v4432 = vand.u32 %v4251, 2147483648
        %v4433 = vor.u32 1.1754944e-38, %v4432
        %v4434 = vsel %vm4431, %v4433, %v4429
        %v4435 = vmul.f32 1.0, %v4434
        %v4436 = vrcp.pop %v4252
        %v4437 = vmul.f32 %v4252, %v4436
        %v4438 = vsub.f32 1.0, %v4437
        %v4439 = vmul.f32 %v4436, %v4438
        %v4440 = vadd.f32 %v4436, %v4439
        %vm4441 = vweird.f32 %v4252
        %vm4442 = vweird.f32 %v4436
        %vm4443 = vmor %vm4441, %vm4442
        %v4444 = vsel %vm4443, %v4436, %v4440
        %v4445 = vand.u32 2147483647, %v4252
        %vm4446 = vcmp.eq.f32.partialorder %v4445, 8.507059e+37
        %v4447 = vand.u32 %v4252, 2147483648
        %v4448 = vor.u32 1.1754944e-38, %v4447
        %v4449 = vsel %vm4446, %v4448, %v4444
        %v4450 = vmul.f32 1.0, %v4449
        %v4451 = vrcp.pop %v4253
        %v4452 = vmul.f32 %v4253, %v4451
        %v4453 = vsub.f32 1.0, %v4452
        %v4454 = vmul.f32 %v4451, %v4453
        %v4455 = vadd.f32 %v4451, %v4454
        %vm4456 = vweird.f32 %v4253
        %vm4457 = vweird.f32 %v4451
        %vm4458 = vmor %vm4456, %vm4457
        %v4459 = vsel %vm4458, %v4451, %v4455
        %v4460 = vand.u32 2147483647, %v4253
        %vm4461 = vcmp.eq.f32.partialorder %v4460, 8.507059e+37
        %v4462 = vand.u32 %v4253, 2147483648
        %v4463 = vor.u32 1.1754944e-38, %v4462
        %v4464 = vsel %vm4461, %v4463, %v4459
        %v4465 = vmul.f32 1.0, %v4464
        %v4466 = vrcp.pop %v4254
        %v4467 = vmul.f32 %v4254, %v4466
        %v4468 = vsub.f32 1.0, %v4467
        %v4469 = vmul.f32 %v4466, %v4468
        %v4470 = vadd.f32 %v4466, %v4469
        %vm4471 = vweird.f32 %v4254
        %vm4472 = vweird.f32 %v4466
        %vm4473 = vmor %vm4471, %vm4472
        %v4474 = vsel %vm4473, %v4466, %v4470
        %v4475 = vand.u32 2147483647, %v4254
        %vm4476 = vcmp.eq.f32.partialorder %v4475, 8.507059e+37
        %v4477 = vand.u32 %v4254, 2147483648
        %v4478 = vor.u32 1.1754944e-38, %v4477
        %v4479 = vsel %vm4476, %v4478, %v4474
        %v4480 = vmul.f32 1.0, %v4479
        %v4481 = vrcp.pop %v4255
        %v4482 = vmul.f32 %v4255, %v4481
        %v4483 = vsub.f32 1.0, %v4482
        %v4484 = vmul.f32 %v4481, %v4483
        %v4485 = vadd.f32 %v4481, %v4484
        %vm4486 = vweird.f32 %v4255
        %vm4487 = vweird.f32 %v4481
        %vm4488 = vmor %vm4486, %vm4487
        %v4489 = vsel %vm4488, %v4481, %v4485
        %v4490 = vand.u32 2147483647, %v4255
        %vm4491 = vcmp.eq.f32.partialorder %v4490, 8.507059e+37
        %v4492 = vand.u32 %v4255, 2147483648
        %v4493 = vor.u32 1.1754944e-38, %v4492
        %v4494 = vsel %vm4491, %v4493, %v4489
        %v4495 = vmul.f32 1.0, %v4494
        %v4496 = vmul.f32 %v4270, %v3879
        %v4497 = vmul.f32 %v4285, %v3881
        %v4498 = vmul.f32 %v4300, %v3884
        %v4499 = vmul.f32 %v4315, %v3886
        %v4500 = vmul.f32 %v4330, %v3926
        %v4501 = vmul.f32 %v4345, %v3928
        %v4502 = vmul.f32 %v4360, %v3931
        %v4503 = vmul.f32 %v4375, %v3933
        %v4504 = vmul.f32 %v4390, %v3973
        %v4505 = vmul.f32 %v4405, %v3975
        %v4506 = vmul.f32 %v4420, %v3978
        %v4507 = vmul.f32 %v4435, %v3980
        %v4508 = vmul.f32 %v4450, %v4020
        %v4509 = vmul.f32 %v4465, %v4022
        %v4510 = vmul.f32 %v4480, %v4025
        %v4511 = vmul.f32 %v4495, %v4027
        %v4512 = vsub.f32 1.0, %v4270
        %v4513 = vsub.f32 1.0, %v4285
        %v4514 = vsub.f32 1.0, %v4300
        %v4515 = vsub.f32 1.0, %v4315
        %v4516 = vsub.f32 1.0, %v4330
        %v4517 = vsub.f32 1.0, %v4345
        %v4518 = vsub.f32 1.0, %v4360
        %v4519 = vsub.f32 1.0, %v4375
        %v4520 = vsub.f32 1.0, %v4390
        %v4521 = vsub.f32 1.0, %v4405
        %v4522 = vsub.f32 1.0, %v4420
        %v4523 = vsub.f32 1.0, %v4435
        %v4524 = vsub.f32 1.0, %v4450
        %v4525 = vsub.f32 1.0, %v4465
        %v4526 = vsub.f32 1.0, %v4480
        %v4527 = vsub.f32 1.0, %v4495
        %v4528 = vmul.f32 %v4512, %v1910
        %v4529 = vmul.f32 %v4513, %v1911
        %v4530 = vmul.f32 %v4514, %v1912
        %v4531 = vmul.f32 %v4515, %v1913
        %v4532 = vmul.f32 %v4516, %v1914
        %v4533 = vmul.f32 %v4517, %v1915
        %v4534 = vmul.f32 %v4518, %v1916
        %v4535 = vmul.f32 %v4519, %v1917
        %v4536 = vmul.f32 %v4520, %v1918
        %v4537 = vmul.f32 %v4521, %v1919
        %v4538 = vmul.f32 %v4522, %v1920
        %v4539 = vmul.f32 %v4523, %v1921
        %v4540 = vmul.f32 %v4524, %v1922
        %v4541 = vmul.f32 %v4525, %v1923
        %v4542 = vmul.f32 %v4526, %v1924
        %v4543 = vmul.f32 %v4527, %v1925
        %v4544 = vadd.f32 %v4496, %v4528
        %v4545 = vadd.f32 %v4497, %v4529
        %v4546 = vadd.f32 %v4498, %v4530
        %v4547 = vadd.f32 %v4499, %v4531
        %v4548 = vadd.f32 %v4500, %v4532
        %v4549 = vadd.f32 %v4501, %v4533
        %v4550 = vadd.f32 %v4502, %v4534
        %v4551 = vadd.f32 %v4503, %v4535
        %v4552 = vadd.f32 %v4504, %v4536
        %v4553 = vadd.f32 %v4505, %v4537
        %v4554 = vadd.f32 %v4506, %v4538
        %v4555 = vadd.f32 %v4507, %v4539
        %v4556 = vadd.f32 %v4508, %v4540
        %v4557 = vadd.f32 %v4509, %v4541
        %v4558 = vadd.f32 %v4510, %v4542
        %v4559 = vadd.f32 %v4511, %v4543
        %v4560 = vadd.f32 %v4544, %v1910
        %v4561 = vadd.f32 %v4545, %v1911
        %v4562 = vadd.f32 %v4546, %v1912
        %v4563 = vadd.f32 %v4547, %v1913
        %v4564 = vadd.f32 %v4548, %v1914
        %v4565 = vadd.f32 %v4549, %v1915
        %v4566 = vadd.f32 %v4550, %v1916
        %v4567 = vadd.f32 %v4551, %v1917
        %v4568 = vadd.f32 %v4552, %v1918
        %v4569 = vadd.f32 %v4553, %v1919
        %v4570 = vadd.f32 %v4554, %v1920
        %v4571 = vadd.f32 %v4555, %v1921
        %v4572 = vadd.f32 %v4556, %v1922
        %v4573 = vadd.f32 %v4557, %v1923
        %v4574 = vadd.f32 %v4558, %v1924
        %v4575 = vadd.f32 %v4559, %v1925
        %v4576 = vadd.f32 %v3235, %v4560
        %v4577 = vadd.f32 %v3236, %v4561
        %v4578 = vadd.f32 %v3237, %v4562
        %v4579 = vadd.f32 %v3238, %v4563
        %v4580 = vadd.f32 %v3239, %v4564
        %v4581 = vadd.f32 %v3240, %v4565
        %v4582 = vadd.f32 %v3241, %v4566
        %v4583 = vadd.f32 %v3242, %v4567
        %v4584 = vadd.f32 %v3243, %v4568
        %v4585 = vadd.f32 %v3244, %v4569
        %v4586 = vadd.f32 %v3245, %v4570
        %v4587 = vadd.f32 %v3246, %v4571
        %v4588 = vadd.f32 %v3247, %v4572
        %v4589 = vadd.f32 %v3248, %v4573
        %v4590 = vadd.f32 %v3249, %v4574
        %v4591 = vadd.f32 %v3250, %v4575
        %4592 = vst.msk [vmem:[%s377] sm:$0xff] %vm492, %v4576
        %4593 = vst.msk [vmem:[%s377 + $0x8] sm:$0xff] %vm492, %v4577
        %4594 = vst.msk [vmem:[%s377 + $0x10] sm:$0xff] %vm492, %v4578
        %4595 = vst.msk [vmem:[%s377 + $0x18] sm:$0xff] %vm492, %v4579
        %4596 = vst.msk [vmem:[%s377 + $0x20] sm:$0xff] %vm492, %v4580
        %4597 = vst.msk [vmem:[%s377 + $0x28] sm:$0xff] %vm492, %v4581
        %4598 = vst.msk [vmem:[%s377 + $0x30] sm:$0xff] %vm492, %v4582
        %4599 = vst.msk [vmem:[%s377 + $0x38] sm:$0xff] %vm492, %v4583
        %4600 = vst.msk [vmem:[%s377 + $0x40] sm:$0xff] %vm492, %v4584
        %4601 = vst.msk [vmem:[%s377 + $0x48] sm:$0xff] %vm492, %v4585
        %4602 = vst.msk [vmem:[%s377 + $0x50] sm:$0xff] %vm492, %v4586
        %4603 = vst.msk [vmem:[%s377 + $0x58] sm:$0xff] %vm492, %v4587
        %4604 = vst.msk [vmem:[%s377 + $0x60] sm:$0xff] %vm492, %v4588
        %4605 = vst.msk [vmem:[%s377 + $0x68] sm:$0xff] %vm492, %v4589
        %4606 = vst.msk [vmem:[%s377 + $0x70] sm:$0xff] %vm492, %v4590
        %4607 = vst.msk [vmem:[%s377 + $0x78] sm:$0xff] %vm492, %v4591
        %s4608 = sand.u32 %s192, 1
        %s4609 = scalar_lea.sflag [#allocation4], %s4608
        %s4610 = sand.u32 %s192, 1
        %s4611 = smul.addr %s4610, 128
        %s4612 = scalar_lea.vmem [#allocation12], %s4611
        // Predicated region
        $region69: #{tpu_custom_call.1} parent=47 // pred_check
          %p4613 = pneg %p202
        $region70: #{tpu_custom_call.1} parent=47 // pred_check_branch
          %4615 = sbr.rel (%p4613) target = $region72
        $region71: #{tpu_custom_call.1} parent=47 // pred_region
          %s4616 = smul.u32 4, %s27
          %4618 = vsyncadd %s4609, 0
          %s4619 = smul.addr %s4616, 4
          %s4620 = smul.addr %s4619, 8
          %s4621 = scalar_lea.hbm %s7, %s4620
          %s4622 = sshll.u32 %s4612, 4
          %s4623 = int_to_ptr.vmem [resolvable:$true] %s4622
          %s4624 = sshll.u32 %s4621, 4
          %s4625 = int_to_ptr.hbm [resolvable:$true] %s4624
          %4630 = dma.vmem_to_hbm [thread:$0]  %s4623, 2048, %s4625, %s4609, 128, 128, 8
        $region72: #{tpu_custom_call.1} parent=47 // pred_fallthru
          _
      $region48: #{tpu_custom_call.1} parent=5 // pred_fallthru
        _
      %p4631 = scmp.le.s32.totalorder 2, %s22
      // Predicated region
      $region73: #{tpu_custom_call.1} parent=5 // pred_check
        %p4632 = pneg %p4631
      $region74: #{tpu_custom_call.1} parent=5 // pred_check_branch
        %4634 = sbr.rel (%p4632) target = $region76
      $region75: #{tpu_custom_call.1} parent=5 // pred_region
        %s4635 = ssub.s32 %s22, 2
        // Predicated region
        $region77: #{tpu_custom_call.1} parent=75 // pred_check
          %p4636 = pneg %p208
        $region78: #{tpu_custom_call.1} parent=75 // pred_check_branch
          %4638 = sbr.rel (%p4636) target = $region80
        $region79: #{tpu_custom_call.1} parent=75 // pred_region
          %s4639 = sand.u32 %s193, 1
          %s4640 = scalar_lea.sflag [#allocation4], %s4639
          %s4641 = sand.u32 %s193, 1
          %s4642 = smul.addr %s4641, 128
          %s4643 = scalar_lea.vmem [#allocation12], %s4642
          %4645 = dma.done %s4640, 2048
        $region80: #{tpu_custom_call.1} parent=75 // pred_fallthru
          _
      $region76: #{tpu_custom_call.1} parent=5 // pred_fallthru
        _
    $region6: #{tpu_custom_call.1} parent=1 // loop_footer
      %s26 = sadd.s32 1, %s22
    $region7: #{tpu_custom_call.1} parent=1 // loop_footer_branch
      %21 = sbr.rel target = $region3
    $region8: #{tpu_custom_call.1} parent=1 // loop_exit
      _
    %4646 = vsyncpa [#allocation3], 1
    %s4647 = scalar_lea.sflag [#allocation3], 1
    %4648 = vsyncpa %s4647, 1
    %4649 = vsyncpa [#allocation7], 1
    %4650 = vsyncpa [#allocation10], 1
    %4651 = vsyncpa [#allocation4], 1
    %s4652 = scalar_lea.sflag [#allocation4], 1
    %4653 = vsyncpa %s4652, 1
    %4654 = vsyncpa [#allocation5], 1
    %s4655 = scalar_lea.sflag [#allocation5], 1
    %4656 = vsyncpa %s4655, 1

</llo_original>
